<compile_context>
chip_gen: v6e
topology: v6e:2x2x1
jax: 0.10.0
libtpu: 0.0.40
codegen_flags: <defaults>
</compile_context>

<pallas_src>
import jax
import jax.numpy as jnp
from jax import lax
from jax.experimental import pallas as pl
from jax.experimental.pallas import tpu as pltpu


_VMEM = pl.BlockSpec(memory_space=pltpu.MemorySpace.VMEM)


# ----------------------------------------------------------------------------
# Pallas kernels
# ----------------------------------------------------------------------------
def _conv_relu_pool_kernel(p_ref, w_ref, b_ref, o_ref):
    """Fused im2col-GEMM + bias + ReLU + 2x2 max-pool.

    p_ref: (4, M, K)  im2col patches; axis 0 indexes the 2x2 pooling-window
           position (dy*2+dx); M = N*Ho2*Wo2 pooled pixels; K = KH*KW*Cin.
    w_ref: (K, Cout)   b_ref: (1, Cout)   o_ref: (M, Cout)
    """
    z = jnp.dot(p_ref[0], w_ref[...], preferred_element_type=jnp.float32)
    for q in range(1, 4):
        z = jnp.maximum(
            z, jnp.dot(p_ref[q], w_ref[...], preferred_element_type=jnp.float32))
    # Max-pool commutes with (+bias, ReLU): apply them once, after the max.
    o_ref[...] = jnp.maximum(z + b_ref[...], 0.0)


def _mlp_kernel(x_ref, w1_ref, b1_ref, w2_ref, b2_ref, o_ref):
    """Fused fc1 + ReLU + fc2; the hidden activation stays in VMEM/vregs."""
    h = jnp.dot(x_ref[...], w1_ref[...], preferred_element_type=jnp.float32)
    h = jnp.maximum(h + b1_ref[...], 0.0)
    o_ref[...] = (jnp.dot(h, w2_ref[...], preferred_element_type=jnp.float32)
                  + b2_ref[...])


# ----------------------------------------------------------------------------
# Wrappers around pallas_call
# ----------------------------------------------------------------------------
def conv_relu_pool(x_nhwc, w_mat, b_row, kh, kw):
    """VALID stride-1 conv + ReLU + 2x2/stride-2 max-pool, one Pallas kernel.

    x_nhwc: (N, H, W, Cin)   w_mat: (KH*KW*Cin, Cout)   b_row: (1, Cout)
    returns (N, Ho//2, Wo//2, Cout) in NHWC.
    """
    n, h, w, cin = x_nhwc.shape
    cout = w_mat.shape[1]
    ho, wo = h - kh + 1, w - kw + 1
    ho2, wo2 = ho // 2, wo // 2
    m = n * ho2 * wo2

    # Glue (pure layout): strided im2col grouped by 2x2 pooling-window
    # position.  Same total bytes as plain im2col; no conv-resolution
    # intermediate is ever written back to HBM.
    groups = []
    for dy in range(2):
        for dx in range(2):
            cols = []
            for i in range(kh):
                for j in range(kw):
                    r0, c0 = dy + i, dx + j
                    cols.append(x_nhwc[:, r0:r0 + 2 * ho2 - 1:2,
                                       c0:c0 + 2 * wo2 - 1:2, :])
            g = jnp.stack(cols, axis=3)                    # (N,Ho2,Wo2,KH*KW,Cin)
            groups.append(g.reshape(m, kh * kw * cin))
    patches = jnp.stack(groups, axis=0)                    # (4, M, K)

    out = pl.pallas_call(
        _conv_relu_pool_kernel,
        out_shape=jax.ShapeDtypeStruct((m, cout), jnp.float32),
        in_specs=[_VMEM, _VMEM, _VMEM],
        out_specs=_VMEM,
    )(patches, w_mat, b_row)
    return out.reshape(n, ho2, wo2, cout)


def mlp(x, w1, b1, w2, b2):
    """(N, 256) -> fc1(ReLU) -> fc2, fused in one Pallas kernel."""
    m = x.shape[0]
    n_out = w2.shape[1]
    return pl.pallas_call(
        _mlp_kernel,
        out_shape=jax.ShapeDtypeStruct((m, n_out), jnp.float32),
        in_specs=[_VMEM] * 5,
        out_specs=_VMEM,
    )(x, w1, b1, w2, b2)


# ----------------------------------------------------------------------------
# Parameters
# ----------------------------------------------------------------------------
def _oihw_to_mat(w_oihw):
    cout, cin, kh, kw = w_oihw.shape
    return jnp.transpose(w_oihw, (2, 3, 1, 0)).reshape(kh * kw * cin, cout)


def init_params(key, num_classes):
    ks = jax.random.split(key, 5)

    def winit(k, shape, fan_in):
        return jax.random.normal(k, shape, jnp.float32) * (2.0 / fan_in) ** 0.5

    w1 = winit(ks[0], (16, 3, 3, 3), 3 * 3 * 3)
    w2 = winit(ks[1], (32, 16, 4, 4), 16 * 4 * 4)
    w3 = winit(ks[2], (64, 32, 3, 3), 32 * 3 * 3)
    fc1_w = winit(ks[3], (64 * 2 * 2, 64), 64 * 2 * 2)   # rows in NCHW-flat order
    fc2_w = winit(ks[4], (64, num_classes), 64)

    # Fold PyTorch's NCHW `.view(N, 256)` ordering into fc1's weight once:
    # reorder rows from NCHW-flat (c,h,w) to the kernels' NHWC-flat (h,w,c).
    fc1_w_nhwc = fc1_w.reshape(64, 2, 2, 64).transpose(1, 2, 0, 3).reshape(256, 64)

    return {
        # PyTorch-layout parameters (used by the pure-JAX reference).
        "w1": w1, "w2": w2, "w3": w3, "fc1_w": fc1_w, "fc2_w": fc2_w,
        "b1": jnp.zeros((1, 16), jnp.float32),
        "b2": jnp.zeros((1, 32), jnp.float32),
        "b3": jnp.zeros((1, 64), jnp.float32),
        "fc1_b": jnp.zeros((1, 64), jnp.float32),
        "fc2_b": jnp.zeros((1, num_classes), jnp.float32),
        # Kernel-facing layouts, derived ONCE at init (not per forward call).
        "w1_mat": _oihw_to_mat(w1),
        "w2_mat": _oihw_to_mat(w2),
        "w3_mat": _oihw_to_mat(w3),
        "fc1_w_nhwc": fc1_w_nhwc,
    }


# ----------------------------------------------------------------------------
# Model forward (Pallas path)
# ----------------------------------------------------------------------------
@jax.jit
def cnn_forward(x_nchw, params):
    x = jnp.transpose(x_nchw, (0, 2, 3, 1))                          # NCHW -> NHWC
    x = conv_relu_pool(x, params["w1_mat"], params["b1"], 3, 3)      # (N,15,15,16)
    x = conv_relu_pool(x, params["w2_mat"], params["b2"], 4, 4)      # (N, 6, 6,32)
    x = conv_relu_pool(x, params["w3_mat"], params["b3"], 3, 3)      # (N, 2, 2,64)
    n = x.shape[0]
    # Free NHWC flatten; the NCHW permutation is already baked into fc1_w_nhwc.
    rep = x.reshape(n, 2 * 2 * 64)
    return mlp(rep, params["fc1_w_nhwc"], params["fc1_b"],
               params["fc2_w"], params["fc2_b"])


# ----------------------------------------------------------------------------
# Pure-JAX reference (for correctness check), uses PyTorch-layout params.
# ----------------------------------------------------------------------------
def cnn_forward_ref(x_nchw, params):
    x = jnp.transpose(x_nchw, (0, 2, 3, 1))

    def conv(x, w_oihw, b):
        w_hwio = jnp.transpose(w_oihw, (2, 3, 1, 0))
        y = lax.conv_general_dilated(
            x, w_hwio, window_strides=(1, 1), padding="VALID",
            dimension_numbers=("NHWC", "HWIO", "NHWC"))
        return jnp.maximum(y + b, 0.0)

    def pool(x):
        return lax.reduce_window(x, -jnp.inf, lax.max,
                                 (1, 2, 2, 1), (1, 2, 2, 1), "VALID")

    x = pool(conv(x, params["w1"], params["b1"]))
    x = pool(conv(x, params["w2"], params["b2"]))
    x = pool(conv(x, params["w3"], params["b3"]))
    n = x.shape[0]
    rep = jnp.transpose(x, (0, 3, 1, 2)).reshape(n, 64 * 2 * 2)
    h = jnp.maximum(rep @ params["fc1_w"] + params["fc1_b"], 0.0)
    return h @ params["fc2_w"] + params["fc2_b"]


if __name__ == "__main__":
    key = jax.random.PRNGKey(0)
    k_x, k_p = jax.random.split(key)

    num_classes = 10
    # Input must be 32x32 so that features flatten to 64*2*2 = 256.
    x = jax.random.normal(k_x, (2, 3, 32, 32), jnp.float32)
    params = init_params(k_p, num_classes)

    out = cnn_forward(x, params)
    jax.block_until_ready(out)

    ref = cnn_forward_ref(x, params)
    assert out.shape == (2, num_classes), out.shape
    assert jnp.allclose(out, ref, rtol=1e-4, atol=1e-4), (
        float(jnp.max(jnp.abs(out - ref))))

    print("KERNEL_OK")
</pallas_src>

<mosaic_0001>
module attributes {stable_mosaic.version = 11 : i64} {
  func.func @_conv_relu_pool_kernel(%arg0: memref<4x450x27xf32, #tpu.memory_space<vmem>>, %arg1: memref<27x16xf32, #tpu.memory_space<vmem>>, %arg2: memref<1x16xf32, #tpu.memory_space<vmem>>, %arg3: memref<450x16xf32, #tpu.memory_space<vmem>>) attributes {dimension_semantics = [], scalar_prefetch = 0 : i64, scratch_operands = 0 : i64, tpu.core_type = #tpu.core_type<tc>} {
    %c0 = arith.constant 0 : index
    %c0_0 = arith.constant 0 : index
    %c0_1 = arith.constant 0 : index
    %0 = vector.load %arg0[%c0, %c0_0, %c0_1] : memref<4x450x27xf32, #tpu.memory_space<vmem>>, vector<1x450x27xf32>
    %1 = vector.shape_cast %0 : vector<1x450x27xf32> to vector<450x27xf32>
    %c0_2 = arith.constant 0 : index
    %c0_3 = arith.constant 0 : index
    %2 = vector.load %arg1[%c0_2, %c0_3] : memref<27x16xf32, #tpu.memory_space<vmem>>, vector<27x16xf32>
    %cst = arith.constant dense<0.000000e+00> : vector<450x16xf32>
    %3 = tpu.matmul %1, %2, %cst {dimension_numbers = #tpu.dot_dimension_numbers<[1], [0], [0], [1], [0, 0, 1, 1], [], []>} : vector<450x27xf32>, vector<27x16xf32>, vector<450x16xf32> -> vector<450x16xf32>
    %c1 = arith.constant 1 : index
    %c0_4 = arith.constant 0 : index
    %c0_5 = arith.constant 0 : index
    %4 = vector.load %arg0[%c1, %c0_4, %c0_5] : memref<4x450x27xf32, #tpu.memory_space<vmem>>, vector<1x450x27xf32>
    %5 = vector.shape_cast %4 : vector<1x450x27xf32> to vector<450x27xf32>
    %c0_6 = arith.constant 0 : index
    %c0_7 = arith.constant 0 : index
    %6 = vector.load %arg1[%c0_6, %c0_7] : memref<27x16xf32, #tpu.memory_space<vmem>>, vector<27x16xf32>
    %cst_8 = arith.constant dense<0.000000e+00> : vector<450x16xf32>
    %7 = tpu.matmul %5, %6, %cst_8 {dimension_numbers = #tpu.dot_dimension_numbers<[1], [0], [0], [1], [0, 0, 1, 1], [], []>} : vector<450x27xf32>, vector<27x16xf32>, vector<450x16xf32> -> vector<450x16xf32>
    %8 = arith.maximumf %3, %7 : vector<450x16xf32>
    %c2 = arith.constant 2 : index
    %c0_9 = arith.constant 0 : index
    %c0_10 = arith.constant 0 : index
    %9 = vector.load %arg0[%c2, %c0_9, %c0_10] : memref<4x450x27xf32, #tpu.memory_space<vmem>>, vector<1x450x27xf32>
    %10 = vector.shape_cast %9 : vector<1x450x27xf32> to vector<450x27xf32>
    %c0_11 = arith.constant 0 : index
    %c0_12 = arith.constant 0 : index
    %11 = vector.load %arg1[%c0_11, %c0_12] : memref<27x16xf32, #tpu.memory_space<vmem>>, vector<27x16xf32>
    %cst_13 = arith.constant dense<0.000000e+00> : vector<450x16xf32>
    %12 = tpu.matmul %10, %11, %cst_13 {dimension_numbers = #tpu.dot_dimension_numbers<[1], [0], [0], [1], [0, 0, 1, 1], [], []>} : vector<450x27xf32>, vector<27x16xf32>, vector<450x16xf32> -> vector<450x16xf32>
    %13 = arith.maximumf %8, %12 : vector<450x16xf32>
    %c3 = arith.constant 3 : index
    %c0_14 = arith.constant 0 : index
    %c0_15 = arith.constant 0 : index
    %14 = vector.load %arg0[%c3, %c0_14, %c0_15] : memref<4x450x27xf32, #tpu.memory_space<vmem>>, vector<1x450x27xf32>
    %15 = vector.shape_cast %14 : vector<1x450x27xf32> to vector<450x27xf32>
    %c0_16 = arith.constant 0 : index
    %c0_17 = arith.constant 0 : index
    %16 = vector.load %arg1[%c0_16, %c0_17] : memref<27x16xf32, #tpu.memory_space<vmem>>, vector<27x16xf32>
    %cst_18 = arith.constant dense<0.000000e+00> : vector<450x16xf32>
    %17 = tpu.matmul %15, %16, %cst_18 {dimension_numbers = #tpu.dot_dimension_numbers<[1], [0], [0], [1], [0, 0, 1, 1], [], []>} : vector<450x27xf32>, vector<27x16xf32>, vector<450x16xf32> -> vector<450x16xf32>
    %18 = arith.maximumf %13, %17 : vector<450x16xf32>
    %c0_19 = arith.constant 0 : index
    %c0_20 = arith.constant 0 : index
    %19 = vector.load %arg2[%c0_19, %c0_20] : memref<1x16xf32, #tpu.memory_space<vmem>>, vector<1x16xf32>
    %20 = vector.broadcast %19 : vector<1x16xf32> to vector<450x16xf32>
    %21 = arith.addf %18, %20 : vector<450x16xf32>
    %cst_21 = arith.constant 0.000000e+00 : f32
    %22 = vector.broadcast %cst_21 : f32 to vector<450x16xf32>
    %23 = arith.maximumf %21, %22 : vector<450x16xf32>
    %c0_22 = arith.constant 0 : index
    %c0_23 = arith.constant 0 : index
    %24 = vector.load %arg3[%c0_22, %c0_23] : memref<450x16xf32, #tpu.memory_space<vmem>>, vector<450x16xf32>
    tpu.vector_store %arg3[%c0_22, %c0_23], %23 {strides = array<i32>} : memref<450x16xf32, #tpu.memory_space<vmem>>, vector<450x16xf32>,
    return
  }
}

module attributes {stable_mosaic.version = 11 : i64} {
  func.func @_conv_relu_pool_kernel(%arg0: memref<4x72x256xf32, #tpu.memory_space<vmem>>, %arg1: memref<256x32xf32, #tpu.memory_space<vmem>>, %arg2: memref<1x32xf32, #tpu.memory_space<vmem>>, %arg3: memref<72x32xf32, #tpu.memory_space<vmem>>) attributes {dimension_semantics = [], scalar_prefetch = 0 : i64, scratch_operands = 0 : i64, tpu.core_type = #tpu.core_type<tc>} {
    %c0 = arith.constant 0 : index
    %c0_0 = arith.constant 0 : index
    %c0_1 = arith.constant 0 : index
    %0 = vector.load %arg0[%c0, %c0_0, %c0_1] : memref<4x72x256xf32, #tpu.memory_space<vmem>>, vector<1x72x256xf32>
    %1 = vector.shape_cast %0 : vector<1x72x256xf32> to vector<72x256xf32>
    %c0_2 = arith.constant 0 : index
    %c0_3 = arith.constant 0 : index
    %2 = vector.load %arg1[%c0_2, %c0_3] : memref<256x32xf32, #tpu.memory_space<vmem>>, vector<256x32xf32>
    %cst = arith.constant dense<0.000000e+00> : vector<72x32xf32>
    %3 = tpu.matmul %1, %2, %cst {dimension_numbers = #tpu.dot_dimension_numbers<[1], [0], [0], [1], [0, 0, 1, 1], [], []>} : vector<72x256xf32>, vector<256x32xf32>, vector<72x32xf32> -> vector<72x32xf32>
    %c1 = arith.constant 1 : index
    %c0_4 = arith.constant 0 : index
    %c0_5 = arith.constant 0 : index
    %4 = vector.load %arg0[%c1, %c0_4, %c0_5] : memref<4x72x256xf32, #tpu.memory_space<vmem>>, vector<1x72x256xf32>
    %5 = vector.shape_cast %4 : vector<1x72x256xf32> to vector<72x256xf32>
    %c0_6 = arith.constant 0 : index
    %c0_7 = arith.constant 0 : index
    %6 = vector.load %arg1[%c0_6, %c0_7] : memref<256x32xf32, #tpu.memory_space<vmem>>, vector<256x32xf32>
    %cst_8 = arith.constant dense<0.000000e+00> : vector<72x32xf32>
    %7 = tpu.matmul %5, %6, %cst_8 {dimension_numbers = #tpu.dot_dimension_numbers<[1], [0], [0], [1], [0, 0, 1, 1], [], []>} : vector<72x256xf32>, vector<256x32xf32>, vector<72x32xf32> -> vector<72x32xf32>
    %8 = arith.maximumf %3, %7 : vector<72x32xf32>
    %c2 = arith.constant 2 : index
    %c0_9 = arith.constant 0 : index
    %c0_10 = arith.constant 0 : index
    %9 = vector.load %arg0[%c2, %c0_9, %c0_10] : memref<4x72x256xf32, #tpu.memory_space<vmem>>, vector<1x72x256xf32>
    %10 = vector.shape_cast %9 : vector<1x72x256xf32> to vector<72x256xf32>
    %c0_11 = arith.constant 0 : index
    %c0_12 = arith.constant 0 : index
    %11 = vector.load %arg1[%c0_11, %c0_12] : memref<256x32xf32, #tpu.memory_space<vmem>>, vector<256x32xf32>
    %cst_13 = arith.constant dense<0.000000e+00> : vector<72x32xf32>
    %12 = tpu.matmul %10, %11, %cst_13 {dimension_numbers = #tpu.dot_dimension_numbers<[1], [0], [0], [1], [0, 0, 1, 1], [], []>} : vector<72x256xf32>, vector<256x32xf32>, vector<72x32xf32> -> vector<72x32xf32>
    %13 = arith.maximumf %8, %12 : vector<72x32xf32>
    %c3 = arith.constant 3 : index
    %c0_14 = arith.constant 0 : index
    %c0_15 = arith.constant 0 : index
    %14 = vector.load %arg0[%c3, %c0_14, %c0_15] : memref<4x72x256xf32, #tpu.memory_space<vmem>>, vector<1x72x256xf32>
    %15 = vector.shape_cast %14 : vector<1x72x256xf32> to vector<72x256xf32>
    %c0_16 = arith.constant 0 : index
    %c0_17 = arith.constant 0 : index
    %16 = vector.load %arg1[%c0_16, %c0_17] : memref<256x32xf32, #tpu.memory_space<vmem>>, vector<256x32xf32>
    %cst_18 = arith.constant dense<0.000000e+00> : vector<72x32xf32>
    %17 = tpu.matmul %15, %16, %cst_18 {dimension_numbers = #tpu.dot_dimension_numbers<[1], [0], [0], [1], [0, 0, 1, 1], [], []>} : vector<72x256xf32>, vector<256x32xf32>, vector<72x32xf32> -> vector<72x32xf32>
    %18 = arith.maximumf %13, %17 : vector<72x32xf32>
    %c0_19 = arith.constant 0 : index
    %c0_20 = arith.constant 0 : index
    %19 = vector.load %arg2[%c0_19, %c0_20] : memref<1x32xf32, #tpu.memory_space<vmem>>, vector<1x32xf32>
    %20 = vector.broadcast %19 : vector<1x32xf32> to vector<72x32xf32>
    %21 = arith.addf %18, %20 : vector<72x32xf32>
    %cst_21 = arith.constant 0.000000e+00 : f32
    %22 = vector.broadcast %cst_21 : f32 to vector<72x32xf32>
    %23 = arith.maximumf %21, %22 : vector<72x32xf32>
    %c0_22 = arith.constant 0 : index
    %c0_23 = arith.constant 0 : index
    %24 = vector.load %arg3[%c0_22, %c0_23] : memref<72x32xf32, #tpu.memory_space<vmem>>, vector<72x32xf32>
    tpu.vector_store %arg3[%c0_22, %c0_23], %23 {strides = array<i32>} : memref<72x32xf32, #tpu.memory_space<vmem>>, vector<72x32xf32>,
    return
  }
}

module attributes {stable_mosaic.version = 11 : i64} {
  func.func @_conv_relu_pool_kernel(%arg0: memref<4x8x288xf32, #tpu.memory_space<vmem>>, %arg1: memref<288x64xf32, #tpu.memory_space<vmem>>, %arg2: memref<1x64xf32, #tpu.memory_space<vmem>>, %arg3: memref<8x64xf32, #tpu.memory_space<vmem>>) attributes {dimension_semantics = [], scalar_prefetch = 0 : i64, scratch_operands = 0 : i64, tpu.core_type = #tpu.core_type<tc>} {
    %c0 = arith.constant 0 : index
    %c0_0 = arith.constant 0 : index
    %c0_1 = arith.constant 0 : index
    %0 = vector.load %arg0[%c0, %c0_0, %c0_1] : memref<4x8x288xf32, #tpu.memory_space<vmem>>, vector<1x8x288xf32>
    %1 = vector.shape_cast %0 : vector<1x8x288xf32> to vector<8x288xf32>
    %c0_2 = arith.constant 0 : index
    %c0_3 = arith.constant 0 : index
    %2 = vector.load %arg1[%c0_2, %c0_3] : memref<288x64xf32, #tpu.memory_space<vmem>>, vector<288x64xf32>
    %cst = arith.constant dense<0.000000e+00> : vector<8x64xf32>
    %3 = tpu.matmul %1, %2, %cst {dimension_numbers = #tpu.dot_dimension_numbers<[1], [0], [0], [1], [0, 0, 1, 1], [], []>} : vector<8x288xf32>, vector<288x64xf32>, vector<8x64xf32> -> vector<8x64xf32>
    %c1 = arith.constant 1 : index
    %c0_4 = arith.constant 0 : index
    %c0_5 = arith.constant 0 : index
    %4 = vector.load %arg0[%c1, %c0_4, %c0_5] : memref<4x8x288xf32, #tpu.memory_space<vmem>>, vector<1x8x288xf32>
    %5 = vector.shape_cast %4 : vector<1x8x288xf32> to vector<8x288xf32>
    %c0_6 = arith.constant 0 : index
    %c0_7 = arith.constant 0 : index
    %6 = vector.load %arg1[%c0_6, %c0_7] : memref<288x64xf32, #tpu.memory_space<vmem>>, vector<288x64xf32>
    %cst_8 = arith.constant dense<0.000000e+00> : vector<8x64xf32>
    %7 = tpu.matmul %5, %6, %cst_8 {dimension_numbers = #tpu.dot_dimension_numbers<[1], [0], [0], [1], [0, 0, 1, 1], [], []>} : vector<8x288xf32>, vector<288x64xf32>, vector<8x64xf32> -> vector<8x64xf32>
    %8 = arith.maximumf %3, %7 : vector<8x64xf32>
    %c2 = arith.constant 2 : index
    %c0_9 = arith.constant 0 : index
    %c0_10 = arith.constant 0 : index
    %9 = vector.load %arg0[%c2, %c0_9, %c0_10] : memref<4x8x288xf32, #tpu.memory_space<vmem>>, vector<1x8x288xf32>
    %10 = vector.shape_cast %9 : vector<1x8x288xf32> to vector<8x288xf32>
    %c0_11 = arith.constant 0 : index
    %c0_12 = arith.constant 0 : index
    %11 = vector.load %arg1[%c0_11, %c0_12] : memref<288x64xf32, #tpu.memory_space<vmem>>, vector<288x64xf32>
    %cst_13 = arith.constant dense<0.000000e+00> : vector<8x64xf32>
    %12 = tpu.matmul %10, %11, %cst_13 {dimension_numbers = #tpu.dot_dimension_numbers<[1], [0], [0], [1], [0, 0, 1, 1], [], []>} : vector<8x288xf32>, vector<288x64xf32>, vector<8x64xf32> -> vector<8x64xf32>
    %13 = arith.maximumf %8, %12 : vector<8x64xf32>
    %c3 = arith.constant 3 : index
    %c0_14 = arith.constant 0 : index
    %c0_15 = arith.constant 0 : index
    %14 = vector.load %arg0[%c3, %c0_14, %c0_15] : memref<4x8x288xf32, #tpu.memory_space<vmem>>, vector<1x8x288xf32>
    %15 = vector.shape_cast %14 : vector<1x8x288xf32> to vector<8x288xf32>
    %c0_16 = arith.constant 0 : index
    %c0_17 = arith.constant 0 : index
    %16 = vector.load %arg1[%c0_16, %c0_17] : memref<288x64xf32, #tpu.memory_space<vmem>>, vector<288x64xf32>
    %cst_18 = arith.constant dense<0.000000e+00> : vector<8x64xf32>
    %17 = tpu.matmul %15, %16, %cst_18 {dimension_numbers = #tpu.dot_dimension_numbers<[1], [0], [0], [1], [0, 0, 1, 1], [], []>} : vector<8x288xf32>, vector<288x64xf32>, vector<8x64xf32> -> vector<8x64xf32>
    %18 = arith.maximumf %13, %17 : vector<8x64xf32>
    %c0_19 = arith.constant 0 : index
    %c0_20 = arith.constant 0 : index
    %19 = vector.load %arg2[%c0_19, %c0_20] : memref<1x64xf32, #tpu.memory_space<vmem>>, vector<1x64xf32>
    %20 = vector.broadcast %19 : vector<1x64xf32> to vector<8x64xf32>
    %21 = arith.addf %18, %20 : vector<8x64xf32>
    %cst_21 = arith.constant 0.000000e+00 : f32
    %22 = vector.broadcast %cst_21 : f32 to vector<8x64xf32>
    %23 = arith.maximumf %21, %22 : vector<8x64xf32>
    %c0_22 = arith.constant 0 : index
    %c0_23 = arith.constant 0 : index
    %24 = vector.load %arg3[%c0_22, %c0_23] : memref<8x64xf32, #tpu.memory_space<vmem>>, vector<8x64xf32>
    tpu.vector_store %arg3[%c0_22, %c0_23], %23 {strides = array<i32>} : memref<8x64xf32, #tpu.memory_space<vmem>>, vector<8x64xf32>,
    return
  }
}

module attributes {stable_mosaic.version = 11 : i64} {
  func.func @_mlp_kernel(%arg0: memref<2x256xf32, #tpu.memory_space<vmem>>, %arg1: memref<256x64xf32, #tpu.memory_space<vmem>>, %arg2: memref<1x64xf32, #tpu.memory_space<vmem>>, %arg3: memref<64x10xf32, #tpu.memory_space<vmem>>, %arg4: memref<1x10xf32, #tpu.memory_space<vmem>>, %arg5: memref<2x10xf32, #tpu.memory_space<vmem>>) attributes {dimension_semantics = [], scalar_prefetch = 0 : i64, scratch_operands = 0 : i64, tpu.core_type = #tpu.core_type<tc>} {
    %c0 = arith.constant 0 : index
    %c0_0 = arith.constant 0 : index
    %0 = vector.load %arg0[%c0, %c0_0] : memref<2x256xf32, #tpu.memory_space<vmem>>, vector<2x256xf32>
    %c0_1 = arith.constant 0 : index
    %c0_2 = arith.constant 0 : index
    %1 = vector.load %arg1[%c0_1, %c0_2] : memref<256x64xf32, #tpu.memory_space<vmem>>, vector<256x64xf32>
    %cst = arith.constant dense<0.000000e+00> : vector<2x64xf32>
    %2 = tpu.matmul %0, %1, %cst {dimension_numbers = #tpu.dot_dimension_numbers<[1], [0], [0], [1], [0, 0, 1, 1], [], []>} : vector<2x256xf32>, vector<256x64xf32>, vector<2x64xf32> -> vector<2x64xf32>
    %c0_3 = arith.constant 0 : index
    %c0_4 = arith.constant 0 : index
    %3 = vector.load %arg2[%c0_3, %c0_4] : memref<1x64xf32, #tpu.memory_space<vmem>>, vector<1x64xf32>
    %4 = vector.broadcast %3 : vector<1x64xf32> to vector<2x64xf32>
    %5 = arith.addf %2, %4 : vector<2x64xf32>
    %cst_5 = arith.constant 0.000000e+00 : f32
    %6 = vector.broadcast %cst_5 : f32 to vector<2x64xf32>
    %7 = arith.maximumf %5, %6 : vector<2x64xf32>
    %c0_6 = arith.constant 0 : index
    %c0_7 = arith.constant 0 : index
    %8 = vector.load %arg3[%c0_6, %c0_7] : memref<64x10xf32, #tpu.memory_space<vmem>>, vector<64x10xf32>
    %cst_8 = arith.constant dense<0.000000e+00> : vector<2x10xf32>
    %9 = tpu.matmul %7, %8, %cst_8 {dimension_numbers = #tpu.dot_dimension_numbers<[1], [0], [0], [1], [0, 0, 1, 1], [], []>} : vector<2x64xf32>, vector<64x10xf32>, vector<2x10xf32> -> vector<2x10xf32>
    %c0_9 = arith.constant 0 : index
    %c0_10 = arith.constant 0 : index
    %10 = vector.load %arg4[%c0_9, %c0_10] : memref<1x10xf32, #tpu.memory_space<vmem>>, vector<1x10xf32>
    %11 = vector.broadcast %10 : vector<1x10xf32> to vector<2x10xf32>
    %12 = arith.addf %9, %11 : vector<2x10xf32>
    %c0_11 = arith.constant 0 : index
    %c0_12 = arith.constant 0 : index
    %13 = vector.load %arg5[%c0_11, %c0_12] : memref<2x10xf32, #tpu.memory_space<vmem>>, vector<2x10xf32>
    tpu.vector_store %arg5[%c0_11, %c0_12], %12 {strides = array<i32>} : memref<2x10xf32, #tpu.memory_space<vmem>>, vector<2x10xf32>,
    return
  }
}

</mosaic_0001>

<llo_original>
// kernel: cnn_forward.4
$region0: #{cnn_forward.4}
  #allocation0 [shape = 'u32[]', space=smem, size = 0x4, offset = 0x4, fixed_abs, tag = 'smem constant byte address 0x4 - core index']
  #allocation1 [shape = 'u32[144,128]{1,0:T(1,128)}', space=vmem, size = 0x12000, scoped, tag = 'internal scratch']
  %s0 = inlined_call_operand.vmem [shape: f32[4,450,27], index: 0, kind: input, shape index: {}]
  %s1 = inlined_call_operand.vmem [shape: f32[27,16], index: 1, kind: input, shape index: {}]
  %s2 = inlined_call_operand.vmem [shape: f32[1,16], index: 2, kind: input, shape index: {}]
  %s3 = inlined_call_operand.vmem [shape: f32[450,16], index: 3, kind: output, shape index: {}]
  %s4 = sld [smem:[#allocation0]]
  $region22: #{cnn_forward.4} parent=0
    _
  %s6 = ssub.s32 1, %s4
  %s7 = scalar_select 0, %s6, %s4
  // Predicated region
  $region2: #{cnn_forward.4} parent=0 // pred_check
    _
  $region3: #{cnn_forward.4} parent=0 // pred_check_branch
    %9 = sbr.rel (0) target = $region5
  $region4: #{cnn_forward.4} parent=0 // pred_region
    _
  $region5: #{cnn_forward.4} parent=0 // pred_fallthru
    _
  // Predicated region
  $region6: #{cnn_forward.4} parent=0 // pred_check
    _
  $region7: #{cnn_forward.4} parent=0 // pred_check_branch
    %11 = sbr.rel (0) target = $region9
  $region8: #{cnn_forward.4} parent=0 // pred_region
    _
  $region9: #{cnn_forward.4} parent=0 // pred_fallthru
    _
  // Predicated region
  $region10: #{cnn_forward.4} parent=0 // pred_check
    _
  $region11: #{cnn_forward.4} parent=0 // pred_check_branch
    %13 = sbr.rel (0) target = $region13
  $region12: #{cnn_forward.4} parent=0 // pred_region
    _
  $region13: #{cnn_forward.4} parent=0 // pred_fallthru
    _
  %v14 = vld [vmem:[%s0] sm:$0xff]
  %v15 = vld [vmem:[%s0 + $0x8] sm:$0xff]
  %v16 = vld [vmem:[%s0 + $0x10] sm:$0xff]
  %v17 = vld [vmem:[%s0 + $0x18] sm:$0xff]
  %v18 = vld [vmem:[%s0 + $0x20] sm:$0xff]
  %v19 = vld [vmem:[%s0 + $0x28] sm:$0xff]
  %v20 = vld [vmem:[%s0 + $0x30] sm:$0xff]
  %v21 = vld [vmem:[%s0 + $0x38] sm:$0xff]
  %v22 = vld [vmem:[%s0 + $0x40] sm:$0xff]
  %v23 = vld [vmem:[%s0 + $0x48] sm:$0xff]
  %v24 = vld [vmem:[%s0 + $0x50] sm:$0xff]
  %v25 = vld [vmem:[%s0 + $0x58] sm:$0xff]
  %v26 = vld [vmem:[%s0 + $0x60] sm:$0xff]
  %v27 = vld [vmem:[%s0 + $0x68] sm:$0xff]
  %v28 = vld [vmem:[%s0 + $0x70] sm:$0xff]
  %v29 = vld [vmem:[%s0 + $0x78] sm:$0xff]
  %v30 = vld [vmem:[%s0 + $0x80] sm:$0xff]
  %v31 = vld [vmem:[%s0 + $0x88] sm:$0xff]
  %v32 = vld [vmem:[%s0 + $0x90] sm:$0xff]
  %v33 = vld [vmem:[%s0 + $0x98] sm:$0xff]
  %v34 = vld [vmem:[%s0 + $0xa0] sm:$0xff]
  %v35 = vld [vmem:[%s0 + $0xa8] sm:$0xff]
  %v36 = vld [vmem:[%s0 + $0xb0] sm:$0xff]
  %v37 = vld [vmem:[%s0 + $0xb8] sm:$0xff]
  %v38 = vld [vmem:[%s0 + $0xc0] sm:$0xff]
  %v39 = vld [vmem:[%s0 + $0xc8] sm:$0xff]
  %v40 = vld [vmem:[%s0 + $0xd0] sm:$0xff]
  %v41 = vld [vmem:[%s0 + $0xd8] sm:$0xff]
  %v42 = vld [vmem:[%s0 + $0xe0] sm:$0xff]
  %v43 = vld [vmem:[%s0 + $0xe8] sm:$0xff]
  %v44 = vld [vmem:[%s0 + $0xf0] sm:$0xff]
  %v45 = vld [vmem:[%s0 + $0xf8] sm:$0xff]
  %v46 = vld [vmem:[%s0 + $0x100] sm:$0xff]
  %v47 = vld [vmem:[%s0 + $0x108] sm:$0xff]
  %v48 = vld [vmem:[%s0 + $0x110] sm:$0xff]
  %v49 = vld [vmem:[%s0 + $0x118] sm:$0xff]
  %v50 = vld [vmem:[%s0 + $0x120] sm:$0xff]
  %v51 = vld [vmem:[%s0 + $0x128] sm:$0xff]
  %v52 = vld [vmem:[%s0 + $0x130] sm:$0xff]
  %v53 = vld [vmem:[%s0 + $0x138] sm:$0xff]
  %v54 = vld [vmem:[%s0 + $0x140] sm:$0xff]
  %v55 = vld [vmem:[%s0 + $0x148] sm:$0xff]
  %v56 = vld [vmem:[%s0 + $0x150] sm:$0xff]
  %v57 = vld [vmem:[%s0 + $0x158] sm:$0xff]
  %v58 = vld [vmem:[%s0 + $0x160] sm:$0xff]
  %v59 = vld [vmem:[%s0 + $0x168] sm:$0xff]
  %v60 = vld [vmem:[%s0 + $0x170] sm:$0xff]
  %v61 = vld [vmem:[%s0 + $0x178] sm:$0xff]
  %v62 = vld [vmem:[%s0 + $0x180] sm:$0xff]
  %v63 = vld [vmem:[%s0 + $0x188] sm:$0xff]
  %v64 = vld [vmem:[%s0 + $0x190] sm:$0xff]
  %v65 = vld [vmem:[%s0 + $0x198] sm:$0xff]
  %v66 = vld [vmem:[%s0 + $0x1a0] sm:$0xff]
  %v67 = vld [vmem:[%s0 + $0x1a8] sm:$0xff]
  %v68 = vld [vmem:[%s0 + $0x1b0] sm:$0xff]
  %v69 = vld [vmem:[%s0 + $0x1b8] sm:$0xff]
  %v70 = vld [vmem:[%s0 + $0x1c0] sm:$0x3]
  %v71 = vld [vmem:[%s1] sm:$0xff]
  %v72 = vld [vmem:[%s1 + $0x8] sm:$0xff]
  %v73 = vld [vmem:[%s1 + $0x10] sm:$0xff]
  %v74 = vld [vmem:[%s1 + $0x18] sm:$0x7]
  %vm75 = vcmask 220160
  %v77 = vsel %vm75, %v14, 0
  %v80 = vsel %vm75, %v15, 0
  %v83 = vsel %vm75, %v16, 0
  %v86 = vsel %vm75, %v17, 0
  %v89 = vsel %vm75, %v18, 0
  %v92 = vsel %vm75, %v19, 0
  %v95 = vsel %vm75, %v20, 0
  %v98 = vsel %vm75, %v21, 0
  %v101 = vsel %vm75, %v22, 0
  %v104 = vsel %vm75, %v23, 0
  %v107 = vsel %vm75, %v24, 0
  %v110 = vsel %vm75, %v25, 0
  %v113 = vsel %vm75, %v26, 0
  %v116 = vsel %vm75, %v27, 0
  %v119 = vsel %vm75, %v28, 0
  %v122 = vsel %vm75, %v29, 0
  %v125 = vsel %vm75, %v30, 0
  %v128 = vsel %vm75, %v31, 0
  %v131 = vsel %vm75, %v32, 0
  %v134 = vsel %vm75, %v33, 0
  %v137 = vsel %vm75, %v34, 0
  %v140 = vsel %vm75, %v35, 0
  %v143 = vsel %vm75, %v36, 0
  %v146 = vsel %vm75, %v37, 0
  %v149 = vsel %vm75, %v38, 0
  %v152 = vsel %vm75, %v39, 0
  %v155 = vsel %vm75, %v40, 0
  %v158 = vsel %vm75, %v41, 0
  %v161 = vsel %vm75, %v42, 0
  %v164 = vsel %vm75, %v43, 0
  %v167 = vsel %vm75, %v44, 0
  %v170 = vsel %vm75, %v45, 0
  %v173 = vsel %vm75, %v46, 0
  %v176 = vsel %vm75, %v47, 0
  %v179 = vsel %vm75, %v48, 0
  %v182 = vsel %vm75, %v49, 0
  %v185 = vsel %vm75, %v50, 0
  %v188 = vsel %vm75, %v51, 0
  %v191 = vsel %vm75, %v52, 0
  %v194 = vsel %vm75, %v53, 0
  %v197 = vsel %vm75, %v54, 0
  %v200 = vsel %vm75, %v55, 0
  %v203 = vsel %vm75, %v56, 0
  %v206 = vsel %vm75, %v57, 0
  %v209 = vsel %vm75, %v58, 0
  %v212 = vsel %vm75, %v59, 0
  %v215 = vsel %vm75, %v60, 0
  %v218 = vsel %vm75, %v61, 0
  %v221 = vsel %vm75, %v62, 0
  %v224 = vsel %vm75, %v63, 0
  %v227 = vsel %vm75, %v64, 0
  %v230 = vsel %vm75, %v65, 0
  %v233 = vsel %vm75, %v66, 0
  %v236 = vsel %vm75, %v67, 0
  %v239 = vsel %vm75, %v68, 0
  %v242 = vsel %vm75, %v69, 0
  %v245 = vsel %vm75, %v70, 0
  %vm247 = vcmask 1042432
  %v249 = vsel %vm247, %v74, 0
  %251 = vmatprep.subr.mxu0 0.0
  %252 = vmatpush1.msra.mxu0 0.0
  %253 = vmatprep.subr.mxu0 0.0
  %254 = vmatpush1.msra.mxu0 0.0
  %255 = vmatprep.subr.mxu0 0.0
  %256 = vmatpush1.msra.mxu0 0.0
  %257 = vmatprep.subr.mxu0 0.0
  %258 = vmatpush1.msra.mxu0 0.0
  %259 = vmatprep.subr.mxu0 0.0
  %260 = vmatpush1.msra.mxu0 0.0
  %261 = vmatprep.subr.mxu0 0.0
  %262 = vmatpush1.msra.mxu0 0.0
  %263 = vmatprep.subr.mxu0 0.0
  %264 = vmatpush1.msra.mxu0 0.0
  %265 = vmatprep.subr.mxu0 0.0
  %266 = vmatpush1.msra.mxu0 0.0
  %267 = vmatprep.subr.mxu0 0.0
  %268 = vmatpush1.msra.mxu0 0.0
  %269 = vmatprep.subr.mxu0 0.0
  %270 = vmatpush1.msra.mxu0 0.0
  %271 = vmatprep.subr.mxu0 0.0
  %272 = vmatpush1.msra.mxu0 0.0
  %273 = vmatprep.subr.mxu0 0.0
  %274 = vmatpush1.msra.mxu0 0.0
  %275 = vmatprep.subr.mxu0 0.0
  %276 = vmatpush1.msra.mxu0 %v249
  %277 = vmatprep.subr.mxu0 0.0
  %278 = vmatpush1.msra.mxu0 %v73
  %279 = vmatprep.subr.mxu0 0.0
  %280 = vmatpush1.msra.mxu0 %v72
  %281 = vmatprep.subr.mxu0 0.0
  %282 = vmatpush1.msra.mxu0 %v71
  %283 = vmatprep.subr.mxu0 0.0
  %284 = vmatpush2.msra.mxu0 0.0
  %285 = vmatprep.subr.mxu0 0.0
  %286 = vmatpush2.msra.mxu0 0.0
  %287 = vmatprep.subr.mxu0 0.0
  %288 = vmatpush2.msra.mxu0 0.0
  %289 = vmatprep.subr.mxu0 0.0
  %290 = vmatpush2.msra.mxu0 0.0
  %291 = vmatprep.subr.mxu0 0.0
  %292 = vmatpush2.msra.mxu0 0.0
  %293 = vmatprep.subr.mxu0 0.0
  %294 = vmatpush2.msra.mxu0 0.0
  %295 = vmatprep.subr.mxu0 0.0
  %296 = vmatpush2.msra.mxu0 0.0
  %297 = vmatprep.subr.mxu0 0.0
  %298 = vmatpush2.msra.mxu0 0.0
  %299 = vmatprep.subr.mxu0 0.0
  %300 = vmatpush2.msra.mxu0 0.0
  %301 = vmatprep.subr.mxu0 0.0
  %302 = vmatpush2.msra.mxu0 0.0
  %303 = vmatprep.subr.mxu0 0.0
  %304 = vmatpush2.msra.mxu0 0.0
  %305 = vmatprep.subr.mxu0 0.0
  %306 = vmatpush2.msra.mxu0 0.0
  %307 = vmatprep.subr.mxu0 0.0
  %308 = vmatpush2.msra.mxu0 0.0
  %309 = vmatprep.subr.mxu0 0.0
  %310 = vmatpush2.msra.mxu0 0.0
  %311 = vmatprep.subr.mxu0 0.0
  %312 = vmatpush2.msra.mxu0 0.0
  %313 = vmatprep.subr.mxu0 0.0
  %314 = vmatpush2.msra.mxu0 0.0
  %315 = vmatprep.mubr.f32.mxu0 0.0
  %316 = vmatmul.mubr.f32.gmra.mxu0 %v77
  %v317 = vpop.f32.mrf.mxu0
  %v318 = vadd.f32 0.0, %v317
  %v319 = vpop.f32.mrf.mxu0
  %320 = vmatprep.mubr.f32.mxu0 0.0
  %321 = vmatmul.mubr.f32.gmra.mxu0 %v80
  %v322 = vpop.f32.mrf.mxu0
  %v323 = vadd.f32 0.0, %v322
  %v324 = vpop.f32.mrf.mxu0
  %325 = vmatprep.mubr.f32.mxu0 0.0
  %326 = vmatmul.mubr.f32.gmra.mxu0 %v83
  %v327 = vpop.f32.mrf.mxu0
  %v328 = vadd.f32 0.0, %v327
  %v329 = vpop.f32.mrf.mxu0
  %330 = vmatprep.mubr.f32.mxu0 0.0
  %331 = vmatmul.mubr.f32.gmra.mxu0 %v86
  %v332 = vpop.f32.mrf.mxu0
  %v333 = vadd.f32 0.0, %v332
  %v334 = vpop.f32.mrf.mxu0
  %335 = vmatprep.mubr.f32.mxu0 0.0
  %336 = vmatmul.mubr.f32.gmra.mxu0 %v89
  %v337 = vpop.f32.mrf.mxu0
  %v338 = vadd.f32 0.0, %v337
  %v339 = vpop.f32.mrf.mxu0
  %340 = vmatprep.mubr.f32.mxu0 0.0
  %341 = vmatmul.mubr.f32.gmra.mxu0 %v92
  %v342 = vpop.f32.mrf.mxu0
  %v343 = vadd.f32 0.0, %v342
  %v344 = vpop.f32.mrf.mxu0
  %345 = vmatprep.mubr.f32.mxu0 0.0
  %346 = vmatmul.mubr.f32.gmra.mxu0 %v95
  %v347 = vpop.f32.mrf.mxu0
  %v348 = vadd.f32 0.0, %v347
  %v349 = vpop.f32.mrf.mxu0
  %350 = vmatprep.mubr.f32.mxu0 0.0
  %351 = vmatmul.mubr.f32.gmra.mxu0 %v98
  %v352 = vpop.f32.mrf.mxu0
  %v353 = vadd.f32 0.0, %v352
  %v354 = vpop.f32.mrf.mxu0
  %355 = vmatprep.mubr.f32.mxu0 0.0
  %356 = vmatmul.mubr.f32.gmra.mxu0 %v101
  %v357 = vpop.f32.mrf.mxu0
  %v358 = vadd.f32 0.0, %v357
  %v359 = vpop.f32.mrf.mxu0
  %360 = vmatprep.mubr.f32.mxu0 0.0
  %361 = vmatmul.mubr.f32.gmra.mxu0 %v104
  %v362 = vpop.f32.mrf.mxu0
  %v363 = vadd.f32 0.0, %v362
  %v364 = vpop.f32.mrf.mxu0
  %365 = vmatprep.mubr.f32.mxu0 0.0
  %366 = vmatmul.mubr.f32.gmra.mxu0 %v107
  %v367 = vpop.f32.mrf.mxu0
  %v368 = vadd.f32 0.0, %v367
  %v369 = vpop.f32.mrf.mxu0
  %370 = vmatprep.mubr.f32.mxu0 0.0
  %371 = vmatmul.mubr.f32.gmra.mxu0 %v110
  %v372 = vpop.f32.mrf.mxu0
  %v373 = vadd.f32 0.0, %v372
  %v374 = vpop.f32.mrf.mxu0
  %375 = vmatprep.mubr.f32.mxu0 0.0
  %376 = vmatmul.mubr.f32.gmra.mxu0 %v113
  %v377 = vpop.f32.mrf.mxu0
  %v378 = vadd.f32 0.0, %v377
  %v379 = vpop.f32.mrf.mxu0
  %380 = vmatprep.mubr.f32.mxu0 0.0
  %381 = vmatmul.mubr.f32.gmra.mxu0 %v116
  %v382 = vpop.f32.mrf.mxu0
  %v383 = vadd.f32 0.0, %v382
  %v384 = vpop.f32.mrf.mxu0
  %385 = vmatprep.mubr.f32.mxu0 0.0
  %386 = vmatmul.mubr.f32.gmra.mxu0 %v119
  %v387 = vpop.f32.mrf.mxu0
  %v388 = vadd.f32 0.0, %v387
  %v389 = vpop.f32.mrf.mxu0
  %390 = vmatprep.mubr.f32.mxu0 0.0
  %391 = vmatmul.mubr.f32.gmra.mxu0 %v122
  %v392 = vpop.f32.mrf.mxu0
  %v393 = vadd.f32 0.0, %v392
  %v394 = vpop.f32.mrf.mxu0
  %395 = vmatprep.mubr.f32.mxu0 0.0
  %396 = vmatmul.mubr.f32.gmra.mxu0 %v125
  %v397 = vpop.f32.mrf.mxu0
  %v398 = vadd.f32 0.0, %v397
  %v399 = vpop.f32.mrf.mxu0
  %400 = vmatprep.mubr.f32.mxu0 0.0
  %401 = vmatmul.mubr.f32.gmra.mxu0 %v128
  %v402 = vpop.f32.mrf.mxu0
  %v403 = vadd.f32 0.0, %v402
  %v404 = vpop.f32.mrf.mxu0
  %405 = vmatprep.mubr.f32.mxu0 0.0
  %406 = vmatmul.mubr.f32.gmra.mxu0 %v131
  %v407 = vpop.f32.mrf.mxu0
  %v408 = vadd.f32 0.0, %v407
  %v409 = vpop.f32.mrf.mxu0
  %410 = vmatprep.mubr.f32.mxu0 0.0
  %411 = vmatmul.mubr.f32.gmra.mxu0 %v134
  %v412 = vpop.f32.mrf.mxu0
  %v413 = vadd.f32 0.0, %v412
  %v414 = vpop.f32.mrf.mxu0
  %415 = vmatprep.mubr.f32.mxu0 0.0
  %416 = vmatmul.mubr.f32.gmra.mxu0 %v137
  %v417 = vpop.f32.mrf.mxu0
  %v418 = vadd.f32 0.0, %v417
  %v419 = vpop.f32.mrf.mxu0
  %420 = vmatprep.mubr.f32.mxu0 0.0
  %421 = vmatmul.mubr.f32.gmra.mxu0 %v140
  %v422 = vpop.f32.mrf.mxu0
  %v423 = vadd.f32 0.0, %v422
  %v424 = vpop.f32.mrf.mxu0
  %425 = vmatprep.mubr.f32.mxu0 0.0
  %426 = vmatmul.mubr.f32.gmra.mxu0 %v143
  %v427 = vpop.f32.mrf.mxu0
  %v428 = vadd.f32 0.0, %v427
  %v429 = vpop.f32.mrf.mxu0
  %430 = vmatprep.mubr.f32.mxu0 0.0
  %431 = vmatmul.mubr.f32.gmra.mxu0 %v146
  %v432 = vpop.f32.mrf.mxu0
  %v433 = vadd.f32 0.0, %v432
  %v434 = vpop.f32.mrf.mxu0
  %435 = vmatprep.mubr.f32.mxu0 0.0
  %436 = vmatmul.mubr.f32.gmra.mxu0 %v149
  %v437 = vpop.f32.mrf.mxu0
  %v438 = vadd.f32 0.0, %v437
  %v439 = vpop.f32.mrf.mxu0
  %440 = vmatprep.mubr.f32.mxu0 0.0
  %441 = vmatmul.mubr.f32.gmra.mxu0 %v152
  %v442 = vpop.f32.mrf.mxu0
  %v443 = vadd.f32 0.0, %v442
  %v444 = vpop.f32.mrf.mxu0
  %445 = vmatprep.mubr.f32.mxu0 0.0
  %446 = vmatmul.mubr.f32.gmra.mxu0 %v155
  %v447 = vpop.f32.mrf.mxu0
  %v448 = vadd.f32 0.0, %v447
  %v449 = vpop.f32.mrf.mxu0
  %450 = vmatprep.mubr.f32.mxu0 0.0
  %451 = vmatmul.mubr.f32.gmra.mxu0 %v158
  %v452 = vpop.f32.mrf.mxu0
  %v453 = vadd.f32 0.0, %v452
  %v454 = vpop.f32.mrf.mxu0
  %455 = vmatprep.mubr.f32.mxu0 0.0
  %456 = vmatmul.mubr.f32.gmra.mxu0 %v161
  %v457 = vpop.f32.mrf.mxu0
  %v458 = vadd.f32 0.0, %v457
  %v459 = vpop.f32.mrf.mxu0
  %460 = vmatprep.mubr.f32.mxu0 0.0
  %461 = vmatmul.mubr.f32.gmra.mxu0 %v164
  %v462 = vpop.f32.mrf.mxu0
  %v463 = vadd.f32 0.0, %v462
  %v464 = vpop.f32.mrf.mxu0
  %465 = vmatprep.mubr.f32.mxu0 0.0
  %466 = vmatmul.mubr.f32.gmra.mxu0 %v167
  %v467 = vpop.f32.mrf.mxu0
  %v468 = vadd.f32 0.0, %v467
  %v469 = vpop.f32.mrf.mxu0
  %470 = vmatprep.mubr.f32.mxu0 0.0
  %471 = vmatmul.mubr.f32.gmra.mxu0 %v170
  %v472 = vpop.f32.mrf.mxu0
  %v473 = vadd.f32 0.0, %v472
  %v474 = vpop.f32.mrf.mxu0
  %475 = vmatprep.mubr.f32.mxu0 0.0
  %476 = vmatmul.mubr.f32.gmra.mxu0 %v173
  %v477 = vpop.f32.mrf.mxu0
  %v478 = vadd.f32 0.0, %v477
  %v479 = vpop.f32.mrf.mxu0
  %480 = vmatprep.mubr.f32.mxu0 0.0
  %481 = vmatmul.mubr.f32.gmra.mxu0 %v176
  %v482 = vpop.f32.mrf.mxu0
  %v483 = vadd.f32 0.0, %v482
  %v484 = vpop.f32.mrf.mxu0
  %485 = vmatprep.mubr.f32.mxu0 0.0
  %486 = vmatmul.mubr.f32.gmra.mxu0 %v179
  %v487 = vpop.f32.mrf.mxu0
  %v488 = vadd.f32 0.0, %v487
  %v489 = vpop.f32.mrf.mxu0
  %490 = vmatprep.mubr.f32.mxu0 0.0
  %491 = vmatmul.mubr.f32.gmra.mxu0 %v182
  %v492 = vpop.f32.mrf.mxu0
  %v493 = vadd.f32 0.0, %v492
  %v494 = vpop.f32.mrf.mxu0
  %495 = vmatprep.mubr.f32.mxu0 0.0
  %496 = vmatmul.mubr.f32.gmra.mxu0 %v185
  %v497 = vpop.f32.mrf.mxu0
  %v498 = vadd.f32 0.0, %v497
  %v499 = vpop.f32.mrf.mxu0
  %500 = vmatprep.mubr.f32.mxu0 0.0
  %501 = vmatmul.mubr.f32.gmra.mxu0 %v188
  %v502 = vpop.f32.mrf.mxu0
  %v503 = vadd.f32 0.0, %v502
  %v504 = vpop.f32.mrf.mxu0
  %505 = vmatprep.mubr.f32.mxu0 0.0
  %506 = vmatmul.mubr.f32.gmra.mxu0 %v191
  %v507 = vpop.f32.mrf.mxu0
  %v508 = vadd.f32 0.0, %v507
  %v509 = vpop.f32.mrf.mxu0
  %510 = vmatprep.mubr.f32.mxu0 0.0
  %511 = vmatmul.mubr.f32.gmra.mxu0 %v194
  %v512 = vpop.f32.mrf.mxu0
  %v513 = vadd.f32 0.0, %v512
  %v514 = vpop.f32.mrf.mxu0
  %515 = vmatprep.mubr.f32.mxu0 0.0
  %516 = vmatmul.mubr.f32.gmra.mxu0 %v197
  %v517 = vpop.f32.mrf.mxu0
  %v518 = vadd.f32 0.0, %v517
  %v519 = vpop.f32.mrf.mxu0
  %520 = vmatprep.mubr.f32.mxu0 0.0
  %521 = vmatmul.mubr.f32.gmra.mxu0 %v200
  %v522 = vpop.f32.mrf.mxu0
  %v523 = vadd.f32 0.0, %v522
  %v524 = vpop.f32.mrf.mxu0
  %525 = vmatprep.mubr.f32.mxu0 0.0
  %526 = vmatmul.mubr.f32.gmra.mxu0 %v203
  %v527 = vpop.f32.mrf.mxu0
  %v528 = vadd.f32 0.0, %v527
  %v529 = vpop.f32.mrf.mxu0
  %530 = vmatprep.mubr.f32.mxu0 0.0
  %531 = vmatmul.mubr.f32.gmra.mxu0 %v206
  %v532 = vpop.f32.mrf.mxu0
  %v533 = vadd.f32 0.0, %v532
  %v534 = vpop.f32.mrf.mxu0
  %535 = vmatprep.mubr.f32.mxu0 0.0
  %536 = vmatmul.mubr.f32.gmra.mxu0 %v209
  %v537 = vpop.f32.mrf.mxu0
  %v538 = vadd.f32 0.0, %v537
  %v539 = vpop.f32.mrf.mxu0
  %540 = vmatprep.mubr.f32.mxu0 0.0
  %541 = vmatmul.mubr.f32.gmra.mxu0 %v212
  %v542 = vpop.f32.mrf.mxu0
  %v543 = vadd.f32 0.0, %v542
  %v544 = vpop.f32.mrf.mxu0
  %545 = vmatprep.mubr.f32.mxu0 0.0
  %546 = vmatmul.mubr.f32.gmra.mxu0 %v215
  %v547 = vpop.f32.mrf.mxu0
  %v548 = vadd.f32 0.0, %v547
  %v549 = vpop.f32.mrf.mxu0
  %550 = vmatprep.mubr.f32.mxu0 0.0
  %551 = vmatmul.mubr.f32.gmra.mxu0 %v218
  %v552 = vpop.f32.mrf.mxu0
  %v553 = vadd.f32 0.0, %v552
  %v554 = vpop.f32.mrf.mxu0
  %555 = vmatprep.mubr.f32.mxu0 0.0
  %556 = vmatmul.mubr.f32.gmra.mxu0 %v221
  %v557 = vpop.f32.mrf.mxu0
  %v558 = vadd.f32 0.0, %v557
  %v559 = vpop.f32.mrf.mxu0
  %560 = vmatprep.mubr.f32.mxu0 0.0
  %561 = vmatmul.mubr.f32.gmra.mxu0 %v224
  %v562 = vpop.f32.mrf.mxu0
  %v563 = vadd.f32 0.0, %v562
  %v564 = vpop.f32.mrf.mxu0
  %565 = vmatprep.mubr.f32.mxu0 0.0
  %566 = vmatmul.mubr.f32.gmra.mxu0 %v227
  %v567 = vpop.f32.mrf.mxu0
  %v568 = vadd.f32 0.0, %v567
  %v569 = vpop.f32.mrf.mxu0
  %570 = vmatprep.mubr.f32.mxu0 0.0
  %571 = vmatmul.mubr.f32.gmra.mxu0 %v230
  %v572 = vpop.f32.mrf.mxu0
  %v573 = vadd.f32 0.0, %v572
  %v574 = vpop.f32.mrf.mxu0
  %575 = vmatprep.mubr.f32.mxu0 0.0
  %576 = vmatmul.mubr.f32.gmra.mxu0 %v233
  %v577 = vpop.f32.mrf.mxu0
  %v578 = vadd.f32 0.0, %v577
  %v579 = vpop.f32.mrf.mxu0
  %580 = vmatprep.mubr.f32.mxu0 0.0
  %581 = vmatmul.mubr.f32.gmra.mxu0 %v236
  %v582 = vpop.f32.mrf.mxu0
  %v583 = vadd.f32 0.0, %v582
  %v584 = vpop.f32.mrf.mxu0
  %585 = vmatprep.mubr.f32.mxu0 0.0
  %586 = vmatmul.mubr.f32.gmra.mxu0 %v239
  %v587 = vpop.f32.mrf.mxu0
  %v588 = vadd.f32 0.0, %v587
  %v589 = vpop.f32.mrf.mxu0
  %590 = vmatprep.mubr.f32.mxu0 0.0
  %591 = vmatmul.mubr.f32.gmra.mxu0 %v242
  %v592 = vpop.f32.mrf.mxu0
  %v593 = vadd.f32 0.0, %v592
  %v594 = vpop.f32.mrf.mxu0
  %595 = vmatprep.mubr.f32.mxu0 0.0
  %596 = vmatmul.mubr.f32.gmra.mxu0 %v245
  %v597 = vpop.f32.mrf.mxu0
  %v598 = vadd.f32 0.0, %v597
  %v599 = vpop.f32.mrf.mxu0
  %600 = vdwg.mxu0
  %s601 = scalar_lea.vmem %s0, 456
  %v602 = vld [vmem:[%s601] sm:$0xff]
  %v603 = vld [vmem:[%s601 + $0x8] sm:$0xff]
  %v604 = vld [vmem:[%s601 + $0x10] sm:$0xff]
  %v605 = vld [vmem:[%s601 + $0x18] sm:$0xff]
  %v606 = vld [vmem:[%s601 + $0x20] sm:$0xff]
  %v607 = vld [vmem:[%s601 + $0x28] sm:$0xff]
  %v608 = vld [vmem:[%s601 + $0x30] sm:$0xff]
  %v609 = vld [vmem:[%s601 + $0x38] sm:$0xff]
  %v610 = vld [vmem:[%s601 + $0x40] sm:$0xff]
  %v611 = vld [vmem:[%s601 + $0x48] sm:$0xff]
  %v612 = vld [vmem:[%s601 + $0x50] sm:$0xff]
  %v613 = vld [vmem:[%s601 + $0x58] sm:$0xff]
  %v614 = vld [vmem:[%s601 + $0x60] sm:$0xff]
  %v615 = vld [vmem:[%s601 + $0x68] sm:$0xff]
  %v616 = vld [vmem:[%s601 + $0x70] sm:$0xff]
  %v617 = vld [vmem:[%s601 + $0x78] sm:$0xff]
  %v618 = vld [vmem:[%s601 + $0x80] sm:$0xff]
  %v619 = vld [vmem:[%s601 + $0x88] sm:$0xff]
  %v620 = vld [vmem:[%s601 + $0x90] sm:$0xff]
  %v621 = vld [vmem:[%s601 + $0x98] sm:$0xff]
  %v622 = vld [vmem:[%s601 + $0xa0] sm:$0xff]
  %v623 = vld [vmem:[%s601 + $0xa8] sm:$0xff]
  %v624 = vld [vmem:[%s601 + $0xb0] sm:$0xff]
  %v625 = vld [vmem:[%s601 + $0xb8] sm:$0xff]
  %v626 = vld [vmem:[%s601 + $0xc0] sm:$0xff]
  %v627 = vld [vmem:[%s601 + $0xc8] sm:$0xff]
  %v628 = vld [vmem:[%s601 + $0xd0] sm:$0xff]
  %v629 = vld [vmem:[%s601 + $0xd8] sm:$0xff]
  %v630 = vld [vmem:[%s601 + $0xe0] sm:$0xff]
  %v631 = vld [vmem:[%s601 + $0xe8] sm:$0xff]
  %v632 = vld [vmem:[%s601 + $0xf0] sm:$0xff]
  %v633 = vld [vmem:[%s601 + $0xf8] sm:$0xff]
  %v634 = vld [vmem:[%s601 + $0x100] sm:$0xff]
  %v635 = vld [vmem:[%s601 + $0x108] sm:$0xff]
  %v636 = vld [vmem:[%s601 + $0x110] sm:$0xff]
  %v637 = vld [vmem:[%s601 + $0x118] sm:$0xff]
  %v638 = vld [vmem:[%s601 + $0x120] sm:$0xff]
  %v639 = vld [vmem:[%s601 + $0x128] sm:$0xff]
  %v640 = vld [vmem:[%s601 + $0x130] sm:$0xff]
  %v641 = vld [vmem:[%s601 + $0x138] sm:$0xff]
  %v642 = vld [vmem:[%s601 + $0x140] sm:$0xff]
  %v643 = vld [vmem:[%s601 + $0x148] sm:$0xff]
  %v644 = vld [vmem:[%s601 + $0x150] sm:$0xff]
  %v645 = vld [vmem:[%s601 + $0x158] sm:$0xff]
  %v646 = vld [vmem:[%s601 + $0x160] sm:$0xff]
  %v647 = vld [vmem:[%s601 + $0x168] sm:$0xff]
  %v648 = vld [vmem:[%s601 + $0x170] sm:$0xff]
  %v649 = vld [vmem:[%s601 + $0x178] sm:$0xff]
  %v650 = vld [vmem:[%s601 + $0x180] sm:$0xff]
  %v651 = vld [vmem:[%s601 + $0x188] sm:$0xff]
  %v652 = vld [vmem:[%s601 + $0x190] sm:$0xff]
  %v653 = vld [vmem:[%s601 + $0x198] sm:$0xff]
  %v654 = vld [vmem:[%s601 + $0x1a0] sm:$0xff]
  %v655 = vld [vmem:[%s601 + $0x1a8] sm:$0xff]
  %v656 = vld [vmem:[%s601 + $0x1b0] sm:$0xff]
  %v657 = vld [vmem:[%s601 + $0x1b8] sm:$0xff]
  %v658 = vld [vmem:[%s601 + $0x1c0] sm:$0x3]
  %v660 = vsel %vm75, %v602, 0
  %v663 = vsel %vm75, %v603, 0
  %v666 = vsel %vm75, %v604, 0
  %v669 = vsel %vm75, %v605, 0
  %v672 = vsel %vm75, %v606, 0
  %v675 = vsel %vm75, %v607, 0
  %v678 = vsel %vm75, %v608, 0
  %v681 = vsel %vm75, %v609, 0
  %v684 = vsel %vm75, %v610, 0
  %v687 = vsel %vm75, %v611, 0
  %v690 = vsel %vm75, %v612, 0
  %v693 = vsel %vm75, %v613, 0
  %v696 = vsel %vm75, %v614, 0
  %v699 = vsel %vm75, %v615, 0
  %v702 = vsel %vm75, %v616, 0
  %v705 = vsel %vm75, %v617, 0
  %v708 = vsel %vm75, %v618, 0
  %v711 = vsel %vm75, %v619, 0
  %v714 = vsel %vm75, %v620, 0
  %v717 = vsel %vm75, %v621, 0
  %v720 = vsel %vm75, %v622, 0
  %v723 = vsel %vm75, %v623, 0
  %v726 = vsel %vm75, %v624, 0
  %v729 = vsel %vm75, %v625, 0
  %v732 = vsel %vm75, %v626, 0
  %v735 = vsel %vm75, %v627, 0
  %v738 = vsel %vm75, %v628, 0
  %v741 = vsel %vm75, %v629, 0
  %v744 = vsel %vm75, %v630, 0
  %v747 = vsel %vm75, %v631, 0
  %v750 = vsel %vm75, %v632, 0
  %v753 = vsel %vm75, %v633, 0
  %v756 = vsel %vm75, %v634, 0
  %v759 = vsel %vm75, %v635, 0
  %v762 = vsel %vm75, %v636, 0
  %v765 = vsel %vm75, %v637, 0
  %v768 = vsel %vm75, %v638, 0
  %v771 = vsel %vm75, %v639, 0
  %v774 = vsel %vm75, %v640, 0
  %v777 = vsel %vm75, %v641, 0
  %v780 = vsel %vm75, %v642, 0
  %v783 = vsel %vm75, %v643, 0
  %v786 = vsel %vm75, %v644, 0
  %v789 = vsel %vm75, %v645, 0
  %v792 = vsel %vm75, %v646, 0
  %v795 = vsel %vm75, %v647, 0
  %v798 = vsel %vm75, %v648, 0
  %v801 = vsel %vm75, %v649, 0
  %v804 = vsel %vm75, %v650, 0
  %v807 = vsel %vm75, %v651, 0
  %v810 = vsel %vm75, %v652, 0
  %v813 = vsel %vm75, %v653, 0
  %v816 = vsel %vm75, %v654, 0
  %v819 = vsel %vm75, %v655, 0
  %v822 = vsel %vm75, %v656, 0
  %v825 = vsel %vm75, %v657, 0
  %v828 = vsel %vm75, %v658, 0
  %830 = vmatprep.subr.mxu0 0.0
  %831 = vmatpush1.msra.mxu0 0.0
  %832 = vmatprep.subr.mxu0 0.0
  %833 = vmatpush1.msra.mxu0 0.0
  %834 = vmatprep.subr.mxu0 0.0
  %835 = vmatpush1.msra.mxu0 0.0
  %836 = vmatprep.subr.mxu0 0.0
  %837 = vmatpush1.msra.mxu0 0.0
  %838 = vmatprep.subr.mxu0 0.0
  %839 = vmatpush1.msra.mxu0 0.0
  %840 = vmatprep.subr.mxu0 0.0
  %841 = vmatpush1.msra.mxu0 0.0
  %842 = vmatprep.subr.mxu0 0.0
  %843 = vmatpush1.msra.mxu0 0.0
  %844 = vmatprep.subr.mxu0 0.0
  %845 = vmatpush1.msra.mxu0 0.0
  %846 = vmatprep.subr.mxu0 0.0
  %847 = vmatpush1.msra.mxu0 0.0
  %848 = vmatprep.subr.mxu0 0.0
  %849 = vmatpush1.msra.mxu0 0.0
  %850 = vmatprep.subr.mxu0 0.0
  %851 = vmatpush1.msra.mxu0 0.0
  %852 = vmatprep.subr.mxu0 0.0
  %853 = vmatpush1.msra.mxu0 0.0
  %854 = vmatprep.subr.mxu0 0.0
  %855 = vmatpush1.msra.mxu0 %v249
  %856 = vmatprep.subr.mxu0 0.0
  %857 = vmatpush1.msra.mxu0 %v73
  %858 = vmatprep.subr.mxu0 0.0
  %859 = vmatpush1.msra.mxu0 %v72
  %860 = vmatprep.subr.mxu0 0.0
  %861 = vmatpush1.msra.mxu0 %v71
  %862 = vmatprep.subr.mxu0 0.0
  %863 = vmatpush2.msra.mxu0 0.0
  %864 = vmatprep.subr.mxu0 0.0
  %865 = vmatpush2.msra.mxu0 0.0
  %866 = vmatprep.subr.mxu0 0.0
  %867 = vmatpush2.msra.mxu0 0.0
  %868 = vmatprep.subr.mxu0 0.0
  %869 = vmatpush2.msra.mxu0 0.0
  %870 = vmatprep.subr.mxu0 0.0
  %871 = vmatpush2.msra.mxu0 0.0
  %872 = vmatprep.subr.mxu0 0.0
  %873 = vmatpush2.msra.mxu0 0.0
  %874 = vmatprep.subr.mxu0 0.0
  %875 = vmatpush2.msra.mxu0 0.0
  %876 = vmatprep.subr.mxu0 0.0
  %877 = vmatpush2.msra.mxu0 0.0
  %878 = vmatprep.subr.mxu0 0.0
  %879 = vmatpush2.msra.mxu0 0.0
  %880 = vmatprep.subr.mxu0 0.0
  %881 = vmatpush2.msra.mxu0 0.0
  %882 = vmatprep.subr.mxu0 0.0
  %883 = vmatpush2.msra.mxu0 0.0
  %884 = vmatprep.subr.mxu0 0.0
  %885 = vmatpush2.msra.mxu0 0.0
  %886 = vmatprep.subr.mxu0 0.0
  %887 = vmatpush2.msra.mxu0 0.0
  %888 = vmatprep.subr.mxu0 0.0
  %889 = vmatpush2.msra.mxu0 0.0
  %890 = vmatprep.subr.mxu0 0.0
  %891 = vmatpush2.msra.mxu0 0.0
  %892 = vmatprep.subr.mxu0 0.0
  %893 = vmatpush2.msra.mxu0 0.0
  %894 = vmatprep.mubr.f32.mxu0 0.0
  %895 = vmatmul.mubr.f32.gmra.mxu0 %v660
  %v896 = vpop.f32.mrf.mxu0
  %v897 = vadd.f32 0.0, %v896
  %v898 = vpop.f32.mrf.mxu0
  %899 = vmatprep.mubr.f32.mxu0 0.0
  %900 = vmatmul.mubr.f32.gmra.mxu0 %v663
  %v901 = vpop.f32.mrf.mxu0
  %v902 = vadd.f32 0.0, %v901
  %v903 = vpop.f32.mrf.mxu0
  %904 = vmatprep.mubr.f32.mxu0 0.0
  %905 = vmatmul.mubr.f32.gmra.mxu0 %v666
  %v906 = vpop.f32.mrf.mxu0
  %v907 = vadd.f32 0.0, %v906
  %v908 = vpop.f32.mrf.mxu0
  %909 = vmatprep.mubr.f32.mxu0 0.0
  %910 = vmatmul.mubr.f32.gmra.mxu0 %v669
  %v911 = vpop.f32.mrf.mxu0
  %v912 = vadd.f32 0.0, %v911
  %v913 = vpop.f32.mrf.mxu0
  %914 = vmatprep.mubr.f32.mxu0 0.0
  %915 = vmatmul.mubr.f32.gmra.mxu0 %v672
  %v916 = vpop.f32.mrf.mxu0
  %v917 = vadd.f32 0.0, %v916
  %v918 = vpop.f32.mrf.mxu0
  %919 = vmatprep.mubr.f32.mxu0 0.0
  %920 = vmatmul.mubr.f32.gmra.mxu0 %v675
  %v921 = vpop.f32.mrf.mxu0
  %v922 = vadd.f32 0.0, %v921
  %v923 = vpop.f32.mrf.mxu0
  %924 = vmatprep.mubr.f32.mxu0 0.0
  %925 = vmatmul.mubr.f32.gmra.mxu0 %v678
  %v926 = vpop.f32.mrf.mxu0
  %v927 = vadd.f32 0.0, %v926
  %v928 = vpop.f32.mrf.mxu0
  %929 = vmatprep.mubr.f32.mxu0 0.0
  %930 = vmatmul.mubr.f32.gmra.mxu0 %v681
  %v931 = vpop.f32.mrf.mxu0
  %v932 = vadd.f32 0.0, %v931
  %v933 = vpop.f32.mrf.mxu0
  %934 = vmatprep.mubr.f32.mxu0 0.0
  %935 = vmatmul.mubr.f32.gmra.mxu0 %v684
  %v936 = vpop.f32.mrf.mxu0
  %v937 = vadd.f32 0.0, %v936
  %v938 = vpop.f32.mrf.mxu0
  %939 = vmatprep.mubr.f32.mxu0 0.0
  %940 = vmatmul.mubr.f32.gmra.mxu0 %v687
  %v941 = vpop.f32.mrf.mxu0
  %v942 = vadd.f32 0.0, %v941
  %v943 = vpop.f32.mrf.mxu0
  %944 = vmatprep.mubr.f32.mxu0 0.0
  %945 = vmatmul.mubr.f32.gmra.mxu0 %v690
  %v946 = vpop.f32.mrf.mxu0
  %v947 = vadd.f32 0.0, %v946
  %v948 = vpop.f32.mrf.mxu0
  %949 = vmatprep.mubr.f32.mxu0 0.0
  %950 = vmatmul.mubr.f32.gmra.mxu0 %v693
  %v951 = vpop.f32.mrf.mxu0
  %v952 = vadd.f32 0.0, %v951
  %v953 = vpop.f32.mrf.mxu0
  %954 = vmatprep.mubr.f32.mxu0 0.0
  %955 = vmatmul.mubr.f32.gmra.mxu0 %v696
  %v956 = vpop.f32.mrf.mxu0
  %v957 = vadd.f32 0.0, %v956
  %v958 = vpop.f32.mrf.mxu0
  %959 = vmatprep.mubr.f32.mxu0 0.0
  %960 = vmatmul.mubr.f32.gmra.mxu0 %v699
  %v961 = vpop.f32.mrf.mxu0
  %v962 = vadd.f32 0.0, %v961
  %v963 = vpop.f32.mrf.mxu0
  %964 = vmatprep.mubr.f32.mxu0 0.0
  %965 = vmatmul.mubr.f32.gmra.mxu0 %v702
  %v966 = vpop.f32.mrf.mxu0
  %v967 = vadd.f32 0.0, %v966
  %v968 = vpop.f32.mrf.mxu0
  %969 = vmatprep.mubr.f32.mxu0 0.0
  %970 = vmatmul.mubr.f32.gmra.mxu0 %v705
  %v971 = vpop.f32.mrf.mxu0
  %v972 = vadd.f32 0.0, %v971
  %v973 = vpop.f32.mrf.mxu0
  %974 = vmatprep.mubr.f32.mxu0 0.0
  %975 = vmatmul.mubr.f32.gmra.mxu0 %v708
  %v976 = vpop.f32.mrf.mxu0
  %v977 = vadd.f32 0.0, %v976
  %v978 = vpop.f32.mrf.mxu0
  %979 = vmatprep.mubr.f32.mxu0 0.0
  %980 = vmatmul.mubr.f32.gmra.mxu0 %v711
  %v981 = vpop.f32.mrf.mxu0
  %v982 = vadd.f32 0.0, %v981
  %v983 = vpop.f32.mrf.mxu0
  %984 = vmatprep.mubr.f32.mxu0 0.0
  %985 = vmatmul.mubr.f32.gmra.mxu0 %v714
  %v986 = vpop.f32.mrf.mxu0
  %v987 = vadd.f32 0.0, %v986
  %v988 = vpop.f32.mrf.mxu0
  %989 = vmatprep.mubr.f32.mxu0 0.0
  %990 = vmatmul.mubr.f32.gmra.mxu0 %v717
  %v991 = vpop.f32.mrf.mxu0
  %v992 = vadd.f32 0.0, %v991
  %v993 = vpop.f32.mrf.mxu0
  %994 = vmatprep.mubr.f32.mxu0 0.0
  %995 = vmatmul.mubr.f32.gmra.mxu0 %v720
  %v996 = vpop.f32.mrf.mxu0
  %v997 = vadd.f32 0.0, %v996
  %v998 = vpop.f32.mrf.mxu0
  %999 = vmatprep.mubr.f32.mxu0 0.0
  %1000 = vmatmul.mubr.f32.gmra.mxu0 %v723
  %v1001 = vpop.f32.mrf.mxu0
  %v1002 = vadd.f32 0.0, %v1001
  %v1003 = vpop.f32.mrf.mxu0
  %1004 = vmatprep.mubr.f32.mxu0 0.0
  %1005 = vmatmul.mubr.f32.gmra.mxu0 %v726
  %v1006 = vpop.f32.mrf.mxu0
  %v1007 = vadd.f32 0.0, %v1006
  %v1008 = vpop.f32.mrf.mxu0
  %1009 = vmatprep.mubr.f32.mxu0 0.0
  %1010 = vmatmul.mubr.f32.gmra.mxu0 %v729
  %v1011 = vpop.f32.mrf.mxu0
  %v1012 = vadd.f32 0.0, %v1011
  %v1013 = vpop.f32.mrf.mxu0
  %1014 = vmatprep.mubr.f32.mxu0 0.0
  %1015 = vmatmul.mubr.f32.gmra.mxu0 %v732
  %v1016 = vpop.f32.mrf.mxu0
  %v1017 = vadd.f32 0.0, %v1016
  %v1018 = vpop.f32.mrf.mxu0
  %1019 = vmatprep.mubr.f32.mxu0 0.0
  %1020 = vmatmul.mubr.f32.gmra.mxu0 %v735
  %v1021 = vpop.f32.mrf.mxu0
  %v1022 = vadd.f32 0.0, %v1021
  %v1023 = vpop.f32.mrf.mxu0
  %1024 = vmatprep.mubr.f32.mxu0 0.0
  %1025 = vmatmul.mubr.f32.gmra.mxu0 %v738
  %v1026 = vpop.f32.mrf.mxu0
  %v1027 = vadd.f32 0.0, %v1026
  %v1028 = vpop.f32.mrf.mxu0
  %1029 = vmatprep.mubr.f32.mxu0 0.0
  %1030 = vmatmul.mubr.f32.gmra.mxu0 %v741
  %v1031 = vpop.f32.mrf.mxu0
  %v1032 = vadd.f32 0.0, %v1031
  %v1033 = vpop.f32.mrf.mxu0
  %1034 = vmatprep.mubr.f32.mxu0 0.0
  %1035 = vmatmul.mubr.f32.gmra.mxu0 %v744
  %v1036 = vpop.f32.mrf.mxu0
  %v1037 = vadd.f32 0.0, %v1036
  %v1038 = vpop.f32.mrf.mxu0
  %1039 = vmatprep.mubr.f32.mxu0 0.0
  %1040 = vmatmul.mubr.f32.gmra.mxu0 %v747
  %v1041 = vpop.f32.mrf.mxu0
  %v1042 = vadd.f32 0.0, %v1041
  %v1043 = vpop.f32.mrf.mxu0
  %1044 = vmatprep.mubr.f32.mxu0 0.0
  %1045 = vmatmul.mubr.f32.gmra.mxu0 %v750
  %v1046 = vpop.f32.mrf.mxu0
  %v1047 = vadd.f32 0.0, %v1046
  %v1048 = vpop.f32.mrf.mxu0
  %1049 = vmatprep.mubr.f32.mxu0 0.0
  %1050 = vmatmul.mubr.f32.gmra.mxu0 %v753
  %v1051 = vpop.f32.mrf.mxu0
  %v1052 = vadd.f32 0.0, %v1051
  %v1053 = vpop.f32.mrf.mxu0
  %1054 = vmatprep.mubr.f32.mxu0 0.0
  %1055 = vmatmul.mubr.f32.gmra.mxu0 %v756
  %v1056 = vpop.f32.mrf.mxu0
  %v1057 = vadd.f32 0.0, %v1056
  %v1058 = vpop.f32.mrf.mxu0
  %1059 = vmatprep.mubr.f32.mxu0 0.0
  %1060 = vmatmul.mubr.f32.gmra.mxu0 %v759
  %v1061 = vpop.f32.mrf.mxu0
  %v1062 = vadd.f32 0.0, %v1061
  %v1063 = vpop.f32.mrf.mxu0
  %1064 = vmatprep.mubr.f32.mxu0 0.0
  %1065 = vmatmul.mubr.f32.gmra.mxu0 %v762
  %v1066 = vpop.f32.mrf.mxu0
  %v1067 = vadd.f32 0.0, %v1066
  %v1068 = vpop.f32.mrf.mxu0
  %1069 = vmatprep.mubr.f32.mxu0 0.0
  %1070 = vmatmul.mubr.f32.gmra.mxu0 %v765
  %v1071 = vpop.f32.mrf.mxu0
  %v1072 = vadd.f32 0.0, %v1071
  %v1073 = vpop.f32.mrf.mxu0
  %1074 = vmatprep.mubr.f32.mxu0 0.0
  %1075 = vmatmul.mubr.f32.gmra.mxu0 %v768
  %v1076 = vpop.f32.mrf.mxu0
  %v1077 = vadd.f32 0.0, %v1076
  %v1078 = vpop.f32.mrf.mxu0
  %1079 = vmatprep.mubr.f32.mxu0 0.0
  %1080 = vmatmul.mubr.f32.gmra.mxu0 %v771
  %v1081 = vpop.f32.mrf.mxu0
  %v1082 = vadd.f32 0.0, %v1081
  %v1083 = vpop.f32.mrf.mxu0
  %1084 = vmatprep.mubr.f32.mxu0 0.0
  %1085 = vmatmul.mubr.f32.gmra.mxu0 %v774
  %v1086 = vpop.f32.mrf.mxu0
  %v1087 = vadd.f32 0.0, %v1086
  %v1088 = vpop.f32.mrf.mxu0
  %1089 = vmatprep.mubr.f32.mxu0 0.0
  %1090 = vmatmul.mubr.f32.gmra.mxu0 %v777
  %v1091 = vpop.f32.mrf.mxu0
  %v1092 = vadd.f32 0.0, %v1091
  %v1093 = vpop.f32.mrf.mxu0
  %1094 = vmatprep.mubr.f32.mxu0 0.0
  %1095 = vmatmul.mubr.f32.gmra.mxu0 %v780
  %v1096 = vpop.f32.mrf.mxu0
  %v1097 = vadd.f32 0.0, %v1096
  %v1098 = vpop.f32.mrf.mxu0
  %1099 = vmatprep.mubr.f32.mxu0 0.0
  %1100 = vmatmul.mubr.f32.gmra.mxu0 %v783
  %v1101 = vpop.f32.mrf.mxu0
  %v1102 = vadd.f32 0.0, %v1101
  %v1103 = vpop.f32.mrf.mxu0
  %1104 = vmatprep.mubr.f32.mxu0 0.0
  %1105 = vmatmul.mubr.f32.gmra.mxu0 %v786
  %v1106 = vpop.f32.mrf.mxu0
  %v1107 = vadd.f32 0.0, %v1106
  %v1108 = vpop.f32.mrf.mxu0
  %1109 = vmatprep.mubr.f32.mxu0 0.0
  %1110 = vmatmul.mubr.f32.gmra.mxu0 %v789
  %v1111 = vpop.f32.mrf.mxu0
  %v1112 = vadd.f32 0.0, %v1111
  %v1113 = vpop.f32.mrf.mxu0
  %1114 = vmatprep.mubr.f32.mxu0 0.0
  %1115 = vmatmul.mubr.f32.gmra.mxu0 %v792
  %v1116 = vpop.f32.mrf.mxu0
  %v1117 = vadd.f32 0.0, %v1116
  %v1118 = vpop.f32.mrf.mxu0
  %1119 = vmatprep.mubr.f32.mxu0 0.0
  %1120 = vmatmul.mubr.f32.gmra.mxu0 %v795
  %v1121 = vpop.f32.mrf.mxu0
  %v1122 = vadd.f32 0.0, %v1121
  %v1123 = vpop.f32.mrf.mxu0
  %1124 = vmatprep.mubr.f32.mxu0 0.0
  %1125 = vmatmul.mubr.f32.gmra.mxu0 %v798
  %v1126 = vpop.f32.mrf.mxu0
  %v1127 = vadd.f32 0.0, %v1126
  %v1128 = vpop.f32.mrf.mxu0
  %1129 = vmatprep.mubr.f32.mxu0 0.0
  %1130 = vmatmul.mubr.f32.gmra.mxu0 %v801
  %v1131 = vpop.f32.mrf.mxu0
  %v1132 = vadd.f32 0.0, %v1131
  %v1133 = vpop.f32.mrf.mxu0
  %1134 = vmatprep.mubr.f32.mxu0 0.0
  %1135 = vmatmul.mubr.f32.gmra.mxu0 %v804
  %v1136 = vpop.f32.mrf.mxu0
  %v1137 = vadd.f32 0.0, %v1136
  %v1138 = vpop.f32.mrf.mxu0
  %1139 = vmatprep.mubr.f32.mxu0 0.0
  %1140 = vmatmul.mubr.f32.gmra.mxu0 %v807
  %v1141 = vpop.f32.mrf.mxu0
  %v1142 = vadd.f32 0.0, %v1141
  %v1143 = vpop.f32.mrf.mxu0
  %1144 = vmatprep.mubr.f32.mxu0 0.0
  %1145 = vmatmul.mubr.f32.gmra.mxu0 %v810
  %v1146 = vpop.f32.mrf.mxu0
  %v1147 = vadd.f32 0.0, %v1146
  %v1148 = vpop.f32.mrf.mxu0
  %1149 = vmatprep.mubr.f32.mxu0 0.0
  %1150 = vmatmul.mubr.f32.gmra.mxu0 %v813
  %v1151 = vpop.f32.mrf.mxu0
  %v1152 = vadd.f32 0.0, %v1151
  %v1153 = vpop.f32.mrf.mxu0
  %1154 = vmatprep.mubr.f32.mxu0 0.0
  %1155 = vmatmul.mubr.f32.gmra.mxu0 %v816
  %v1156 = vpop.f32.mrf.mxu0
  %v1157 = vadd.f32 0.0, %v1156
  %v1158 = vpop.f32.mrf.mxu0
  %1159 = vmatprep.mubr.f32.mxu0 0.0
  %1160 = vmatmul.mubr.f32.gmra.mxu0 %v819
  %v1161 = vpop.f32.mrf.mxu0
  %v1162 = vadd.f32 0.0, %v1161
  %v1163 = vpop.f32.mrf.mxu0
  %1164 = vmatprep.mubr.f32.mxu0 0.0
  %1165 = vmatmul.mubr.f32.gmra.mxu0 %v822
  %v1166 = vpop.f32.mrf.mxu0
  %v1167 = vadd.f32 0.0, %v1166
  %v1168 = vpop.f32.mrf.mxu0
  %1169 = vmatprep.mubr.f32.mxu0 0.0
  %1170 = vmatmul.mubr.f32.gmra.mxu0 %v825
  %v1171 = vpop.f32.mrf.mxu0
  %v1172 = vadd.f32 0.0, %v1171
  %v1173 = vpop.f32.mrf.mxu0
  %1174 = vmatprep.mubr.f32.mxu0 0.0
  %1175 = vmatmul.mubr.f32.gmra.mxu0 %v828
  %v1176 = vpop.f32.mrf.mxu0
  %v1177 = vadd.f32 0.0, %v1176
  %v1178 = vpop.f32.mrf.mxu0
  %1179 = vdwg.mxu0
  %v1180 = vmax.f32 %v318, %v897
  %v1181 = vmax.f32 %v323, %v902
  %v1182 = vmax.f32 %v328, %v907
  %v1183 = vmax.f32 %v333, %v912
  %v1184 = vmax.f32 %v338, %v917
  %v1185 = vmax.f32 %v343, %v922
  %v1186 = vmax.f32 %v348, %v927
  %v1187 = vmax.f32 %v353, %v932
  %v1188 = vmax.f32 %v358, %v937
  %v1189 = vmax.f32 %v363, %v942
  %v1190 = vmax.f32 %v368, %v947
  %v1191 = vmax.f32 %v373, %v952
  %v1192 = vmax.f32 %v378, %v957
  %v1193 = vmax.f32 %v383, %v962
  %v1194 = vmax.f32 %v388, %v967
  %v1195 = vmax.f32 %v393, %v972
  %v1196 = vmax.f32 %v398, %v977
  %v1197 = vmax.f32 %v403, %v982
  %v1198 = vmax.f32 %v408, %v987
  %v1199 = vmax.f32 %v413, %v992
  %v1200 = vmax.f32 %v418, %v997
  %v1201 = vmax.f32 %v423, %v1002
  %v1202 = vmax.f32 %v428, %v1007
  %v1203 = vmax.f32 %v433, %v1012
  %v1204 = vmax.f32 %v438, %v1017
  %v1205 = vmax.f32 %v443, %v1022
  %v1206 = vmax.f32 %v448, %v1027
  %v1207 = vmax.f32 %v453, %v1032
  %v1208 = vmax.f32 %v458, %v1037
  %v1209 = vmax.f32 %v463, %v1042
  %v1210 = vmax.f32 %v468, %v1047
  %v1211 = vmax.f32 %v473, %v1052
  %v1212 = vmax.f32 %v478, %v1057
  %v1213 = vmax.f32 %v483, %v1062
  %v1214 = vmax.f32 %v488, %v1067
  %v1215 = vmax.f32 %v493, %v1072
  %v1216 = vmax.f32 %v498, %v1077
  %v1217 = vmax.f32 %v503, %v1082
  %v1218 = vmax.f32 %v508, %v1087
  %v1219 = vmax.f32 %v513, %v1092
  %v1220 = vmax.f32 %v518, %v1097
  %v1221 = vmax.f32 %v523, %v1102
  %v1222 = vmax.f32 %v528, %v1107
  %v1223 = vmax.f32 %v533, %v1112
  %v1224 = vmax.f32 %v538, %v1117
  %v1225 = vmax.f32 %v543, %v1122
  %v1226 = vmax.f32 %v548, %v1127
  %v1227 = vmax.f32 %v553, %v1132
  %v1228 = vmax.f32 %v558, %v1137
  %v1229 = vmax.f32 %v563, %v1142
  %v1230 = vmax.f32 %v568, %v1147
  %v1231 = vmax.f32 %v573, %v1152
  %v1232 = vmax.f32 %v578, %v1157
  %v1233 = vmax.f32 %v583, %v1162
  %v1234 = vmax.f32 %v588, %v1167
  %v1235 = vmax.f32 %v593, %v1172
  %v1236 = vmax.f32 %v598, %v1177
  %s1237 = scalar_lea.vmem %s0, 912
  %v1238 = vld [vmem:[%s1237] sm:$0xff]
  %v1239 = vld [vmem:[%s1237 + $0x8] sm:$0xff]
  %v1240 = vld [vmem:[%s1237 + $0x10] sm:$0xff]
  %v1241 = vld [vmem:[%s1237 + $0x18] sm:$0xff]
  %v1242 = vld [vmem:[%s1237 + $0x20] sm:$0xff]
  %v1243 = vld [vmem:[%s1237 + $0x28] sm:$0xff]
  %v1244 = vld [vmem:[%s1237 + $0x30] sm:$0xff]
  %v1245 = vld [vmem:[%s1237 + $0x38] sm:$0xff]
  %v1246 = vld [vmem:[%s1237 + $0x40] sm:$0xff]
  %v1247 = vld [vmem:[%s1237 + $0x48] sm:$0xff]
  %v1248 = vld [vmem:[%s1237 + $0x50] sm:$0xff]
  %v1249 = vld [vmem:[%s1237 + $0x58] sm:$0xff]
  %v1250 = vld [vmem:[%s1237 + $0x60] sm:$0xff]
  %v1251 = vld [vmem:[%s1237 + $0x68] sm:$0xff]
  %v1252 = vld [vmem:[%s1237 + $0x70] sm:$0xff]
  %v1253 = vld [vmem:[%s1237 + $0x78] sm:$0xff]
  %v1254 = vld [vmem:[%s1237 + $0x80] sm:$0xff]
  %v1255 = vld [vmem:[%s1237 + $0x88] sm:$0xff]
  %v1256 = vld [vmem:[%s1237 + $0x90] sm:$0xff]
  %v1257 = vld [vmem:[%s1237 + $0x98] sm:$0xff]
  %v1258 = vld [vmem:[%s1237 + $0xa0] sm:$0xff]
  %v1259 = vld [vmem:[%s1237 + $0xa8] sm:$0xff]
  %v1260 = vld [vmem:[%s1237 + $0xb0] sm:$0xff]
  %v1261 = vld [vmem:[%s1237 + $0xb8] sm:$0xff]
  %v1262 = vld [vmem:[%s1237 + $0xc0] sm:$0xff]
  %v1263 = vld [vmem:[%s1237 + $0xc8] sm:$0xff]
  %v1264 = vld [vmem:[%s1237 + $0xd0] sm:$0xff]
  %v1265 = vld [vmem:[%s1237 + $0xd8] sm:$0xff]
  %v1266 = vld [vmem:[%s1237 + $0xe0] sm:$0xff]
  %v1267 = vld [vmem:[%s1237 + $0xe8] sm:$0xff]
  %v1268 = vld [vmem:[%s1237 + $0xf0] sm:$0xff]
  %v1269 = vld [vmem:[%s1237 + $0xf8] sm:$0xff]
  %v1270 = vld [vmem:[%s1237 + $0x100] sm:$0xff]
  %v1271 = vld [vmem:[%s1237 + $0x108] sm:$0xff]
  %v1272 = vld [vmem:[%s1237 + $0x110] sm:$0xff]
  %v1273 = vld [vmem:[%s1237 + $0x118] sm:$0xff]
  %v1274 = vld [vmem:[%s1237 + $0x120] sm:$0xff]
  %v1275 = vld [vmem:[%s1237 + $0x128] sm:$0xff]
  %v1276 = vld [vmem:[%s1237 + $0x130] sm:$0xff]
  %v1277 = vld [vmem:[%s1237 + $0x138] sm:$0xff]
  %v1278 = vld [vmem:[%s1237 + $0x140] sm:$0xff]
  %v1279 = vld [vmem:[%s1237 + $0x148] sm:$0xff]
  %v1280 = vld [vmem:[%s1237 + $0x150] sm:$0xff]
  %v1281 = vld [vmem:[%s1237 + $0x158] sm:$0xff]
  %v1282 = vld [vmem:[%s1237 + $0x160] sm:$0xff]
  %v1283 = vld [vmem:[%s1237 + $0x168] sm:$0xff]
  %v1284 = vld [vmem:[%s1237 + $0x170] sm:$0xff]
  %v1285 = vld [vmem:[%s1237 + $0x178] sm:$0xff]
  %v1286 = vld [vmem:[%s1237 + $0x180] sm:$0xff]
  %v1287 = vld [vmem:[%s1237 + $0x188] sm:$0xff]
  %v1288 = vld [vmem:[%s1237 + $0x190] sm:$0xff]
  %v1289 = vld [vmem:[%s1237 + $0x198] sm:$0xff]
  %v1290 = vld [vmem:[%s1237 + $0x1a0] sm:$0xff]
  %v1291 = vld [vmem:[%s1237 + $0x1a8] sm:$0xff]
  %v1292 = vld [vmem:[%s1237 + $0x1b0] sm:$0xff]
  %v1293 = vld [vmem:[%s1237 + $0x1b8] sm:$0xff]
  %v1294 = vld [vmem:[%s1237 + $0x1c0] sm:$0x3]
  %v1296 = vsel %vm75, %v1238, 0
  %v1299 = vsel %vm75, %v1239, 0
  %v1302 = vsel %vm75, %v1240, 0
  %v1305 = vsel %vm75, %v1241, 0
  %v1308 = vsel %vm75, %v1242, 0
  %v1311 = vsel %vm75, %v1243, 0
  %v1314 = vsel %vm75, %v1244, 0
  %v1317 = vsel %vm75, %v1245, 0
  %v1320 = vsel %vm75, %v1246, 0
  %v1323 = vsel %vm75, %v1247, 0
  %v1326 = vsel %vm75, %v1248, 0
  %v1329 = vsel %vm75, %v1249, 0
  %v1332 = vsel %vm75, %v1250, 0
  %v1335 = vsel %vm75, %v1251, 0
  %v1338 = vsel %vm75, %v1252, 0
  %v1341 = vsel %vm75, %v1253, 0
  %v1344 = vsel %vm75, %v1254, 0
  %v1347 = vsel %vm75, %v1255, 0
  %v1350 = vsel %vm75, %v1256, 0
  %v1353 = vsel %vm75, %v1257, 0
  %v1356 = vsel %vm75, %v1258, 0
  %v1359 = vsel %vm75, %v1259, 0
  %v1362 = vsel %vm75, %v1260, 0
  %v1365 = vsel %vm75, %v1261, 0
  %v1368 = vsel %vm75, %v1262, 0
  %v1371 = vsel %vm75, %v1263, 0
  %v1374 = vsel %vm75, %v1264, 0
  %v1377 = vsel %vm75, %v1265, 0
  %v1380 = vsel %vm75, %v1266, 0
  %v1383 = vsel %vm75, %v1267, 0
  %v1386 = vsel %vm75, %v1268, 0
  %v1389 = vsel %vm75, %v1269, 0
  %v1392 = vsel %vm75, %v1270, 0
  %v1395 = vsel %vm75, %v1271, 0
  %v1398 = vsel %vm75, %v1272, 0
  %v1401 = vsel %vm75, %v1273, 0
  %v1404 = vsel %vm75, %v1274, 0
  %v1407 = vsel %vm75, %v1275, 0
  %v1410 = vsel %vm75, %v1276, 0
  %v1413 = vsel %vm75, %v1277, 0
  %v1416 = vsel %vm75, %v1278, 0
  %v1419 = vsel %vm75, %v1279, 0
  %v1422 = vsel %vm75, %v1280, 0
  %v1425 = vsel %vm75, %v1281, 0
  %v1428 = vsel %vm75, %v1282, 0
  %v1431 = vsel %vm75, %v1283, 0
  %v1434 = vsel %vm75, %v1284, 0
  %v1437 = vsel %vm75, %v1285, 0
  %v1440 = vsel %vm75, %v1286, 0
  %v1443 = vsel %vm75, %v1287, 0
  %v1446 = vsel %vm75, %v1288, 0
  %v1449 = vsel %vm75, %v1289, 0
  %v1452 = vsel %vm75, %v1290, 0
  %v1455 = vsel %vm75, %v1291, 0
  %v1458 = vsel %vm75, %v1292, 0
  %v1461 = vsel %vm75, %v1293, 0
  %v1464 = vsel %vm75, %v1294, 0
  %1466 = vmatprep.subr.mxu0 0.0
  %1467 = vmatpush1.msra.mxu0 0.0
  %1468 = vmatprep.subr.mxu0 0.0
  %1469 = vmatpush1.msra.mxu0 0.0
  %1470 = vmatprep.subr.mxu0 0.0
  %1471 = vmatpush1.msra.mxu0 0.0
  %1472 = vmatprep.subr.mxu0 0.0
  %1473 = vmatpush1.msra.mxu0 0.0
  %1474 = vmatprep.subr.mxu0 0.0
  %1475 = vmatpush1.msra.mxu0 0.0
  %1476 = vmatprep.subr.mxu0 0.0
  %1477 = vmatpush1.msra.mxu0 0.0
  %1478 = vmatprep.subr.mxu0 0.0
  %1479 = vmatpush1.msra.mxu0 0.0
  %1480 = vmatprep.subr.mxu0 0.0
  %1481 = vmatpush1.msra.mxu0 0.0
  %1482 = vmatprep.subr.mxu0 0.0
  %1483 = vmatpush1.msra.mxu0 0.0
  %1484 = vmatprep.subr.mxu0 0.0
  %1485 = vmatpush1.msra.mxu0 0.0
  %1486 = vmatprep.subr.mxu0 0.0
  %1487 = vmatpush1.msra.mxu0 0.0
  %1488 = vmatprep.subr.mxu0 0.0
  %1489 = vmatpush1.msra.mxu0 0.0
  %1490 = vmatprep.subr.mxu0 0.0
  %1491 = vmatpush1.msra.mxu0 %v249
  %1492 = vmatprep.subr.mxu0 0.0
  %1493 = vmatpush1.msra.mxu0 %v73
  %1494 = vmatprep.subr.mxu0 0.0
  %1495 = vmatpush1.msra.mxu0 %v72
  %1496 = vmatprep.subr.mxu0 0.0
  %1497 = vmatpush1.msra.mxu0 %v71
  %1498 = vmatprep.subr.mxu0 0.0
  %1499 = vmatpush2.msra.mxu0 0.0
  %1500 = vmatprep.subr.mxu0 0.0
  %1501 = vmatpush2.msra.mxu0 0.0
  %1502 = vmatprep.subr.mxu0 0.0
  %1503 = vmatpush2.msra.mxu0 0.0
  %1504 = vmatprep.subr.mxu0 0.0
  %1505 = vmatpush2.msra.mxu0 0.0
  %1506 = vmatprep.subr.mxu0 0.0
  %1507 = vmatpush2.msra.mxu0 0.0
  %1508 = vmatprep.subr.mxu0 0.0
  %1509 = vmatpush2.msra.mxu0 0.0
  %1510 = vmatprep.subr.mxu0 0.0
  %1511 = vmatpush2.msra.mxu0 0.0
  %1512 = vmatprep.subr.mxu0 0.0
  %1513 = vmatpush2.msra.mxu0 0.0
  %1514 = vmatprep.subr.mxu0 0.0
  %1515 = vmatpush2.msra.mxu0 0.0
  %1516 = vmatprep.subr.mxu0 0.0
  %1517 = vmatpush2.msra.mxu0 0.0
  %1518 = vmatprep.subr.mxu0 0.0
  %1519 = vmatpush2.msra.mxu0 0.0
  %1520 = vmatprep.subr.mxu0 0.0
  %1521 = vmatpush2.msra.mxu0 0.0
  %1522 = vmatprep.subr.mxu0 0.0
  %1523 = vmatpush2.msra.mxu0 0.0
  %1524 = vmatprep.subr.mxu0 0.0
  %1525 = vmatpush2.msra.mxu0 0.0
  %1526 = vmatprep.subr.mxu0 0.0
  %1527 = vmatpush2.msra.mxu0 0.0
  %1528 = vmatprep.subr.mxu0 0.0
  %1529 = vmatpush2.msra.mxu0 0.0
  %1530 = vmatprep.mubr.f32.mxu0 0.0
  %1531 = vmatmul.mubr.f32.gmra.mxu0 %v1296
  %v1532 = vpop.f32.mrf.mxu0
  %v1533 = vadd.f32 0.0, %v1532
  %v1534 = vpop.f32.mrf.mxu0
  %1535 = vmatprep.mubr.f32.mxu0 0.0
  %1536 = vmatmul.mubr.f32.gmra.mxu0 %v1299
  %v1537 = vpop.f32.mrf.mxu0
  %v1538 = vadd.f32 0.0, %v1537
  %v1539 = vpop.f32.mrf.mxu0
  %1540 = vmatprep.mubr.f32.mxu0 0.0
  %1541 = vmatmul.mubr.f32.gmra.mxu0 %v1302
  %v1542 = vpop.f32.mrf.mxu0
  %v1543 = vadd.f32 0.0, %v1542
  %v1544 = vpop.f32.mrf.mxu0
  %1545 = vmatprep.mubr.f32.mxu0 0.0
  %1546 = vmatmul.mubr.f32.gmra.mxu0 %v1305
  %v1547 = vpop.f32.mrf.mxu0
  %v1548 = vadd.f32 0.0, %v1547
  %v1549 = vpop.f32.mrf.mxu0
  %1550 = vmatprep.mubr.f32.mxu0 0.0
  %1551 = vmatmul.mubr.f32.gmra.mxu0 %v1308
  %v1552 = vpop.f32.mrf.mxu0
  %v1553 = vadd.f32 0.0, %v1552
  %v1554 = vpop.f32.mrf.mxu0
  %1555 = vmatprep.mubr.f32.mxu0 0.0
  %1556 = vmatmul.mubr.f32.gmra.mxu0 %v1311
  %v1557 = vpop.f32.mrf.mxu0
  %v1558 = vadd.f32 0.0, %v1557
  %v1559 = vpop.f32.mrf.mxu0
  %1560 = vmatprep.mubr.f32.mxu0 0.0
  %1561 = vmatmul.mubr.f32.gmra.mxu0 %v1314
  %v1562 = vpop.f32.mrf.mxu0
  %v1563 = vadd.f32 0.0, %v1562
  %v1564 = vpop.f32.mrf.mxu0
  %1565 = vmatprep.mubr.f32.mxu0 0.0
  %1566 = vmatmul.mubr.f32.gmra.mxu0 %v1317
  %v1567 = vpop.f32.mrf.mxu0
  %v1568 = vadd.f32 0.0, %v1567
  %v1569 = vpop.f32.mrf.mxu0
  %1570 = vmatprep.mubr.f32.mxu0 0.0
  %1571 = vmatmul.mubr.f32.gmra.mxu0 %v1320
  %v1572 = vpop.f32.mrf.mxu0
  %v1573 = vadd.f32 0.0, %v1572
  %v1574 = vpop.f32.mrf.mxu0
  %1575 = vmatprep.mubr.f32.mxu0 0.0
  %1576 = vmatmul.mubr.f32.gmra.mxu0 %v1323
  %v1577 = vpop.f32.mrf.mxu0
  %v1578 = vadd.f32 0.0, %v1577
  %v1579 = vpop.f32.mrf.mxu0
  %1580 = vmatprep.mubr.f32.mxu0 0.0
  %1581 = vmatmul.mubr.f32.gmra.mxu0 %v1326
  %v1582 = vpop.f32.mrf.mxu0
  %v1583 = vadd.f32 0.0, %v1582
  %v1584 = vpop.f32.mrf.mxu0
  %1585 = vmatprep.mubr.f32.mxu0 0.0
  %1586 = vmatmul.mubr.f32.gmra.mxu0 %v1329
  %v1587 = vpop.f32.mrf.mxu0
  %v1588 = vadd.f32 0.0, %v1587
  %v1589 = vpop.f32.mrf.mxu0
  %1590 = vmatprep.mubr.f32.mxu0 0.0
  %1591 = vmatmul.mubr.f32.gmra.mxu0 %v1332
  %v1592 = vpop.f32.mrf.mxu0
  %v1593 = vadd.f32 0.0, %v1592
  %v1594 = vpop.f32.mrf.mxu0
  %1595 = vmatprep.mubr.f32.mxu0 0.0
  %1596 = vmatmul.mubr.f32.gmra.mxu0 %v1335
  %v1597 = vpop.f32.mrf.mxu0
  %v1598 = vadd.f32 0.0, %v1597
  %v1599 = vpop.f32.mrf.mxu0
  %1600 = vmatprep.mubr.f32.mxu0 0.0
  %1601 = vmatmul.mubr.f32.gmra.mxu0 %v1338
  %v1602 = vpop.f32.mrf.mxu0
  %v1603 = vadd.f32 0.0, %v1602
  %v1604 = vpop.f32.mrf.mxu0
  %1605 = vmatprep.mubr.f32.mxu0 0.0
  %1606 = vmatmul.mubr.f32.gmra.mxu0 %v1341
  %v1607 = vpop.f32.mrf.mxu0
  %v1608 = vadd.f32 0.0, %v1607
  %v1609 = vpop.f32.mrf.mxu0
  %1610 = vmatprep.mubr.f32.mxu0 0.0
  %1611 = vmatmul.mubr.f32.gmra.mxu0 %v1344
  %v1612 = vpop.f32.mrf.mxu0
  %v1613 = vadd.f32 0.0, %v1612
  %v1614 = vpop.f32.mrf.mxu0
  %1615 = vmatprep.mubr.f32.mxu0 0.0
  %1616 = vmatmul.mubr.f32.gmra.mxu0 %v1347
  %v1617 = vpop.f32.mrf.mxu0
  %v1618 = vadd.f32 0.0, %v1617
  %v1619 = vpop.f32.mrf.mxu0
  %1620 = vmatprep.mubr.f32.mxu0 0.0
  %1621 = vmatmul.mubr.f32.gmra.mxu0 %v1350
  %v1622 = vpop.f32.mrf.mxu0
  %v1623 = vadd.f32 0.0, %v1622
  %v1624 = vpop.f32.mrf.mxu0
  %1625 = vmatprep.mubr.f32.mxu0 0.0
  %1626 = vmatmul.mubr.f32.gmra.mxu0 %v1353
  %v1627 = vpop.f32.mrf.mxu0
  %v1628 = vadd.f32 0.0, %v1627
  %v1629 = vpop.f32.mrf.mxu0
  %1630 = vmatprep.mubr.f32.mxu0 0.0
  %1631 = vmatmul.mubr.f32.gmra.mxu0 %v1356
  %v1632 = vpop.f32.mrf.mxu0
  %v1633 = vadd.f32 0.0, %v1632
  %v1634 = vpop.f32.mrf.mxu0
  %1635 = vmatprep.mubr.f32.mxu0 0.0
  %1636 = vmatmul.mubr.f32.gmra.mxu0 %v1359
  %v1637 = vpop.f32.mrf.mxu0
  %v1638 = vadd.f32 0.0, %v1637
  %v1639 = vpop.f32.mrf.mxu0
  %1640 = vmatprep.mubr.f32.mxu0 0.0
  %1641 = vmatmul.mubr.f32.gmra.mxu0 %v1362
  %v1642 = vpop.f32.mrf.mxu0
  %v1643 = vadd.f32 0.0, %v1642
  %v1644 = vpop.f32.mrf.mxu0
  %1645 = vmatprep.mubr.f32.mxu0 0.0
  %1646 = vmatmul.mubr.f32.gmra.mxu0 %v1365
  %v1647 = vpop.f32.mrf.mxu0
  %v1648 = vadd.f32 0.0, %v1647
  %v1649 = vpop.f32.mrf.mxu0
  %1650 = vmatprep.mubr.f32.mxu0 0.0
  %1651 = vmatmul.mubr.f32.gmra.mxu0 %v1368
  %v1652 = vpop.f32.mrf.mxu0
  %v1653 = vadd.f32 0.0, %v1652
  %v1654 = vpop.f32.mrf.mxu0
  %1655 = vmatprep.mubr.f32.mxu0 0.0
  %1656 = vmatmul.mubr.f32.gmra.mxu0 %v1371
  %v1657 = vpop.f32.mrf.mxu0
  %v1658 = vadd.f32 0.0, %v1657
  %v1659 = vpop.f32.mrf.mxu0
  %1660 = vmatprep.mubr.f32.mxu0 0.0
  %1661 = vmatmul.mubr.f32.gmra.mxu0 %v1374
  %v1662 = vpop.f32.mrf.mxu0
  %v1663 = vadd.f32 0.0, %v1662
  %v1664 = vpop.f32.mrf.mxu0
  %1665 = vmatprep.mubr.f32.mxu0 0.0
  %1666 = vmatmul.mubr.f32.gmra.mxu0 %v1377
  %v1667 = vpop.f32.mrf.mxu0
  %v1668 = vadd.f32 0.0, %v1667
  %v1669 = vpop.f32.mrf.mxu0
  %1670 = vmatprep.mubr.f32.mxu0 0.0
  %1671 = vmatmul.mubr.f32.gmra.mxu0 %v1380
  %v1672 = vpop.f32.mrf.mxu0
  %v1673 = vadd.f32 0.0, %v1672
  %v1674 = vpop.f32.mrf.mxu0
  %1675 = vmatprep.mubr.f32.mxu0 0.0
  %1676 = vmatmul.mubr.f32.gmra.mxu0 %v1383
  %v1677 = vpop.f32.mrf.mxu0
  %v1678 = vadd.f32 0.0, %v1677
  %v1679 = vpop.f32.mrf.mxu0
  %1680 = vmatprep.mubr.f32.mxu0 0.0
  %1681 = vmatmul.mubr.f32.gmra.mxu0 %v1386
  %v1682 = vpop.f32.mrf.mxu0
  %v1683 = vadd.f32 0.0, %v1682
  %v1684 = vpop.f32.mrf.mxu0
  %1685 = vmatprep.mubr.f32.mxu0 0.0
  %1686 = vmatmul.mubr.f32.gmra.mxu0 %v1389
  %v1687 = vpop.f32.mrf.mxu0
  %v1688 = vadd.f32 0.0, %v1687
  %v1689 = vpop.f32.mrf.mxu0
  %1690 = vmatprep.mubr.f32.mxu0 0.0
  %1691 = vmatmul.mubr.f32.gmra.mxu0 %v1392
  %v1692 = vpop.f32.mrf.mxu0
  %v1693 = vadd.f32 0.0, %v1692
  %v1694 = vpop.f32.mrf.mxu0
  %1695 = vmatprep.mubr.f32.mxu0 0.0
  %1696 = vmatmul.mubr.f32.gmra.mxu0 %v1395
  %v1697 = vpop.f32.mrf.mxu0
  %v1698 = vadd.f32 0.0, %v1697
  %v1699 = vpop.f32.mrf.mxu0
  %1700 = vmatprep.mubr.f32.mxu0 0.0
  %1701 = vmatmul.mubr.f32.gmra.mxu0 %v1398
  %v1702 = vpop.f32.mrf.mxu0
  %v1703 = vadd.f32 0.0, %v1702
  %v1704 = vpop.f32.mrf.mxu0
  %1705 = vmatprep.mubr.f32.mxu0 0.0
  %1706 = vmatmul.mubr.f32.gmra.mxu0 %v1401
  %v1707 = vpop.f32.mrf.mxu0
  %v1708 = vadd.f32 0.0, %v1707
  %v1709 = vpop.f32.mrf.mxu0
  %1710 = vmatprep.mubr.f32.mxu0 0.0
  %1711 = vmatmul.mubr.f32.gmra.mxu0 %v1404
  %v1712 = vpop.f32.mrf.mxu0
  %v1713 = vadd.f32 0.0, %v1712
  %v1714 = vpop.f32.mrf.mxu0
  %1715 = vmatprep.mubr.f32.mxu0 0.0
  %1716 = vmatmul.mubr.f32.gmra.mxu0 %v1407
  %v1717 = vpop.f32.mrf.mxu0
  %v1718 = vadd.f32 0.0, %v1717
  %v1719 = vpop.f32.mrf.mxu0
  %1720 = vmatprep.mubr.f32.mxu0 0.0
  %1721 = vmatmul.mubr.f32.gmra.mxu0 %v1410
  %v1722 = vpop.f32.mrf.mxu0
  %v1723 = vadd.f32 0.0, %v1722
  %v1724 = vpop.f32.mrf.mxu0
  %1725 = vmatprep.mubr.f32.mxu0 0.0
  %1726 = vmatmul.mubr.f32.gmra.mxu0 %v1413
  %v1727 = vpop.f32.mrf.mxu0
  %v1728 = vadd.f32 0.0, %v1727
  %v1729 = vpop.f32.mrf.mxu0
  %1730 = vmatprep.mubr.f32.mxu0 0.0
  %1731 = vmatmul.mubr.f32.gmra.mxu0 %v1416
  %v1732 = vpop.f32.mrf.mxu0
  %v1733 = vadd.f32 0.0, %v1732
  %v1734 = vpop.f32.mrf.mxu0
  %1735 = vmatprep.mubr.f32.mxu0 0.0
  %1736 = vmatmul.mubr.f32.gmra.mxu0 %v1419
  %v1737 = vpop.f32.mrf.mxu0
  %v1738 = vadd.f32 0.0, %v1737
  %v1739 = vpop.f32.mrf.mxu0
  %1740 = vmatprep.mubr.f32.mxu0 0.0
  %1741 = vmatmul.mubr.f32.gmra.mxu0 %v1422
  %v1742 = vpop.f32.mrf.mxu0
  %v1743 = vadd.f32 0.0, %v1742
  %v1744 = vpop.f32.mrf.mxu0
  %1745 = vmatprep.mubr.f32.mxu0 0.0
  %1746 = vmatmul.mubr.f32.gmra.mxu0 %v1425
  %v1747 = vpop.f32.mrf.mxu0
  %v1748 = vadd.f32 0.0, %v1747
  %v1749 = vpop.f32.mrf.mxu0
  %1750 = vmatprep.mubr.f32.mxu0 0.0
  %1751 = vmatmul.mubr.f32.gmra.mxu0 %v1428
  %v1752 = vpop.f32.mrf.mxu0
  %v1753 = vadd.f32 0.0, %v1752
  %v1754 = vpop.f32.mrf.mxu0
  %1755 = vmatprep.mubr.f32.mxu0 0.0
  %1756 = vmatmul.mubr.f32.gmra.mxu0 %v1431
  %v1757 = vpop.f32.mrf.mxu0
  %v1758 = vadd.f32 0.0, %v1757
  %v1759 = vpop.f32.mrf.mxu0
  %1760 = vmatprep.mubr.f32.mxu0 0.0
  %1761 = vmatmul.mubr.f32.gmra.mxu0 %v1434
  %v1762 = vpop.f32.mrf.mxu0
  %v1763 = vadd.f32 0.0, %v1762
  %v1764 = vpop.f32.mrf.mxu0
  %1765 = vmatprep.mubr.f32.mxu0 0.0
  %1766 = vmatmul.mubr.f32.gmra.mxu0 %v1437
  %v1767 = vpop.f32.mrf.mxu0
  %v1768 = vadd.f32 0.0, %v1767
  %v1769 = vpop.f32.mrf.mxu0
  %1770 = vmatprep.mubr.f32.mxu0 0.0
  %1771 = vmatmul.mubr.f32.gmra.mxu0 %v1440
  %v1772 = vpop.f32.mrf.mxu0
  %v1773 = vadd.f32 0.0, %v1772
  %v1774 = vpop.f32.mrf.mxu0
  %1775 = vmatprep.mubr.f32.mxu0 0.0
  %1776 = vmatmul.mubr.f32.gmra.mxu0 %v1443
  %v1777 = vpop.f32.mrf.mxu0
  %v1778 = vadd.f32 0.0, %v1777
  %v1779 = vpop.f32.mrf.mxu0
  %1780 = vmatprep.mubr.f32.mxu0 0.0
  %1781 = vmatmul.mubr.f32.gmra.mxu0 %v1446
  %v1782 = vpop.f32.mrf.mxu0
  %v1783 = vadd.f32 0.0, %v1782
  %v1784 = vpop.f32.mrf.mxu0
  %1785 = vmatprep.mubr.f32.mxu0 0.0
  %1786 = vmatmul.mubr.f32.gmra.mxu0 %v1449
  %v1787 = vpop.f32.mrf.mxu0
  %v1788 = vadd.f32 0.0, %v1787
  %v1789 = vpop.f32.mrf.mxu0
  %1790 = vmatprep.mubr.f32.mxu0 0.0
  %1791 = vmatmul.mubr.f32.gmra.mxu0 %v1452
  %v1792 = vpop.f32.mrf.mxu0
  %v1793 = vadd.f32 0.0, %v1792
  %v1794 = vpop.f32.mrf.mxu0
  %1795 = vmatprep.mubr.f32.mxu0 0.0
  %1796 = vmatmul.mubr.f32.gmra.mxu0 %v1455
  %v1797 = vpop.f32.mrf.mxu0
  %v1798 = vadd.f32 0.0, %v1797
  %v1799 = vpop.f32.mrf.mxu0
  %1800 = vmatprep.mubr.f32.mxu0 0.0
  %1801 = vmatmul.mubr.f32.gmra.mxu0 %v1458
  %v1802 = vpop.f32.mrf.mxu0
  %v1803 = vadd.f32 0.0, %v1802
  %v1804 = vpop.f32.mrf.mxu0
  %1805 = vmatprep.mubr.f32.mxu0 0.0
  %1806 = vmatmul.mubr.f32.gmra.mxu0 %v1461
  %v1807 = vpop.f32.mrf.mxu0
  %v1808 = vadd.f32 0.0, %v1807
  %v1809 = vpop.f32.mrf.mxu0
  %1810 = vmatprep.mubr.f32.mxu0 0.0
  %1811 = vmatmul.mubr.f32.gmra.mxu0 %v1464
  %v1812 = vpop.f32.mrf.mxu0
  %v1813 = vadd.f32 0.0, %v1812
  %v1814 = vpop.f32.mrf.mxu0
  %1815 = vdwg.mxu0
  %v1816 = vmax.f32 %v1180, %v1533
  %v1817 = vmax.f32 %v1181, %v1538
  %v1818 = vmax.f32 %v1182, %v1543
  %v1819 = vmax.f32 %v1183, %v1548
  %v1820 = vmax.f32 %v1184, %v1553
  %v1821 = vmax.f32 %v1185, %v1558
  %v1822 = vmax.f32 %v1186, %v1563
  %v1823 = vmax.f32 %v1187, %v1568
  %v1824 = vmax.f32 %v1188, %v1573
  %v1825 = vmax.f32 %v1189, %v1578
  %v1826 = vmax.f32 %v1190, %v1583
  %v1827 = vmax.f32 %v1191, %v1588
  %v1828 = vmax.f32 %v1192, %v1593
  %v1829 = vmax.f32 %v1193, %v1598
  %v1830 = vmax.f32 %v1194, %v1603
  %v1831 = vmax.f32 %v1195, %v1608
  %v1832 = vmax.f32 %v1196, %v1613
  %v1833 = vmax.f32 %v1197, %v1618
  %v1834 = vmax.f32 %v1198, %v1623
  %v1835 = vmax.f32 %v1199, %v1628
  %v1836 = vmax.f32 %v1200, %v1633
  %v1837 = vmax.f32 %v1201, %v1638
  %v1838 = vmax.f32 %v1202, %v1643
  %v1839 = vmax.f32 %v1203, %v1648
  %v1840 = vmax.f32 %v1204, %v1653
  %v1841 = vmax.f32 %v1205, %v1658
  %v1842 = vmax.f32 %v1206, %v1663
  %v1843 = vmax.f32 %v1207, %v1668
  %v1844 = vmax.f32 %v1208, %v1673
  %v1845 = vmax.f32 %v1209, %v1678
  %v1846 = vmax.f32 %v1210, %v1683
  %v1847 = vmax.f32 %v1211, %v1688
  %v1848 = vmax.f32 %v1212, %v1693
  %v1849 = vmax.f32 %v1213, %v1698
  %v1850 = vmax.f32 %v1214, %v1703
  %v1851 = vmax.f32 %v1215, %v1708
  %v1852 = vmax.f32 %v1216, %v1713
  %v1853 = vmax.f32 %v1217, %v1718
  %v1854 = vmax.f32 %v1218, %v1723
  %v1855 = vmax.f32 %v1219, %v1728
  %v1856 = vmax.f32 %v1220, %v1733
  %v1857 = vmax.f32 %v1221, %v1738
  %v1858 = vmax.f32 %v1222, %v1743
  %v1859 = vmax.f32 %v1223, %v1748
  %v1860 = vmax.f32 %v1224, %v1753
  %v1861 = vmax.f32 %v1225, %v1758
  %v1862 = vmax.f32 %v1226, %v1763
  %v1863 = vmax.f32 %v1227, %v1768
  %v1864 = vmax.f32 %v1228, %v1773
  %v1865 = vmax.f32 %v1229, %v1778
  %v1866 = vmax.f32 %v1230, %v1783
  %v1867 = vmax.f32 %v1231, %v1788
  %v1868 = vmax.f32 %v1232, %v1793
  %v1869 = vmax.f32 %v1233, %v1798
  %v1870 = vmax.f32 %v1234, %v1803
  %v1871 = vmax.f32 %v1235, %v1808
  %v1872 = vmax.f32 %v1236, %v1813
  %s1873 = scalar_lea.vmem %s0, 1368
  %v1874 = vld [vmem:[%s1873] sm:$0xff]
  %v1875 = vld [vmem:[%s1873 + $0x8] sm:$0xff]
  %v1876 = vld [vmem:[%s1873 + $0x10] sm:$0xff]
  %v1877 = vld [vmem:[%s1873 + $0x18] sm:$0xff]
  %v1878 = vld [vmem:[%s1873 + $0x20] sm:$0xff]
  %v1879 = vld [vmem:[%s1873 + $0x28] sm:$0xff]
  %v1880 = vld [vmem:[%s1873 + $0x30] sm:$0xff]
  %v1881 = vld [vmem:[%s1873 + $0x38] sm:$0xff]
  %v1882 = vld [vmem:[%s1873 + $0x40] sm:$0xff]
  %v1883 = vld [vmem:[%s1873 + $0x48] sm:$0xff]
  %v1884 = vld [vmem:[%s1873 + $0x50] sm:$0xff]
  %v1885 = vld [vmem:[%s1873 + $0x58] sm:$0xff]
  %v1886 = vld [vmem:[%s1873 + $0x60] sm:$0xff]
  %v1887 = vld [vmem:[%s1873 + $0x68] sm:$0xff]
  %v1888 = vld [vmem:[%s1873 + $0x70] sm:$0xff]
  %v1889 = vld [vmem:[%s1873 + $0x78] sm:$0xff]
  %v1890 = vld [vmem:[%s1873 + $0x80] sm:$0xff]
  %v1891 = vld [vmem:[%s1873 + $0x88] sm:$0xff]
  %v1892 = vld [vmem:[%s1873 + $0x90] sm:$0xff]
  %v1893 = vld [vmem:[%s1873 + $0x98] sm:$0xff]
  %v1894 = vld [vmem:[%s1873 + $0xa0] sm:$0xff]
  %v1895 = vld [vmem:[%s1873 + $0xa8] sm:$0xff]
  %v1896 = vld [vmem:[%s1873 + $0xb0] sm:$0xff]
  %v1897 = vld [vmem:[%s1873 + $0xb8] sm:$0xff]
  %v1898 = vld [vmem:[%s1873 + $0xc0] sm:$0xff]
  %v1899 = vld [vmem:[%s1873 + $0xc8] sm:$0xff]
  %v1900 = vld [vmem:[%s1873 + $0xd0] sm:$0xff]
  %v1901 = vld [vmem:[%s1873 + $0xd8] sm:$0xff]
  %v1902 = vld [vmem:[%s1873 + $0xe0] sm:$0xff]
  %v1903 = vld [vmem:[%s1873 + $0xe8] sm:$0xff]
  %v1904 = vld [vmem:[%s1873 + $0xf0] sm:$0xff]
  %v1905 = vld [vmem:[%s1873 + $0xf8] sm:$0xff]
  %v1906 = vld [vmem:[%s1873 + $0x100] sm:$0xff]
  %v1907 = vld [vmem:[%s1873 + $0x108] sm:$0xff]
  %v1908 = vld [vmem:[%s1873 + $0x110] sm:$0xff]
  %v1909 = vld [vmem:[%s1873 + $0x118] sm:$0xff]
  %v1910 = vld [vmem:[%s1873 + $0x120] sm:$0xff]
  %v1911 = vld [vmem:[%s1873 + $0x128] sm:$0xff]
  %v1912 = vld [vmem:[%s1873 + $0x130] sm:$0xff]
  %v1913 = vld [vmem:[%s1873 + $0x138] sm:$0xff]
  %v1914 = vld [vmem:[%s1873 + $0x140] sm:$0xff]
  %v1915 = vld [vmem:[%s1873 + $0x148] sm:$0xff]
  %v1916 = vld [vmem:[%s1873 + $0x150] sm:$0xff]
  %v1917 = vld [vmem:[%s1873 + $0x158] sm:$0xff]
  %v1918 = vld [vmem:[%s1873 + $0x160] sm:$0xff]
  %v1919 = vld [vmem:[%s1873 + $0x168] sm:$0xff]
  %v1920 = vld [vmem:[%s1873 + $0x170] sm:$0xff]
  %v1921 = vld [vmem:[%s1873 + $0x178] sm:$0xff]
  %v1922 = vld [vmem:[%s1873 + $0x180] sm:$0xff]
  %v1923 = vld [vmem:[%s1873 + $0x188] sm:$0xff]
  %v1924 = vld [vmem:[%s1873 + $0x190] sm:$0xff]
  %v1925 = vld [vmem:[%s1873 + $0x198] sm:$0xff]
  %v1926 = vld [vmem:[%s1873 + $0x1a0] sm:$0xff]
  %v1927 = vld [vmem:[%s1873 + $0x1a8] sm:$0xff]
  %v1928 = vld [vmem:[%s1873 + $0x1b0] sm:$0xff]
  %v1929 = vld [vmem:[%s1873 + $0x1b8] sm:$0xff]
  %v1930 = vld [vmem:[%s1873 + $0x1c0] sm:$0x3]
  %v1932 = vsel %vm75, %v1874, 0
  %v1935 = vsel %vm75, %v1875, 0
  %v1938 = vsel %vm75, %v1876, 0
  %v1941 = vsel %vm75, %v1877, 0
  %v1944 = vsel %vm75, %v1878, 0
  %v1947 = vsel %vm75, %v1879, 0
  %v1950 = vsel %vm75, %v1880, 0
  %v1953 = vsel %vm75, %v1881, 0
  %v1956 = vsel %vm75, %v1882, 0
  %v1959 = vsel %vm75, %v1883, 0
  %v1962 = vsel %vm75, %v1884, 0
  %v1965 = vsel %vm75, %v1885, 0
  %v1968 = vsel %vm75, %v1886, 0
  %v1971 = vsel %vm75, %v1887, 0
  %v1974 = vsel %vm75, %v1888, 0
  %v1977 = vsel %vm75, %v1889, 0
  %v1980 = vsel %vm75, %v1890, 0
  %v1983 = vsel %vm75, %v1891, 0
  %v1986 = vsel %vm75, %v1892, 0
  %v1989 = vsel %vm75, %v1893, 0
  %v1992 = vsel %vm75, %v1894, 0
  %v1995 = vsel %vm75, %v1895, 0
  %v1998 = vsel %vm75, %v1896, 0
  %v2001 = vsel %vm75, %v1897, 0
  %v2004 = vsel %vm75, %v1898, 0
  %v2007 = vsel %vm75, %v1899, 0
  %v2010 = vsel %vm75, %v1900, 0
  %v2013 = vsel %vm75, %v1901, 0
  %v2016 = vsel %vm75, %v1902, 0
  %v2019 = vsel %vm75, %v1903, 0
  %v2022 = vsel %vm75, %v1904, 0
  %v2025 = vsel %vm75, %v1905, 0
  %v2028 = vsel %vm75, %v1906, 0
  %v2031 = vsel %vm75, %v1907, 0
  %v2034 = vsel %vm75, %v1908, 0
  %v2037 = vsel %vm75, %v1909, 0
  %v2040 = vsel %vm75, %v1910, 0
  %v2043 = vsel %vm75, %v1911, 0
  %v2046 = vsel %vm75, %v1912, 0
  %v2049 = vsel %vm75, %v1913, 0
  %v2052 = vsel %vm75, %v1914, 0
  %v2055 = vsel %vm75, %v1915, 0
  %v2058 = vsel %vm75, %v1916, 0
  %v2061 = vsel %vm75, %v1917, 0
  %v2064 = vsel %vm75, %v1918, 0
  %v2067 = vsel %vm75, %v1919, 0
  %v2070 = vsel %vm75, %v1920, 0
  %v2073 = vsel %vm75, %v1921, 0
  %v2076 = vsel %vm75, %v1922, 0
  %v2079 = vsel %vm75, %v1923, 0
  %v2082 = vsel %vm75, %v1924, 0
  %v2085 = vsel %vm75, %v1925, 0
  %v2088 = vsel %vm75, %v1926, 0
  %v2091 = vsel %vm75, %v1927, 0
  %v2094 = vsel %vm75, %v1928, 0
  %v2097 = vsel %vm75, %v1929, 0
  %v2100 = vsel %vm75, %v1930, 0
  %2102 = vmatprep.subr.mxu0 0.0
  %2103 = vmatpush1.msra.mxu0 0.0
  %2104 = vmatprep.subr.mxu0 0.0
  %2105 = vmatpush1.msra.mxu0 0.0
  %2106 = vmatprep.subr.mxu0 0.0
  %2107 = vmatpush1.msra.mxu0 0.0
  %2108 = vmatprep.subr.mxu0 0.0
  %2109 = vmatpush1.msra.mxu0 0.0
  %2110 = vmatprep.subr.mxu0 0.0
  %2111 = vmatpush1.msra.mxu0 0.0
  %2112 = vmatprep.subr.mxu0 0.0
  %2113 = vmatpush1.msra.mxu0 0.0
  %2114 = vmatprep.subr.mxu0 0.0
  %2115 = vmatpush1.msra.mxu0 0.0
  %2116 = vmatprep.subr.mxu0 0.0
  %2117 = vmatpush1.msra.mxu0 0.0
  %2118 = vmatprep.subr.mxu0 0.0
  %2119 = vmatpush1.msra.mxu0 0.0
  %2120 = vmatprep.subr.mxu0 0.0
  %2121 = vmatpush1.msra.mxu0 0.0
  %2122 = vmatprep.subr.mxu0 0.0
  %2123 = vmatpush1.msra.mxu0 0.0
  %2124 = vmatprep.subr.mxu0 0.0
  %2125 = vmatpush1.msra.mxu0 0.0
  %2126 = vmatprep.subr.mxu0 0.0
  %2127 = vmatpush1.msra.mxu0 %v249
  %2128 = vmatprep.subr.mxu0 0.0
  %2129 = vmatpush1.msra.mxu0 %v73
  %2130 = vmatprep.subr.mxu0 0.0
  %2131 = vmatpush1.msra.mxu0 %v72
  %2132 = vmatprep.subr.mxu0 0.0
  %2133 = vmatpush1.msra.mxu0 %v71
  %2134 = vmatprep.subr.mxu0 0.0
  %2135 = vmatpush2.msra.mxu0 0.0
  %2136 = vmatprep.subr.mxu0 0.0
  %2137 = vmatpush2.msra.mxu0 0.0
  %2138 = vmatprep.subr.mxu0 0.0
  %2139 = vmatpush2.msra.mxu0 0.0
  %2140 = vmatprep.subr.mxu0 0.0
  %2141 = vmatpush2.msra.mxu0 0.0
  %2142 = vmatprep.subr.mxu0 0.0
  %2143 = vmatpush2.msra.mxu0 0.0
  %2144 = vmatprep.subr.mxu0 0.0
  %2145 = vmatpush2.msra.mxu0 0.0
  %2146 = vmatprep.subr.mxu0 0.0
  %2147 = vmatpush2.msra.mxu0 0.0
  %2148 = vmatprep.subr.mxu0 0.0
  %2149 = vmatpush2.msra.mxu0 0.0
  %2150 = vmatprep.subr.mxu0 0.0
  %2151 = vmatpush2.msra.mxu0 0.0
  %2152 = vmatprep.subr.mxu0 0.0
  %2153 = vmatpush2.msra.mxu0 0.0
  %2154 = vmatprep.subr.mxu0 0.0
  %2155 = vmatpush2.msra.mxu0 0.0
  %2156 = vmatprep.subr.mxu0 0.0
  %2157 = vmatpush2.msra.mxu0 0.0
  %2158 = vmatprep.subr.mxu0 0.0
  %2159 = vmatpush2.msra.mxu0 0.0
  %2160 = vmatprep.subr.mxu0 0.0
  %2161 = vmatpush2.msra.mxu0 0.0
  %2162 = vmatprep.subr.mxu0 0.0
  %2163 = vmatpush2.msra.mxu0 0.0
  %2164 = vmatprep.subr.mxu0 0.0
  %2165 = vmatpush2.msra.mxu0 0.0
  %2166 = vmatprep.mubr.f32.mxu0 0.0
  %2167 = vmatmul.mubr.f32.gmra.mxu0 %v1932
  %v2168 = vpop.f32.mrf.mxu0
  %v2169 = vadd.f32 0.0, %v2168
  %v2170 = vpop.f32.mrf.mxu0
  %2171 = vmatprep.mubr.f32.mxu0 0.0
  %2172 = vmatmul.mubr.f32.gmra.mxu0 %v1935
  %v2173 = vpop.f32.mrf.mxu0
  %v2174 = vadd.f32 0.0, %v2173
  %v2175 = vpop.f32.mrf.mxu0
  %2176 = vmatprep.mubr.f32.mxu0 0.0
  %2177 = vmatmul.mubr.f32.gmra.mxu0 %v1938
  %v2178 = vpop.f32.mrf.mxu0
  %v2179 = vadd.f32 0.0, %v2178
  %v2180 = vpop.f32.mrf.mxu0
  %2181 = vmatprep.mubr.f32.mxu0 0.0
  %2182 = vmatmul.mubr.f32.gmra.mxu0 %v1941
  %v2183 = vpop.f32.mrf.mxu0
  %v2184 = vadd.f32 0.0, %v2183
  %v2185 = vpop.f32.mrf.mxu0
  %2186 = vmatprep.mubr.f32.mxu0 0.0
  %2187 = vmatmul.mubr.f32.gmra.mxu0 %v1944
  %v2188 = vpop.f32.mrf.mxu0
  %v2189 = vadd.f32 0.0, %v2188
  %v2190 = vpop.f32.mrf.mxu0
  %2191 = vmatprep.mubr.f32.mxu0 0.0
  %2192 = vmatmul.mubr.f32.gmra.mxu0 %v1947
  %v2193 = vpop.f32.mrf.mxu0
  %v2194 = vadd.f32 0.0, %v2193
  %v2195 = vpop.f32.mrf.mxu0
  %2196 = vmatprep.mubr.f32.mxu0 0.0
  %2197 = vmatmul.mubr.f32.gmra.mxu0 %v1950
  %v2198 = vpop.f32.mrf.mxu0
  %v2199 = vadd.f32 0.0, %v2198
  %v2200 = vpop.f32.mrf.mxu0
  %2201 = vmatprep.mubr.f32.mxu0 0.0
  %2202 = vmatmul.mubr.f32.gmra.mxu0 %v1953
  %v2203 = vpop.f32.mrf.mxu0
  %v2204 = vadd.f32 0.0, %v2203
  %v2205 = vpop.f32.mrf.mxu0
  %2206 = vmatprep.mubr.f32.mxu0 0.0
  %2207 = vmatmul.mubr.f32.gmra.mxu0 %v1956
  %v2208 = vpop.f32.mrf.mxu0
  %v2209 = vadd.f32 0.0, %v2208
  %v2210 = vpop.f32.mrf.mxu0
  %2211 = vmatprep.mubr.f32.mxu0 0.0
  %2212 = vmatmul.mubr.f32.gmra.mxu0 %v1959
  %v2213 = vpop.f32.mrf.mxu0
  %v2214 = vadd.f32 0.0, %v2213
  %v2215 = vpop.f32.mrf.mxu0
  %2216 = vmatprep.mubr.f32.mxu0 0.0
  %2217 = vmatmul.mubr.f32.gmra.mxu0 %v1962
  %v2218 = vpop.f32.mrf.mxu0
  %v2219 = vadd.f32 0.0, %v2218
  %v2220 = vpop.f32.mrf.mxu0
  %2221 = vmatprep.mubr.f32.mxu0 0.0
  %2222 = vmatmul.mubr.f32.gmra.mxu0 %v1965
  %v2223 = vpop.f32.mrf.mxu0
  %v2224 = vadd.f32 0.0, %v2223
  %v2225 = vpop.f32.mrf.mxu0
  %2226 = vmatprep.mubr.f32.mxu0 0.0
  %2227 = vmatmul.mubr.f32.gmra.mxu0 %v1968
  %v2228 = vpop.f32.mrf.mxu0
  %v2229 = vadd.f32 0.0, %v2228
  %v2230 = vpop.f32.mrf.mxu0
  %2231 = vmatprep.mubr.f32.mxu0 0.0
  %2232 = vmatmul.mubr.f32.gmra.mxu0 %v1971
  %v2233 = vpop.f32.mrf.mxu0
  %v2234 = vadd.f32 0.0, %v2233
  %v2235 = vpop.f32.mrf.mxu0
  %2236 = vmatprep.mubr.f32.mxu0 0.0
  %2237 = vmatmul.mubr.f32.gmra.mxu0 %v1974
  %v2238 = vpop.f32.mrf.mxu0
  %v2239 = vadd.f32 0.0, %v2238
  %v2240 = vpop.f32.mrf.mxu0
  %2241 = vmatprep.mubr.f32.mxu0 0.0
  %2242 = vmatmul.mubr.f32.gmra.mxu0 %v1977
  %v2243 = vpop.f32.mrf.mxu0
  %v2244 = vadd.f32 0.0, %v2243
  %v2245 = vpop.f32.mrf.mxu0
  %2246 = vmatprep.mubr.f32.mxu0 0.0
  %2247 = vmatmul.mubr.f32.gmra.mxu0 %v1980
  %v2248 = vpop.f32.mrf.mxu0
  %v2249 = vadd.f32 0.0, %v2248
  %v2250 = vpop.f32.mrf.mxu0
  %2251 = vmatprep.mubr.f32.mxu0 0.0
  %2252 = vmatmul.mubr.f32.gmra.mxu0 %v1983
  %v2253 = vpop.f32.mrf.mxu0
  %v2254 = vadd.f32 0.0, %v2253
  %v2255 = vpop.f32.mrf.mxu0
  %2256 = vmatprep.mubr.f32.mxu0 0.0
  %2257 = vmatmul.mubr.f32.gmra.mxu0 %v1986
  %v2258 = vpop.f32.mrf.mxu0
  %v2259 = vadd.f32 0.0, %v2258
  %v2260 = vpop.f32.mrf.mxu0
  %2261 = vmatprep.mubr.f32.mxu0 0.0
  %2262 = vmatmul.mubr.f32.gmra.mxu0 %v1989
  %v2263 = vpop.f32.mrf.mxu0
  %v2264 = vadd.f32 0.0, %v2263
  %v2265 = vpop.f32.mrf.mxu0
  %2266 = vmatprep.mubr.f32.mxu0 0.0
  %2267 = vmatmul.mubr.f32.gmra.mxu0 %v1992
  %v2268 = vpop.f32.mrf.mxu0
  %v2269 = vadd.f32 0.0, %v2268
  %v2270 = vpop.f32.mrf.mxu0
  %2271 = vmatprep.mubr.f32.mxu0 0.0
  %2272 = vmatmul.mubr.f32.gmra.mxu0 %v1995
  %v2273 = vpop.f32.mrf.mxu0
  %v2274 = vadd.f32 0.0, %v2273
  %v2275 = vpop.f32.mrf.mxu0
  %2276 = vmatprep.mubr.f32.mxu0 0.0
  %2277 = vmatmul.mubr.f32.gmra.mxu0 %v1998
  %v2278 = vpop.f32.mrf.mxu0
  %v2279 = vadd.f32 0.0, %v2278
  %v2280 = vpop.f32.mrf.mxu0
  %2281 = vmatprep.mubr.f32.mxu0 0.0
  %2282 = vmatmul.mubr.f32.gmra.mxu0 %v2001
  %v2283 = vpop.f32.mrf.mxu0
  %v2284 = vadd.f32 0.0, %v2283
  %v2285 = vpop.f32.mrf.mxu0
  %2286 = vmatprep.mubr.f32.mxu0 0.0
  %2287 = vmatmul.mubr.f32.gmra.mxu0 %v2004
  %v2288 = vpop.f32.mrf.mxu0
  %v2289 = vadd.f32 0.0, %v2288
  %v2290 = vpop.f32.mrf.mxu0
  %2291 = vmatprep.mubr.f32.mxu0 0.0
  %2292 = vmatmul.mubr.f32.gmra.mxu0 %v2007
  %v2293 = vpop.f32.mrf.mxu0
  %v2294 = vadd.f32 0.0, %v2293
  %v2295 = vpop.f32.mrf.mxu0
  %2296 = vmatprep.mubr.f32.mxu0 0.0
  %2297 = vmatmul.mubr.f32.gmra.mxu0 %v2010
  %v2298 = vpop.f32.mrf.mxu0
  %v2299 = vadd.f32 0.0, %v2298
  %v2300 = vpop.f32.mrf.mxu0
  %2301 = vmatprep.mubr.f32.mxu0 0.0
  %2302 = vmatmul.mubr.f32.gmra.mxu0 %v2013
  %v2303 = vpop.f32.mrf.mxu0
  %v2304 = vadd.f32 0.0, %v2303
  %v2305 = vpop.f32.mrf.mxu0
  %2306 = vmatprep.mubr.f32.mxu0 0.0
  %2307 = vmatmul.mubr.f32.gmra.mxu0 %v2016
  %v2308 = vpop.f32.mrf.mxu0
  %v2309 = vadd.f32 0.0, %v2308
  %v2310 = vpop.f32.mrf.mxu0
  %2311 = vmatprep.mubr.f32.mxu0 0.0
  %2312 = vmatmul.mubr.f32.gmra.mxu0 %v2019
  %v2313 = vpop.f32.mrf.mxu0
  %v2314 = vadd.f32 0.0, %v2313
  %v2315 = vpop.f32.mrf.mxu0
  %2316 = vmatprep.mubr.f32.mxu0 0.0
  %2317 = vmatmul.mubr.f32.gmra.mxu0 %v2022
  %v2318 = vpop.f32.mrf.mxu0
  %v2319 = vadd.f32 0.0, %v2318
  %v2320 = vpop.f32.mrf.mxu0
  %2321 = vmatprep.mubr.f32.mxu0 0.0
  %2322 = vmatmul.mubr.f32.gmra.mxu0 %v2025
  %v2323 = vpop.f32.mrf.mxu0
  %v2324 = vadd.f32 0.0, %v2323
  %v2325 = vpop.f32.mrf.mxu0
  %2326 = vmatprep.mubr.f32.mxu0 0.0
  %2327 = vmatmul.mubr.f32.gmra.mxu0 %v2028
  %v2328 = vpop.f32.mrf.mxu0
  %v2329 = vadd.f32 0.0, %v2328
  %v2330 = vpop.f32.mrf.mxu0
  %2331 = vmatprep.mubr.f32.mxu0 0.0
  %2332 = vmatmul.mubr.f32.gmra.mxu0 %v2031
  %v2333 = vpop.f32.mrf.mxu0
  %v2334 = vadd.f32 0.0, %v2333
  %v2335 = vpop.f32.mrf.mxu0
  %2336 = vmatprep.mubr.f32.mxu0 0.0
  %2337 = vmatmul.mubr.f32.gmra.mxu0 %v2034
  %v2338 = vpop.f32.mrf.mxu0
  %v2339 = vadd.f32 0.0, %v2338
  %v2340 = vpop.f32.mrf.mxu0
  %2341 = vmatprep.mubr.f32.mxu0 0.0
  %2342 = vmatmul.mubr.f32.gmra.mxu0 %v2037
  %v2343 = vpop.f32.mrf.mxu0
  %v2344 = vadd.f32 0.0, %v2343
  %v2345 = vpop.f32.mrf.mxu0
  %2346 = vmatprep.mubr.f32.mxu0 0.0
  %2347 = vmatmul.mubr.f32.gmra.mxu0 %v2040
  %v2348 = vpop.f32.mrf.mxu0
  %v2349 = vadd.f32 0.0, %v2348
  %v2350 = vpop.f32.mrf.mxu0
  %2351 = vmatprep.mubr.f32.mxu0 0.0
  %2352 = vmatmul.mubr.f32.gmra.mxu0 %v2043
  %v2353 = vpop.f32.mrf.mxu0
  %v2354 = vadd.f32 0.0, %v2353
  %v2355 = vpop.f32.mrf.mxu0
  %2356 = vmatprep.mubr.f32.mxu0 0.0
  %2357 = vmatmul.mubr.f32.gmra.mxu0 %v2046
  %v2358 = vpop.f32.mrf.mxu0
  %v2359 = vadd.f32 0.0, %v2358
  %v2360 = vpop.f32.mrf.mxu0
  %2361 = vmatprep.mubr.f32.mxu0 0.0
  %2362 = vmatmul.mubr.f32.gmra.mxu0 %v2049
  %v2363 = vpop.f32.mrf.mxu0
  %v2364 = vadd.f32 0.0, %v2363
  %v2365 = vpop.f32.mrf.mxu0
  %2366 = vmatprep.mubr.f32.mxu0 0.0
  %2367 = vmatmul.mubr.f32.gmra.mxu0 %v2052
  %v2368 = vpop.f32.mrf.mxu0
  %v2369 = vadd.f32 0.0, %v2368
  %v2370 = vpop.f32.mrf.mxu0
  %2371 = vmatprep.mubr.f32.mxu0 0.0
  %2372 = vmatmul.mubr.f32.gmra.mxu0 %v2055
  %v2373 = vpop.f32.mrf.mxu0
  %v2374 = vadd.f32 0.0, %v2373
  %v2375 = vpop.f32.mrf.mxu0
  %2376 = vmatprep.mubr.f32.mxu0 0.0
  %2377 = vmatmul.mubr.f32.gmra.mxu0 %v2058
  %v2378 = vpop.f32.mrf.mxu0
  %v2379 = vadd.f32 0.0, %v2378
  %v2380 = vpop.f32.mrf.mxu0
  %2381 = vmatprep.mubr.f32.mxu0 0.0
  %2382 = vmatmul.mubr.f32.gmra.mxu0 %v2061
  %v2383 = vpop.f32.mrf.mxu0
  %v2384 = vadd.f32 0.0, %v2383
  %v2385 = vpop.f32.mrf.mxu0
  %2386 = vmatprep.mubr.f32.mxu0 0.0
  %2387 = vmatmul.mubr.f32.gmra.mxu0 %v2064
  %v2388 = vpop.f32.mrf.mxu0
  %v2389 = vadd.f32 0.0, %v2388
  %v2390 = vpop.f32.mrf.mxu0
  %2391 = vmatprep.mubr.f32.mxu0 0.0
  %2392 = vmatmul.mubr.f32.gmra.mxu0 %v2067
  %v2393 = vpop.f32.mrf.mxu0
  %v2394 = vadd.f32 0.0, %v2393
  %v2395 = vpop.f32.mrf.mxu0
  %2396 = vmatprep.mubr.f32.mxu0 0.0
  %2397 = vmatmul.mubr.f32.gmra.mxu0 %v2070
  %v2398 = vpop.f32.mrf.mxu0
  %v2399 = vadd.f32 0.0, %v2398
  %v2400 = vpop.f32.mrf.mxu0
  %2401 = vmatprep.mubr.f32.mxu0 0.0
  %2402 = vmatmul.mubr.f32.gmra.mxu0 %v2073
  %v2403 = vpop.f32.mrf.mxu0
  %v2404 = vadd.f32 0.0, %v2403
  %v2405 = vpop.f32.mrf.mxu0
  %2406 = vmatprep.mubr.f32.mxu0 0.0
  %2407 = vmatmul.mubr.f32.gmra.mxu0 %v2076
  %v2408 = vpop.f32.mrf.mxu0
  %v2409 = vadd.f32 0.0, %v2408
  %v2410 = vpop.f32.mrf.mxu0
  %2411 = vmatprep.mubr.f32.mxu0 0.0
  %2412 = vmatmul.mubr.f32.gmra.mxu0 %v2079
  %v2413 = vpop.f32.mrf.mxu0
  %v2414 = vadd.f32 0.0, %v2413
  %v2415 = vpop.f32.mrf.mxu0
  %2416 = vmatprep.mubr.f32.mxu0 0.0
  %2417 = vmatmul.mubr.f32.gmra.mxu0 %v2082
  %v2418 = vpop.f32.mrf.mxu0
  %v2419 = vadd.f32 0.0, %v2418
  %v2420 = vpop.f32.mrf.mxu0
  %2421 = vmatprep.mubr.f32.mxu0 0.0
  %2422 = vmatmul.mubr.f32.gmra.mxu0 %v2085
  %v2423 = vpop.f32.mrf.mxu0
  %v2424 = vadd.f32 0.0, %v2423
  %v2425 = vpop.f32.mrf.mxu0
  %2426 = vmatprep.mubr.f32.mxu0 0.0
  %2427 = vmatmul.mubr.f32.gmra.mxu0 %v2088
  %v2428 = vpop.f32.mrf.mxu0
  %v2429 = vadd.f32 0.0, %v2428
  %v2430 = vpop.f32.mrf.mxu0
  %2431 = vmatprep.mubr.f32.mxu0 0.0
  %2432 = vmatmul.mubr.f32.gmra.mxu0 %v2091
  %v2433 = vpop.f32.mrf.mxu0
  %v2434 = vadd.f32 0.0, %v2433
  %v2435 = vpop.f32.mrf.mxu0
  %2436 = vmatprep.mubr.f32.mxu0 0.0
  %2437 = vmatmul.mubr.f32.gmra.mxu0 %v2094
  %v2438 = vpop.f32.mrf.mxu0
  %v2439 = vadd.f32 0.0, %v2438
  %v2440 = vpop.f32.mrf.mxu0
  %2441 = vmatprep.mubr.f32.mxu0 0.0
  %2442 = vmatmul.mubr.f32.gmra.mxu0 %v2097
  %v2443 = vpop.f32.mrf.mxu0
  %v2444 = vadd.f32 0.0, %v2443
  %v2445 = vpop.f32.mrf.mxu0
  %2446 = vmatprep.mubr.f32.mxu0 0.0
  %2447 = vmatmul.mubr.f32.gmra.mxu0 %v2100
  %v2448 = vpop.f32.mrf.mxu0
  %v2449 = vadd.f32 0.0, %v2448
  %v2450 = vpop.f32.mrf.mxu0
  %2451 = vdwg.mxu0
  %v2452 = vmax.f32 %v1816, %v2169
  %v2453 = vmax.f32 %v1817, %v2174
  %v2454 = vmax.f32 %v1818, %v2179
  %v2455 = vmax.f32 %v1819, %v2184
  %v2456 = vmax.f32 %v1820, %v2189
  %v2457 = vmax.f32 %v1821, %v2194
  %v2458 = vmax.f32 %v1822, %v2199
  %v2459 = vmax.f32 %v1823, %v2204
  %v2460 = vmax.f32 %v1824, %v2209
  %v2461 = vmax.f32 %v1825, %v2214
  %v2462 = vmax.f32 %v1826, %v2219
  %v2463 = vmax.f32 %v1827, %v2224
  %v2464 = vmax.f32 %v1828, %v2229
  %v2465 = vmax.f32 %v1829, %v2234
  %v2466 = vmax.f32 %v1830, %v2239
  %v2467 = vmax.f32 %v1831, %v2244
  %v2468 = vmax.f32 %v1832, %v2249
  %v2469 = vmax.f32 %v1833, %v2254
  %v2470 = vmax.f32 %v1834, %v2259
  %v2471 = vmax.f32 %v1835, %v2264
  %v2472 = vmax.f32 %v1836, %v2269
  %v2473 = vmax.f32 %v1837, %v2274
  %v2474 = vmax.f32 %v1838, %v2279
  %v2475 = vmax.f32 %v1839, %v2284
  %v2476 = vmax.f32 %v1840, %v2289
  %v2477 = vmax.f32 %v1841, %v2294
  %v2478 = vmax.f32 %v1842, %v2299
  %v2479 = vmax.f32 %v1843, %v2304
  %v2480 = vmax.f32 %v1844, %v2309
  %v2481 = vmax.f32 %v1845, %v2314
  %v2482 = vmax.f32 %v1846, %v2319
  %v2483 = vmax.f32 %v1847, %v2324
  %v2484 = vmax.f32 %v1848, %v2329
  %v2485 = vmax.f32 %v1849, %v2334
  %v2486 = vmax.f32 %v1850, %v2339
  %v2487 = vmax.f32 %v1851, %v2344
  %v2488 = vmax.f32 %v1852, %v2349
  %v2489 = vmax.f32 %v1853, %v2354
  %v2490 = vmax.f32 %v1854, %v2359
  %v2491 = vmax.f32 %v1855, %v2364
  %v2492 = vmax.f32 %v1856, %v2369
  %v2493 = vmax.f32 %v1857, %v2374
  %v2494 = vmax.f32 %v1858, %v2379
  %v2495 = vmax.f32 %v1859, %v2384
  %v2496 = vmax.f32 %v1860, %v2389
  %v2497 = vmax.f32 %v1861, %v2394
  %v2498 = vmax.f32 %v1862, %v2399
  %v2499 = vmax.f32 %v1863, %v2404
  %v2500 = vmax.f32 %v1864, %v2409
  %v2501 = vmax.f32 %v1865, %v2414
  %v2502 = vmax.f32 %v1866, %v2419
  %v2503 = vmax.f32 %v1867, %v2424
  %v2504 = vmax.f32 %v1868, %v2429
  %v2505 = vmax.f32 %v1869, %v2434
  %v2506 = vmax.f32 %v1870, %v2439
  %v2507 = vmax.f32 %v1871, %v2444
  %v2508 = vmax.f32 %v1872, %v2449
  %v2509 = vld [vmem:[%s2] sm:$0x1]
  %v2511 = vlaneseq
  %v2512 = vshrl.u32 %v2511, 7
  %v2513 = vsub.s32 0, %v2512
  %v2514 = vrot.slane %v2509, %v2513
  %v2516 = vadd.f32 %v2452, %v2514
  %v2517 = vadd.f32 %v2453, %v2514
  %v2518 = vadd.f32 %v2454, %v2514
  %v2519 = vadd.f32 %v2455, %v2514
  %v2520 = vadd.f32 %v2456, %v2514
  %v2521 = vadd.f32 %v2457, %v2514
  %v2522 = vadd.f32 %v2458, %v2514
  %v2523 = vadd.f32 %v2459, %v2514
  %v2524 = vadd.f32 %v2460, %v2514
  %v2525 = vadd.f32 %v2461, %v2514
  %v2526 = vadd.f32 %v2462, %v2514
  %v2527 = vadd.f32 %v2463, %v2514
  %v2528 = vadd.f32 %v2464, %v2514
  %v2529 = vadd.f32 %v2465, %v2514
  %v2530 = vadd.f32 %v2466, %v2514
  %v2531 = vadd.f32 %v2467, %v2514
  %v2532 = vadd.f32 %v2468, %v2514
  %v2533 = vadd.f32 %v2469, %v2514
  %v2534 = vadd.f32 %v2470, %v2514
  %v2535 = vadd.f32 %v2471, %v2514
  %v2536 = vadd.f32 %v2472, %v2514
  %v2537 = vadd.f32 %v2473, %v2514
  %v2538 = vadd.f32 %v2474, %v2514
  %v2539 = vadd.f32 %v2475, %v2514
  %v2540 = vadd.f32 %v2476, %v2514
  %v2541 = vadd.f32 %v2477, %v2514
  %v2542 = vadd.f32 %v2478, %v2514
  %v2543 = vadd.f32 %v2479, %v2514
  %v2544 = vadd.f32 %v2480, %v2514
  %v2545 = vadd.f32 %v2481, %v2514
  %v2546 = vadd.f32 %v2482, %v2514
  %v2547 = vadd.f32 %v2483, %v2514
  %v2548 = vadd.f32 %v2484, %v2514
  %v2549 = vadd.f32 %v2485, %v2514
  %v2550 = vadd.f32 %v2486, %v2514
  %v2551 = vadd.f32 %v2487, %v2514
  %v2552 = vadd.f32 %v2488, %v2514
  %v2553 = vadd.f32 %v2489, %v2514
  %v2554 = vadd.f32 %v2490, %v2514
  %v2555 = vadd.f32 %v2491, %v2514
  %v2556 = vadd.f32 %v2492, %v2514
  %v2557 = vadd.f32 %v2493, %v2514
  %v2558 = vadd.f32 %v2494, %v2514
  %v2559 = vadd.f32 %v2495, %v2514
  %v2560 = vadd.f32 %v2496, %v2514
  %v2561 = vadd.f32 %v2497, %v2514
  %v2562 = vadd.f32 %v2498, %v2514
  %v2563 = vadd.f32 %v2499, %v2514
  %v2564 = vadd.f32 %v2500, %v2514
  %v2565 = vadd.f32 %v2501, %v2514
  %v2566 = vadd.f32 %v2502, %v2514
  %v2567 = vadd.f32 %v2503, %v2514
  %v2568 = vadd.f32 %v2504, %v2514
  %v2569 = vadd.f32 %v2505, %v2514
  %v2570 = vadd.f32 %v2506, %v2514
  %v2571 = vadd.f32 %v2507, %v2514
  %v2572 = vadd.f32 %v2508, %v2514
  %v2573 = vmax.f32 %v2516, 0.0
  %v2574 = vmax.f32 %v2517, 0.0
  %v2575 = vmax.f32 %v2518, 0.0
  %v2576 = vmax.f32 %v2519, 0.0
  %v2577 = vmax.f32 %v2520, 0.0
  %v2578 = vmax.f32 %v2521, 0.0
  %v2579 = vmax.f32 %v2522, 0.0
  %v2580 = vmax.f32 %v2523, 0.0
  %v2581 = vmax.f32 %v2524, 0.0
  %v2582 = vmax.f32 %v2525, 0.0
  %v2583 = vmax.f32 %v2526, 0.0
  %v2584 = vmax.f32 %v2527, 0.0
  %v2585 = vmax.f32 %v2528, 0.0
  %v2586 = vmax.f32 %v2529, 0.0
  %v2587 = vmax.f32 %v2530, 0.0
  %v2588 = vmax.f32 %v2531, 0.0
  %v2589 = vmax.f32 %v2532, 0.0
  %v2590 = vmax.f32 %v2533, 0.0
  %v2591 = vmax.f32 %v2534, 0.0
  %v2592 = vmax.f32 %v2535, 0.0
  %v2593 = vmax.f32 %v2536, 0.0
  %v2594 = vmax.f32 %v2537, 0.0
  %v2595 = vmax.f32 %v2538, 0.0
  %v2596 = vmax.f32 %v2539, 0.0
  %v2597 = vmax.f32 %v2540, 0.0
  %v2598 = vmax.f32 %v2541, 0.0
  %v2599 = vmax.f32 %v2542, 0.0
  %v2600 = vmax.f32 %v2543, 0.0
  %v2601 = vmax.f32 %v2544, 0.0
  %v2602 = vmax.f32 %v2545, 0.0
  %v2603 = vmax.f32 %v2546, 0.0
  %v2604 = vmax.f32 %v2547, 0.0
  %v2605 = vmax.f32 %v2548, 0.0
  %v2606 = vmax.f32 %v2549, 0.0
  %v2607 = vmax.f32 %v2550, 0.0
  %v2608 = vmax.f32 %v2551, 0.0
  %v2609 = vmax.f32 %v2552, 0.0
  %v2610 = vmax.f32 %v2553, 0.0
  %v2611 = vmax.f32 %v2554, 0.0
  %v2612 = vmax.f32 %v2555, 0.0
  %v2613 = vmax.f32 %v2556, 0.0
  %v2614 = vmax.f32 %v2557, 0.0
  %v2615 = vmax.f32 %v2558, 0.0
  %v2616 = vmax.f32 %v2559, 0.0
  %v2617 = vmax.f32 %v2560, 0.0
  %v2618 = vmax.f32 %v2561, 0.0
  %v2619 = vmax.f32 %v2562, 0.0
  %v2620 = vmax.f32 %v2563, 0.0
  %v2621 = vmax.f32 %v2564, 0.0
  %v2622 = vmax.f32 %v2565, 0.0
  %v2623 = vmax.f32 %v2566, 0.0
  %v2624 = vmax.f32 %v2567, 0.0
  %v2625 = vmax.f32 %v2568, 0.0
  %v2626 = vmax.f32 %v2569, 0.0
  %v2627 = vmax.f32 %v2570, 0.0
  %v2628 = vmax.f32 %v2571, 0.0
  %v2629 = vmax.f32 %v2572, 0.0
  %vm2630 = vcmask 130048
  %2631 = vst.msk [vmem:[%s3] sm:$0xff] %vm2630, %v2573
  %2632 = vst.msk [vmem:[%s3 + $0x8] sm:$0xff] %vm2630, %v2574
  %2633 = vst.msk [vmem:[%s3 + $0x10] sm:$0xff] %vm2630, %v2575
  %2634 = vst.msk [vmem:[%s3 + $0x18] sm:$0xff] %vm2630, %v2576
  %2635 = vst.msk [vmem:[%s3 + $0x20] sm:$0xff] %vm2630, %v2577
  %2636 = vst.msk [vmem:[%s3 + $0x28] sm:$0xff] %vm2630, %v2578
  %2637 = vst.msk [vmem:[%s3 + $0x30] sm:$0xff] %vm2630, %v2579
  %2638 = vst.msk [vmem:[%s3 + $0x38] sm:$0xff] %vm2630, %v2580
  %2639 = vst.msk [vmem:[%s3 + $0x40] sm:$0xff] %vm2630, %v2581
  %2640 = vst.msk [vmem:[%s3 + $0x48] sm:$0xff] %vm2630, %v2582
  %2641 = vst.msk [vmem:[%s3 + $0x50] sm:$0xff] %vm2630, %v2583
  %2642 = vst.msk [vmem:[%s3 + $0x58] sm:$0xff] %vm2630, %v2584
  %2643 = vst.msk [vmem:[%s3 + $0x60] sm:$0xff] %vm2630, %v2585
  %2644 = vst.msk [vmem:[%s3 + $0x68] sm:$0xff] %vm2630, %v2586
  %2645 = vst.msk [vmem:[%s3 + $0x70] sm:$0xff] %vm2630, %v2587
  %2646 = vst.msk [vmem:[%s3 + $0x78] sm:$0xff] %vm2630, %v2588
  %2647 = vst.msk [vmem:[%s3 + $0x80] sm:$0xff] %vm2630, %v2589
  %2648 = vst.msk [vmem:[%s3 + $0x88] sm:$0xff] %vm2630, %v2590
  %2649 = vst.msk [vmem:[%s3 + $0x90] sm:$0xff] %vm2630, %v2591
  %2650 = vst.msk [vmem:[%s3 + $0x98] sm:$0xff] %vm2630, %v2592
  %2651 = vst.msk [vmem:[%s3 + $0xa0] sm:$0xff] %vm2630, %v2593
  %2652 = vst.msk [vmem:[%s3 + $0xa8] sm:$0xff] %vm2630, %v2594
  %2653 = vst.msk [vmem:[%s3 + $0xb0] sm:$0xff] %vm2630, %v2595
  %2654 = vst.msk [vmem:[%s3 + $0xb8] sm:$0xff] %vm2630, %v2596
  %2655 = vst.msk [vmem:[%s3 + $0xc0] sm:$0xff] %vm2630, %v2597
  %2656 = vst.msk [vmem:[%s3 + $0xc8] sm:$0xff] %vm2630, %v2598
  %2657 = vst.msk [vmem:[%s3 + $0xd0] sm:$0xff] %vm2630, %v2599
  %2658 = vst.msk [vmem:[%s3 + $0xd8] sm:$0xff] %vm2630, %v2600
  %2659 = vst.msk [vmem:[%s3 + $0xe0] sm:$0xff] %vm2630, %v2601
  %2660 = vst.msk [vmem:[%s3 + $0xe8] sm:$0xff] %vm2630, %v2602
  %2661 = vst.msk [vmem:[%s3 + $0xf0] sm:$0xff] %vm2630, %v2603
  %2662 = vst.msk [vmem:[%s3 + $0xf8] sm:$0xff] %vm2630, %v2604
  %2663 = vst.msk [vmem:[%s3 + $0x100] sm:$0xff] %vm2630, %v2605
  %2664 = vst.msk [vmem:[%s3 + $0x108] sm:$0xff] %vm2630, %v2606
  %2665 = vst.msk [vmem:[%s3 + $0x110] sm:$0xff] %vm2630, %v2607
  %2666 = vst.msk [vmem:[%s3 + $0x118] sm:$0xff] %vm2630, %v2608
  %2667 = vst.msk [vmem:[%s3 + $0x120] sm:$0xff] %vm2630, %v2609
  %2668 = vst.msk [vmem:[%s3 + $0x128] sm:$0xff] %vm2630, %v2610
  %2669 = vst.msk [vmem:[%s3 + $0x130] sm:$0xff] %vm2630, %v2611
  %2670 = vst.msk [vmem:[%s3 + $0x138] sm:$0xff] %vm2630, %v2612
  %2671 = vst.msk [vmem:[%s3 + $0x140] sm:$0xff] %vm2630, %v2613
  %2672 = vst.msk [vmem:[%s3 + $0x148] sm:$0xff] %vm2630, %v2614
  %2673 = vst.msk [vmem:[%s3 + $0x150] sm:$0xff] %vm2630, %v2615
  %2674 = vst.msk [vmem:[%s3 + $0x158] sm:$0xff] %vm2630, %v2616
  %2675 = vst.msk [vmem:[%s3 + $0x160] sm:$0xff] %vm2630, %v2617
  %2676 = vst.msk [vmem:[%s3 + $0x168] sm:$0xff] %vm2630, %v2618
  %2677 = vst.msk [vmem:[%s3 + $0x170] sm:$0xff] %vm2630, %v2619
  %2678 = vst.msk [vmem:[%s3 + $0x178] sm:$0xff] %vm2630, %v2620
  %2679 = vst.msk [vmem:[%s3 + $0x180] sm:$0xff] %vm2630, %v2621
  %2680 = vst.msk [vmem:[%s3 + $0x188] sm:$0xff] %vm2630, %v2622
  %2681 = vst.msk [vmem:[%s3 + $0x190] sm:$0xff] %vm2630, %v2623
  %2682 = vst.msk [vmem:[%s3 + $0x198] sm:$0xff] %vm2630, %v2624
  %2683 = vst.msk [vmem:[%s3 + $0x1a0] sm:$0xff] %vm2630, %v2625
  %2684 = vst.msk [vmem:[%s3 + $0x1a8] sm:$0xff] %vm2630, %v2626
  %2685 = vst.msk [vmem:[%s3 + $0x1b0] sm:$0xff] %vm2630, %v2627
  %2686 = vst.msk [vmem:[%s3 + $0x1b8] sm:$0xff] %vm2630, %v2628
  %vm2687 = vcmask 123904
  %2688 = vst.msk [vmem:[%s3 + $0x1c0] sm:$0x3] %vm2687, %v2629
  // Predicated region
  $region14: #{cnn_forward.4} parent=0 // pred_check
    _
  $region15: #{cnn_forward.4} parent=0 // pred_check_branch
    %2690 = sbr.rel (0) target = $region17
  $region16: #{cnn_forward.4} parent=0 // pred_region
    _
  $region17: #{cnn_forward.4} parent=0 // pred_fallthru
    _
  // Predicated region
  $region18: #{cnn_forward.4} parent=0 // pred_check
    _
  $region19: #{cnn_forward.4} parent=0 // pred_check_branch
    %2692 = sbr.rel (0) target = $region21
  $region20: #{cnn_forward.4} parent=0 // pred_region
    _
  $region21: #{cnn_forward.4} parent=0 // pred_fallthru
    _

// kernel: cnn_forward.5
$region0: #{cnn_forward.5}
  #allocation0 [shape = 'u32[]', space=smem, size = 0x4, offset = 0x4, fixed_abs, tag = 'smem constant byte address 0x4 - core index']
  #allocation1 [shape = 'u32[144,128]{1,0:T(1,128)}', space=vmem, size = 0x12000, scoped, tag = 'internal scratch']
  %s0 = inlined_call_operand.vmem [shape: f32[4,72,256], index: 0, kind: input, shape index: {}]
  %s1 = inlined_call_operand.vmem [shape: f32[256,32], index: 1, kind: input, shape index: {}]
  %s2 = inlined_call_operand.vmem [shape: f32[1,32], index: 2, kind: input, shape index: {}]
  %s3 = inlined_call_operand.vmem [shape: f32[72,32], index: 3, kind: output, shape index: {}]
  %s4 = sld [smem:[#allocation0]]
  $region22: #{cnn_forward.5} parent=0
    _
  %s6 = ssub.s32 1, %s4
  %s7 = scalar_select 0, %s6, %s4
  // Predicated region
  $region2: #{cnn_forward.5} parent=0 // pred_check
    _
  $region3: #{cnn_forward.5} parent=0 // pred_check_branch
    %9 = sbr.rel (0) target = $region5
  $region4: #{cnn_forward.5} parent=0 // pred_region
    _
  $region5: #{cnn_forward.5} parent=0 // pred_fallthru
    _
  // Predicated region
  $region6: #{cnn_forward.5} parent=0 // pred_check
    _
  $region7: #{cnn_forward.5} parent=0 // pred_check_branch
    %11 = sbr.rel (0) target = $region9
  $region8: #{cnn_forward.5} parent=0 // pred_region
    _
  $region9: #{cnn_forward.5} parent=0 // pred_fallthru
    _
  // Predicated region
  $region10: #{cnn_forward.5} parent=0 // pred_check
    _
  $region11: #{cnn_forward.5} parent=0 // pred_check_branch
    %13 = sbr.rel (0) target = $region13
  $region12: #{cnn_forward.5} parent=0 // pred_region
    _
  $region13: #{cnn_forward.5} parent=0 // pred_fallthru
    _
  %v14 = vld [vmem:[%s0] sm:$0xff]
  %v15 = vld [vmem:[%s0 + $0x8] sm:$0xff]
  %v16 = vld [vmem:[%s0 + $0x10] sm:$0xff]
  %v17 = vld [vmem:[%s0 + $0x18] sm:$0xff]
  %v18 = vld [vmem:[%s0 + $0x20] sm:$0xff]
  %v19 = vld [vmem:[%s0 + $0x28] sm:$0xff]
  %v20 = vld [vmem:[%s0 + $0x30] sm:$0xff]
  %v21 = vld [vmem:[%s0 + $0x38] sm:$0xff]
  %v22 = vld [vmem:[%s0 + $0x40] sm:$0xff]
  %v23 = vld [vmem:[%s0 + $0x48] sm:$0xff]
  %v24 = vld [vmem:[%s0 + $0x50] sm:$0xff]
  %v25 = vld [vmem:[%s0 + $0x58] sm:$0xff]
  %v26 = vld [vmem:[%s0 + $0x60] sm:$0xff]
  %v27 = vld [vmem:[%s0 + $0x68] sm:$0xff]
  %v28 = vld [vmem:[%s0 + $0x70] sm:$0xff]
  %v29 = vld [vmem:[%s0 + $0x78] sm:$0xff]
  %v30 = vld [vmem:[%s0 + $0x80] sm:$0xff]
  %v31 = vld [vmem:[%s0 + $0x88] sm:$0xff]
  %v32 = vld [vmem:[%s1] sm:$0xff]
  %v33 = vld [vmem:[%s1 + $0x8] sm:$0xff]
  %v34 = vld [vmem:[%s1 + $0x10] sm:$0xff]
  %v35 = vld [vmem:[%s1 + $0x18] sm:$0xff]
  %v36 = vld [vmem:[%s1 + $0x20] sm:$0xff]
  %v37 = vld [vmem:[%s1 + $0x28] sm:$0xff]
  %v38 = vld [vmem:[%s1 + $0x30] sm:$0xff]
  %v39 = vld [vmem:[%s1 + $0x38] sm:$0xff]
  %v40 = vld [vmem:[%s1 + $0x40] sm:$0xff]
  %v41 = vld [vmem:[%s1 + $0x48] sm:$0xff]
  %v42 = vld [vmem:[%s1 + $0x50] sm:$0xff]
  %v43 = vld [vmem:[%s1 + $0x58] sm:$0xff]
  %v44 = vld [vmem:[%s1 + $0x60] sm:$0xff]
  %v45 = vld [vmem:[%s1 + $0x68] sm:$0xff]
  %v46 = vld [vmem:[%s1 + $0x70] sm:$0xff]
  %v47 = vld [vmem:[%s1 + $0x78] sm:$0xff]
  %v48 = vld [vmem:[%s1 + $0x80] sm:$0xff]
  %v49 = vld [vmem:[%s1 + $0x88] sm:$0xff]
  %v50 = vld [vmem:[%s1 + $0x90] sm:$0xff]
  %v51 = vld [vmem:[%s1 + $0x98] sm:$0xff]
  %v52 = vld [vmem:[%s1 + $0xa0] sm:$0xff]
  %v53 = vld [vmem:[%s1 + $0xa8] sm:$0xff]
  %v54 = vld [vmem:[%s1 + $0xb0] sm:$0xff]
  %v55 = vld [vmem:[%s1 + $0xb8] sm:$0xff]
  %v56 = vld [vmem:[%s1 + $0xc0] sm:$0xff]
  %v57 = vld [vmem:[%s1 + $0xc8] sm:$0xff]
  %v58 = vld [vmem:[%s1 + $0xd0] sm:$0xff]
  %v59 = vld [vmem:[%s1 + $0xd8] sm:$0xff]
  %v60 = vld [vmem:[%s1 + $0xe0] sm:$0xff]
  %v61 = vld [vmem:[%s1 + $0xe8] sm:$0xff]
  %v62 = vld [vmem:[%s1 + $0xf0] sm:$0xff]
  %v63 = vld [vmem:[%s1 + $0xf8] sm:$0xff]
  %64 = vmatprep.subr.mxu0 0.0
  %65 = vmatpush1.msra.mxu0 %v47
  %66 = vmatprep.subr.mxu0 0.0
  %67 = vmatpush1.msra.mxu0 %v46
  %68 = vmatprep.subr.mxu0 0.0
  %69 = vmatpush1.msra.mxu0 %v45
  %70 = vmatprep.subr.mxu0 0.0
  %71 = vmatpush1.msra.mxu0 %v44
  %72 = vmatprep.subr.mxu0 0.0
  %73 = vmatpush1.msra.mxu0 %v43
  %74 = vmatprep.subr.mxu0 0.0
  %75 = vmatpush1.msra.mxu0 %v42
  %76 = vmatprep.subr.mxu0 0.0
  %77 = vmatpush1.msra.mxu0 %v41
  %78 = vmatprep.subr.mxu0 0.0
  %79 = vmatpush1.msra.mxu0 %v40
  %80 = vmatprep.subr.mxu0 0.0
  %81 = vmatpush1.msra.mxu0 %v39
  %82 = vmatprep.subr.mxu0 0.0
  %83 = vmatpush1.msra.mxu0 %v38
  %84 = vmatprep.subr.mxu0 0.0
  %85 = vmatpush1.msra.mxu0 %v37
  %86 = vmatprep.subr.mxu0 0.0
  %87 = vmatpush1.msra.mxu0 %v36
  %88 = vmatprep.subr.mxu0 0.0
  %89 = vmatpush1.msra.mxu0 %v35
  %90 = vmatprep.subr.mxu0 0.0
  %91 = vmatpush1.msra.mxu0 %v34
  %92 = vmatprep.subr.mxu0 0.0
  %93 = vmatpush1.msra.mxu0 %v33
  %94 = vmatprep.subr.mxu0 0.0
  %95 = vmatpush1.msra.mxu0 %v32
  %96 = vmatprep.subr.mxu0 0.0
  %97 = vmatpush2.msra.mxu0 %v63
  %98 = vmatprep.subr.mxu0 0.0
  %99 = vmatpush2.msra.mxu0 %v62
  %100 = vmatprep.subr.mxu0 0.0
  %101 = vmatpush2.msra.mxu0 %v61
  %102 = vmatprep.subr.mxu0 0.0
  %103 = vmatpush2.msra.mxu0 %v60
  %104 = vmatprep.subr.mxu0 0.0
  %105 = vmatpush2.msra.mxu0 %v59
  %106 = vmatprep.subr.mxu0 0.0
  %107 = vmatpush2.msra.mxu0 %v58
  %108 = vmatprep.subr.mxu0 0.0
  %109 = vmatpush2.msra.mxu0 %v57
  %110 = vmatprep.subr.mxu0 0.0
  %111 = vmatpush2.msra.mxu0 %v56
  %112 = vmatprep.subr.mxu0 0.0
  %113 = vmatpush2.msra.mxu0 %v55
  %114 = vmatprep.subr.mxu0 0.0
  %115 = vmatpush2.msra.mxu0 %v54
  %116 = vmatprep.subr.mxu0 0.0
  %117 = vmatpush2.msra.mxu0 %v53
  %118 = vmatprep.subr.mxu0 0.0
  %119 = vmatpush2.msra.mxu0 %v52
  %120 = vmatprep.subr.mxu0 0.0
  %121 = vmatpush2.msra.mxu0 %v51
  %122 = vmatprep.subr.mxu0 0.0
  %123 = vmatpush2.msra.mxu0 %v50
  %124 = vmatprep.subr.mxu0 0.0
  %125 = vmatpush2.msra.mxu0 %v49
  %126 = vmatprep.subr.mxu0 0.0
  %127 = vmatpush2.msra.mxu0 %v48
  %128 = vmatprep.mubr.f32.mxu0 %v15
  %129 = vmatmul.mubr.f32.gmra.mxu0 %v14
  %v130 = vpop.f32.mrf.mxu0
  %v131 = vadd.f32 0.0, %v130
  %v132 = vpop.f32.mrf.mxu0
  %133 = vmatprep.mubr.f32.mxu0 %v17
  %134 = vmatmul.mubr.f32.gmra.mxu0 %v16
  %v135 = vpop.f32.mrf.mxu0
  %v136 = vadd.f32 0.0, %v135
  %v137 = vpop.f32.mrf.mxu0
  %138 = vmatprep.mubr.f32.mxu0 %v19
  %139 = vmatmul.mubr.f32.gmra.mxu0 %v18
  %v140 = vpop.f32.mrf.mxu0
  %v141 = vadd.f32 0.0, %v140
  %v142 = vpop.f32.mrf.mxu0
  %143 = vmatprep.mubr.f32.mxu0 %v21
  %144 = vmatmul.mubr.f32.gmra.mxu0 %v20
  %v145 = vpop.f32.mrf.mxu0
  %v146 = vadd.f32 0.0, %v145
  %v147 = vpop.f32.mrf.mxu0
  %148 = vmatprep.mubr.f32.mxu0 %v23
  %149 = vmatmul.mubr.f32.gmra.mxu0 %v22
  %v150 = vpop.f32.mrf.mxu0
  %v151 = vadd.f32 0.0, %v150
  %v152 = vpop.f32.mrf.mxu0
  %153 = vmatprep.mubr.f32.mxu0 %v25
  %154 = vmatmul.mubr.f32.gmra.mxu0 %v24
  %v155 = vpop.f32.mrf.mxu0
  %v156 = vadd.f32 0.0, %v155
  %v157 = vpop.f32.mrf.mxu0
  %158 = vmatprep.mubr.f32.mxu0 %v27
  %159 = vmatmul.mubr.f32.gmra.mxu0 %v26
  %v160 = vpop.f32.mrf.mxu0
  %v161 = vadd.f32 0.0, %v160
  %v162 = vpop.f32.mrf.mxu0
  %163 = vmatprep.mubr.f32.mxu0 %v29
  %164 = vmatmul.mubr.f32.gmra.mxu0 %v28
  %v165 = vpop.f32.mrf.mxu0
  %v166 = vadd.f32 0.0, %v165
  %v167 = vpop.f32.mrf.mxu0
  %168 = vmatprep.mubr.f32.mxu0 %v31
  %169 = vmatmul.mubr.f32.gmra.mxu0 %v30
  %v170 = vpop.f32.mrf.mxu0
  %v171 = vadd.f32 0.0, %v170
  %v172 = vpop.f32.mrf.mxu0
  %173 = vdwg.mxu0
  %s174 = scalar_lea.vmem %s0, 144
  %v175 = vld [vmem:[%s174] sm:$0xff]
  %v176 = vld [vmem:[%s174 + $0x8] sm:$0xff]
  %v177 = vld [vmem:[%s174 + $0x10] sm:$0xff]
  %v178 = vld [vmem:[%s174 + $0x18] sm:$0xff]
  %v179 = vld [vmem:[%s174 + $0x20] sm:$0xff]
  %v180 = vld [vmem:[%s174 + $0x28] sm:$0xff]
  %v181 = vld [vmem:[%s174 + $0x30] sm:$0xff]
  %v182 = vld [vmem:[%s174 + $0x38] sm:$0xff]
  %v183 = vld [vmem:[%s174 + $0x40] sm:$0xff]
  %v184 = vld [vmem:[%s174 + $0x48] sm:$0xff]
  %v185 = vld [vmem:[%s174 + $0x50] sm:$0xff]
  %v186 = vld [vmem:[%s174 + $0x58] sm:$0xff]
  %v187 = vld [vmem:[%s174 + $0x60] sm:$0xff]
  %v188 = vld [vmem:[%s174 + $0x68] sm:$0xff]
  %v189 = vld [vmem:[%s174 + $0x70] sm:$0xff]
  %v190 = vld [vmem:[%s174 + $0x78] sm:$0xff]
  %v191 = vld [vmem:[%s174 + $0x80] sm:$0xff]
  %v192 = vld [vmem:[%s174 + $0x88] sm:$0xff]
  %193 = vmatprep.subr.mxu0 0.0
  %194 = vmatpush1.msra.mxu0 %v47
  %195 = vmatprep.subr.mxu0 0.0
  %196 = vmatpush1.msra.mxu0 %v46
  %197 = vmatprep.subr.mxu0 0.0
  %198 = vmatpush1.msra.mxu0 %v45
  %199 = vmatprep.subr.mxu0 0.0
  %200 = vmatpush1.msra.mxu0 %v44
  %201 = vmatprep.subr.mxu0 0.0
  %202 = vmatpush1.msra.mxu0 %v43
  %203 = vmatprep.subr.mxu0 0.0
  %204 = vmatpush1.msra.mxu0 %v42
  %205 = vmatprep.subr.mxu0 0.0
  %206 = vmatpush1.msra.mxu0 %v41
  %207 = vmatprep.subr.mxu0 0.0
  %208 = vmatpush1.msra.mxu0 %v40
  %209 = vmatprep.subr.mxu0 0.0
  %210 = vmatpush1.msra.mxu0 %v39
  %211 = vmatprep.subr.mxu0 0.0
  %212 = vmatpush1.msra.mxu0 %v38
  %213 = vmatprep.subr.mxu0 0.0
  %214 = vmatpush1.msra.mxu0 %v37
  %215 = vmatprep.subr.mxu0 0.0
  %216 = vmatpush1.msra.mxu0 %v36
  %217 = vmatprep.subr.mxu0 0.0
  %218 = vmatpush1.msra.mxu0 %v35
  %219 = vmatprep.subr.mxu0 0.0
  %220 = vmatpush1.msra.mxu0 %v34
  %221 = vmatprep.subr.mxu0 0.0
  %222 = vmatpush1.msra.mxu0 %v33
  %223 = vmatprep.subr.mxu0 0.0
  %224 = vmatpush1.msra.mxu0 %v32
  %225 = vmatprep.subr.mxu0 0.0
  %226 = vmatpush2.msra.mxu0 %v63
  %227 = vmatprep.subr.mxu0 0.0
  %228 = vmatpush2.msra.mxu0 %v62
  %229 = vmatprep.subr.mxu0 0.0
  %230 = vmatpush2.msra.mxu0 %v61
  %231 = vmatprep.subr.mxu0 0.0
  %232 = vmatpush2.msra.mxu0 %v60
  %233 = vmatprep.subr.mxu0 0.0
  %234 = vmatpush2.msra.mxu0 %v59
  %235 = vmatprep.subr.mxu0 0.0
  %236 = vmatpush2.msra.mxu0 %v58
  %237 = vmatprep.subr.mxu0 0.0
  %238 = vmatpush2.msra.mxu0 %v57
  %239 = vmatprep.subr.mxu0 0.0
  %240 = vmatpush2.msra.mxu0 %v56
  %241 = vmatprep.subr.mxu0 0.0
  %242 = vmatpush2.msra.mxu0 %v55
  %243 = vmatprep.subr.mxu0 0.0
  %244 = vmatpush2.msra.mxu0 %v54
  %245 = vmatprep.subr.mxu0 0.0
  %246 = vmatpush2.msra.mxu0 %v53
  %247 = vmatprep.subr.mxu0 0.0
  %248 = vmatpush2.msra.mxu0 %v52
  %249 = vmatprep.subr.mxu0 0.0
  %250 = vmatpush2.msra.mxu0 %v51
  %251 = vmatprep.subr.mxu0 0.0
  %252 = vmatpush2.msra.mxu0 %v50
  %253 = vmatprep.subr.mxu0 0.0
  %254 = vmatpush2.msra.mxu0 %v49
  %255 = vmatprep.subr.mxu0 0.0
  %256 = vmatpush2.msra.mxu0 %v48
  %257 = vmatprep.mubr.f32.mxu0 %v176
  %258 = vmatmul.mubr.f32.gmra.mxu0 %v175
  %v259 = vpop.f32.mrf.mxu0
  %v260 = vadd.f32 0.0, %v259
  %v261 = vpop.f32.mrf.mxu0
  %262 = vmatprep.mubr.f32.mxu0 %v178
  %263 = vmatmul.mubr.f32.gmra.mxu0 %v177
  %v264 = vpop.f32.mrf.mxu0
  %v265 = vadd.f32 0.0, %v264
  %v266 = vpop.f32.mrf.mxu0
  %267 = vmatprep.mubr.f32.mxu0 %v180
  %268 = vmatmul.mubr.f32.gmra.mxu0 %v179
  %v269 = vpop.f32.mrf.mxu0
  %v270 = vadd.f32 0.0, %v269
  %v271 = vpop.f32.mrf.mxu0
  %272 = vmatprep.mubr.f32.mxu0 %v182
  %273 = vmatmul.mubr.f32.gmra.mxu0 %v181
  %v274 = vpop.f32.mrf.mxu0
  %v275 = vadd.f32 0.0, %v274
  %v276 = vpop.f32.mrf.mxu0
  %277 = vmatprep.mubr.f32.mxu0 %v184
  %278 = vmatmul.mubr.f32.gmra.mxu0 %v183
  %v279 = vpop.f32.mrf.mxu0
  %v280 = vadd.f32 0.0, %v279
  %v281 = vpop.f32.mrf.mxu0
  %282 = vmatprep.mubr.f32.mxu0 %v186
  %283 = vmatmul.mubr.f32.gmra.mxu0 %v185
  %v284 = vpop.f32.mrf.mxu0
  %v285 = vadd.f32 0.0, %v284
  %v286 = vpop.f32.mrf.mxu0
  %287 = vmatprep.mubr.f32.mxu0 %v188
  %288 = vmatmul.mubr.f32.gmra.mxu0 %v187
  %v289 = vpop.f32.mrf.mxu0
  %v290 = vadd.f32 0.0, %v289
  %v291 = vpop.f32.mrf.mxu0
  %292 = vmatprep.mubr.f32.mxu0 %v190
  %293 = vmatmul.mubr.f32.gmra.mxu0 %v189
  %v294 = vpop.f32.mrf.mxu0
  %v295 = vadd.f32 0.0, %v294
  %v296 = vpop.f32.mrf.mxu0
  %297 = vmatprep.mubr.f32.mxu0 %v192
  %298 = vmatmul.mubr.f32.gmra.mxu0 %v191
  %v299 = vpop.f32.mrf.mxu0
  %v300 = vadd.f32 0.0, %v299
  %v301 = vpop.f32.mrf.mxu0
  %302 = vdwg.mxu0
  %v303 = vmax.f32 %v131, %v260
  %v304 = vmax.f32 %v136, %v265
  %v305 = vmax.f32 %v141, %v270
  %v306 = vmax.f32 %v146, %v275
  %v307 = vmax.f32 %v151, %v280
  %v308 = vmax.f32 %v156, %v285
  %v309 = vmax.f32 %v161, %v290
  %v310 = vmax.f32 %v166, %v295
  %v311 = vmax.f32 %v171, %v300
  %s312 = scalar_lea.vmem %s0, 288
  %v313 = vld [vmem:[%s312] sm:$0xff]
  %v314 = vld [vmem:[%s312 + $0x8] sm:$0xff]
  %v315 = vld [vmem:[%s312 + $0x10] sm:$0xff]
  %v316 = vld [vmem:[%s312 + $0x18] sm:$0xff]
  %v317 = vld [vmem:[%s312 + $0x20] sm:$0xff]
  %v318 = vld [vmem:[%s312 + $0x28] sm:$0xff]
  %v319 = vld [vmem:[%s312 + $0x30] sm:$0xff]
  %v320 = vld [vmem:[%s312 + $0x38] sm:$0xff]
  %v321 = vld [vmem:[%s312 + $0x40] sm:$0xff]
  %v322 = vld [vmem:[%s312 + $0x48] sm:$0xff]
  %v323 = vld [vmem:[%s312 + $0x50] sm:$0xff]
  %v324 = vld [vmem:[%s312 + $0x58] sm:$0xff]
  %v325 = vld [vmem:[%s312 + $0x60] sm:$0xff]
  %v326 = vld [vmem:[%s312 + $0x68] sm:$0xff]
  %v327 = vld [vmem:[%s312 + $0x70] sm:$0xff]
  %v328 = vld [vmem:[%s312 + $0x78] sm:$0xff]
  %v329 = vld [vmem:[%s312 + $0x80] sm:$0xff]
  %v330 = vld [vmem:[%s312 + $0x88] sm:$0xff]
  %331 = vmatprep.subr.mxu0 0.0
  %332 = vmatpush1.msra.mxu0 %v47
  %333 = vmatprep.subr.mxu0 0.0
  %334 = vmatpush1.msra.mxu0 %v46
  %335 = vmatprep.subr.mxu0 0.0
  %336 = vmatpush1.msra.mxu0 %v45
  %337 = vmatprep.subr.mxu0 0.0
  %338 = vmatpush1.msra.mxu0 %v44
  %339 = vmatprep.subr.mxu0 0.0
  %340 = vmatpush1.msra.mxu0 %v43
  %341 = vmatprep.subr.mxu0 0.0
  %342 = vmatpush1.msra.mxu0 %v42
  %343 = vmatprep.subr.mxu0 0.0
  %344 = vmatpush1.msra.mxu0 %v41
  %345 = vmatprep.subr.mxu0 0.0
  %346 = vmatpush1.msra.mxu0 %v40
  %347 = vmatprep.subr.mxu0 0.0
  %348 = vmatpush1.msra.mxu0 %v39
  %349 = vmatprep.subr.mxu0 0.0
  %350 = vmatpush1.msra.mxu0 %v38
  %351 = vmatprep.subr.mxu0 0.0
  %352 = vmatpush1.msra.mxu0 %v37
  %353 = vmatprep.subr.mxu0 0.0
  %354 = vmatpush1.msra.mxu0 %v36
  %355 = vmatprep.subr.mxu0 0.0
  %356 = vmatpush1.msra.mxu0 %v35
  %357 = vmatprep.subr.mxu0 0.0
  %358 = vmatpush1.msra.mxu0 %v34
  %359 = vmatprep.subr.mxu0 0.0
  %360 = vmatpush1.msra.mxu0 %v33
  %361 = vmatprep.subr.mxu0 0.0
  %362 = vmatpush1.msra.mxu0 %v32
  %363 = vmatprep.subr.mxu0 0.0
  %364 = vmatpush2.msra.mxu0 %v63
  %365 = vmatprep.subr.mxu0 0.0
  %366 = vmatpush2.msra.mxu0 %v62
  %367 = vmatprep.subr.mxu0 0.0
  %368 = vmatpush2.msra.mxu0 %v61
  %369 = vmatprep.subr.mxu0 0.0
  %370 = vmatpush2.msra.mxu0 %v60
  %371 = vmatprep.subr.mxu0 0.0
  %372 = vmatpush2.msra.mxu0 %v59
  %373 = vmatprep.subr.mxu0 0.0
  %374 = vmatpush2.msra.mxu0 %v58
  %375 = vmatprep.subr.mxu0 0.0
  %376 = vmatpush2.msra.mxu0 %v57
  %377 = vmatprep.subr.mxu0 0.0
  %378 = vmatpush2.msra.mxu0 %v56
  %379 = vmatprep.subr.mxu0 0.0
  %380 = vmatpush2.msra.mxu0 %v55
  %381 = vmatprep.subr.mxu0 0.0
  %382 = vmatpush2.msra.mxu0 %v54
  %383 = vmatprep.subr.mxu0 0.0
  %384 = vmatpush2.msra.mxu0 %v53
  %385 = vmatprep.subr.mxu0 0.0
  %386 = vmatpush2.msra.mxu0 %v52
  %387 = vmatprep.subr.mxu0 0.0
  %388 = vmatpush2.msra.mxu0 %v51
  %389 = vmatprep.subr.mxu0 0.0
  %390 = vmatpush2.msra.mxu0 %v50
  %391 = vmatprep.subr.mxu0 0.0
  %392 = vmatpush2.msra.mxu0 %v49
  %393 = vmatprep.subr.mxu0 0.0
  %394 = vmatpush2.msra.mxu0 %v48
  %395 = vmatprep.mubr.f32.mxu0 %v314
  %396 = vmatmul.mubr.f32.gmra.mxu0 %v313
  %v397 = vpop.f32.mrf.mxu0
  %v398 = vadd.f32 0.0, %v397
  %v399 = vpop.f32.mrf.mxu0
  %400 = vmatprep.mubr.f32.mxu0 %v316
  %401 = vmatmul.mubr.f32.gmra.mxu0 %v315
  %v402 = vpop.f32.mrf.mxu0
  %v403 = vadd.f32 0.0, %v402
  %v404 = vpop.f32.mrf.mxu0
  %405 = vmatprep.mubr.f32.mxu0 %v318
  %406 = vmatmul.mubr.f32.gmra.mxu0 %v317
  %v407 = vpop.f32.mrf.mxu0
  %v408 = vadd.f32 0.0, %v407
  %v409 = vpop.f32.mrf.mxu0
  %410 = vmatprep.mubr.f32.mxu0 %v320
  %411 = vmatmul.mubr.f32.gmra.mxu0 %v319
  %v412 = vpop.f32.mrf.mxu0
  %v413 = vadd.f32 0.0, %v412
  %v414 = vpop.f32.mrf.mxu0
  %415 = vmatprep.mubr.f32.mxu0 %v322
  %416 = vmatmul.mubr.f32.gmra.mxu0 %v321
  %v417 = vpop.f32.mrf.mxu0
  %v418 = vadd.f32 0.0, %v417
  %v419 = vpop.f32.mrf.mxu0
  %420 = vmatprep.mubr.f32.mxu0 %v324
  %421 = vmatmul.mubr.f32.gmra.mxu0 %v323
  %v422 = vpop.f32.mrf.mxu0
  %v423 = vadd.f32 0.0, %v422
  %v424 = vpop.f32.mrf.mxu0
  %425 = vmatprep.mubr.f32.mxu0 %v326
  %426 = vmatmul.mubr.f32.gmra.mxu0 %v325
  %v427 = vpop.f32.mrf.mxu0
  %v428 = vadd.f32 0.0, %v427
  %v429 = vpop.f32.mrf.mxu0
  %430 = vmatprep.mubr.f32.mxu0 %v328
  %431 = vmatmul.mubr.f32.gmra.mxu0 %v327
  %v432 = vpop.f32.mrf.mxu0
  %v433 = vadd.f32 0.0, %v432
  %v434 = vpop.f32.mrf.mxu0
  %435 = vmatprep.mubr.f32.mxu0 %v330
  %436 = vmatmul.mubr.f32.gmra.mxu0 %v329
  %v437 = vpop.f32.mrf.mxu0
  %v438 = vadd.f32 0.0, %v437
  %v439 = vpop.f32.mrf.mxu0
  %440 = vdwg.mxu0
  %v441 = vmax.f32 %v303, %v398
  %v442 = vmax.f32 %v304, %v403
  %v443 = vmax.f32 %v305, %v408
  %v444 = vmax.f32 %v306, %v413
  %v445 = vmax.f32 %v307, %v418
  %v446 = vmax.f32 %v308, %v423
  %v447 = vmax.f32 %v309, %v428
  %v448 = vmax.f32 %v310, %v433
  %v449 = vmax.f32 %v311, %v438
  %s450 = scalar_lea.vmem %s0, 432
  %v451 = vld [vmem:[%s450] sm:$0xff]
  %v452 = vld [vmem:[%s450 + $0x8] sm:$0xff]
  %v453 = vld [vmem:[%s450 + $0x10] sm:$0xff]
  %v454 = vld [vmem:[%s450 + $0x18] sm:$0xff]
  %v455 = vld [vmem:[%s450 + $0x20] sm:$0xff]
  %v456 = vld [vmem:[%s450 + $0x28] sm:$0xff]
  %v457 = vld [vmem:[%s450 + $0x30] sm:$0xff]
  %v458 = vld [vmem:[%s450 + $0x38] sm:$0xff]
  %v459 = vld [vmem:[%s450 + $0x40] sm:$0xff]
  %v460 = vld [vmem:[%s450 + $0x48] sm:$0xff]
  %v461 = vld [vmem:[%s450 + $0x50] sm:$0xff]
  %v462 = vld [vmem:[%s450 + $0x58] sm:$0xff]
  %v463 = vld [vmem:[%s450 + $0x60] sm:$0xff]
  %v464 = vld [vmem:[%s450 + $0x68] sm:$0xff]
  %v465 = vld [vmem:[%s450 + $0x70] sm:$0xff]
  %v466 = vld [vmem:[%s450 + $0x78] sm:$0xff]
  %v467 = vld [vmem:[%s450 + $0x80] sm:$0xff]
  %v468 = vld [vmem:[%s450 + $0x88] sm:$0xff]
  %469 = vmatprep.subr.mxu0 0.0
  %470 = vmatpush1.msra.mxu0 %v47
  %471 = vmatprep.subr.mxu0 0.0
  %472 = vmatpush1.msra.mxu0 %v46
  %473 = vmatprep.subr.mxu0 0.0
  %474 = vmatpush1.msra.mxu0 %v45
  %475 = vmatprep.subr.mxu0 0.0
  %476 = vmatpush1.msra.mxu0 %v44
  %477 = vmatprep.subr.mxu0 0.0
  %478 = vmatpush1.msra.mxu0 %v43
  %479 = vmatprep.subr.mxu0 0.0
  %480 = vmatpush1.msra.mxu0 %v42
  %481 = vmatprep.subr.mxu0 0.0
  %482 = vmatpush1.msra.mxu0 %v41
  %483 = vmatprep.subr.mxu0 0.0
  %484 = vmatpush1.msra.mxu0 %v40
  %485 = vmatprep.subr.mxu0 0.0
  %486 = vmatpush1.msra.mxu0 %v39
  %487 = vmatprep.subr.mxu0 0.0
  %488 = vmatpush1.msra.mxu0 %v38
  %489 = vmatprep.subr.mxu0 0.0
  %490 = vmatpush1.msra.mxu0 %v37
  %491 = vmatprep.subr.mxu0 0.0
  %492 = vmatpush1.msra.mxu0 %v36
  %493 = vmatprep.subr.mxu0 0.0
  %494 = vmatpush1.msra.mxu0 %v35
  %495 = vmatprep.subr.mxu0 0.0
  %496 = vmatpush1.msra.mxu0 %v34
  %497 = vmatprep.subr.mxu0 0.0
  %498 = vmatpush1.msra.mxu0 %v33
  %499 = vmatprep.subr.mxu0 0.0
  %500 = vmatpush1.msra.mxu0 %v32
  %501 = vmatprep.subr.mxu0 0.0
  %502 = vmatpush2.msra.mxu0 %v63
  %503 = vmatprep.subr.mxu0 0.0
  %504 = vmatpush2.msra.mxu0 %v62
  %505 = vmatprep.subr.mxu0 0.0
  %506 = vmatpush2.msra.mxu0 %v61
  %507 = vmatprep.subr.mxu0 0.0
  %508 = vmatpush2.msra.mxu0 %v60
  %509 = vmatprep.subr.mxu0 0.0
  %510 = vmatpush2.msra.mxu0 %v59
  %511 = vmatprep.subr.mxu0 0.0
  %512 = vmatpush2.msra.mxu0 %v58
  %513 = vmatprep.subr.mxu0 0.0
  %514 = vmatpush2.msra.mxu0 %v57
  %515 = vmatprep.subr.mxu0 0.0
  %516 = vmatpush2.msra.mxu0 %v56
  %517 = vmatprep.subr.mxu0 0.0
  %518 = vmatpush2.msra.mxu0 %v55
  %519 = vmatprep.subr.mxu0 0.0
  %520 = vmatpush2.msra.mxu0 %v54
  %521 = vmatprep.subr.mxu0 0.0
  %522 = vmatpush2.msra.mxu0 %v53
  %523 = vmatprep.subr.mxu0 0.0
  %524 = vmatpush2.msra.mxu0 %v52
  %525 = vmatprep.subr.mxu0 0.0
  %526 = vmatpush2.msra.mxu0 %v51
  %527 = vmatprep.subr.mxu0 0.0
  %528 = vmatpush2.msra.mxu0 %v50
  %529 = vmatprep.subr.mxu0 0.0
  %530 = vmatpush2.msra.mxu0 %v49
  %531 = vmatprep.subr.mxu0 0.0
  %532 = vmatpush2.msra.mxu0 %v48
  %533 = vmatprep.mubr.f32.mxu0 %v452
  %534 = vmatmul.mubr.f32.gmra.mxu0 %v451
  %v535 = vpop.f32.mrf.mxu0
  %v536 = vadd.f32 0.0, %v535
  %v537 = vpop.f32.mrf.mxu0
  %538 = vmatprep.mubr.f32.mxu0 %v454
  %539 = vmatmul.mubr.f32.gmra.mxu0 %v453
  %v540 = vpop.f32.mrf.mxu0
  %v541 = vadd.f32 0.0, %v540
  %v542 = vpop.f32.mrf.mxu0
  %543 = vmatprep.mubr.f32.mxu0 %v456
  %544 = vmatmul.mubr.f32.gmra.mxu0 %v455
  %v545 = vpop.f32.mrf.mxu0
  %v546 = vadd.f32 0.0, %v545
  %v547 = vpop.f32.mrf.mxu0
  %548 = vmatprep.mubr.f32.mxu0 %v458
  %549 = vmatmul.mubr.f32.gmra.mxu0 %v457
  %v550 = vpop.f32.mrf.mxu0
  %v551 = vadd.f32 0.0, %v550
  %v552 = vpop.f32.mrf.mxu0
  %553 = vmatprep.mubr.f32.mxu0 %v460
  %554 = vmatmul.mubr.f32.gmra.mxu0 %v459
  %v555 = vpop.f32.mrf.mxu0
  %v556 = vadd.f32 0.0, %v555
  %v557 = vpop.f32.mrf.mxu0
  %558 = vmatprep.mubr.f32.mxu0 %v462
  %559 = vmatmul.mubr.f32.gmra.mxu0 %v461
  %v560 = vpop.f32.mrf.mxu0
  %v561 = vadd.f32 0.0, %v560
  %v562 = vpop.f32.mrf.mxu0
  %563 = vmatprep.mubr.f32.mxu0 %v464
  %564 = vmatmul.mubr.f32.gmra.mxu0 %v463
  %v565 = vpop.f32.mrf.mxu0
  %v566 = vadd.f32 0.0, %v565
  %v567 = vpop.f32.mrf.mxu0
  %568 = vmatprep.mubr.f32.mxu0 %v466
  %569 = vmatmul.mubr.f32.gmra.mxu0 %v465
  %v570 = vpop.f32.mrf.mxu0
  %v571 = vadd.f32 0.0, %v570
  %v572 = vpop.f32.mrf.mxu0
  %573 = vmatprep.mubr.f32.mxu0 %v468
  %574 = vmatmul.mubr.f32.gmra.mxu0 %v467
  %v575 = vpop.f32.mrf.mxu0
  %v576 = vadd.f32 0.0, %v575
  %v577 = vpop.f32.mrf.mxu0
  %578 = vdwg.mxu0
  %v579 = vmax.f32 %v441, %v536
  %v580 = vmax.f32 %v442, %v541
  %v581 = vmax.f32 %v443, %v546
  %v582 = vmax.f32 %v444, %v551
  %v583 = vmax.f32 %v445, %v556
  %v584 = vmax.f32 %v446, %v561
  %v585 = vmax.f32 %v447, %v566
  %v586 = vmax.f32 %v448, %v571
  %v587 = vmax.f32 %v449, %v576
  %v588 = vld [vmem:[%s2] sm:$0x1]
  %v590 = vlaneseq
  %v591 = vshrl.u32 %v590, 7
  %v592 = vsub.s32 0, %v591
  %v593 = vrot.slane %v588, %v592
  %v595 = vadd.f32 %v579, %v593
  %v596 = vadd.f32 %v580, %v593
  %v597 = vadd.f32 %v581, %v593
  %v598 = vadd.f32 %v582, %v593
  %v599 = vadd.f32 %v583, %v593
  %v600 = vadd.f32 %v584, %v593
  %v601 = vadd.f32 %v585, %v593
  %v602 = vadd.f32 %v586, %v593
  %v603 = vadd.f32 %v587, %v593
  %v604 = vmax.f32 %v595, 0.0
  %v605 = vmax.f32 %v596, 0.0
  %v606 = vmax.f32 %v597, 0.0
  %v607 = vmax.f32 %v598, 0.0
  %v608 = vmax.f32 %v599, 0.0
  %v609 = vmax.f32 %v600, 0.0
  %v610 = vmax.f32 %v601, 0.0
  %v611 = vmax.f32 %v602, 0.0
  %v612 = vmax.f32 %v603, 0.0
  %vm613 = vcmask 261120
  %614 = vst.msk [vmem:[%s3] sm:$0xff] %vm613, %v604
  %615 = vst.msk [vmem:[%s3 + $0x8] sm:$0xff] %vm613, %v605
  %616 = vst.msk [vmem:[%s3 + $0x10] sm:$0xff] %vm613, %v606
  %617 = vst.msk [vmem:[%s3 + $0x18] sm:$0xff] %vm613, %v607
  %618 = vst.msk [vmem:[%s3 + $0x20] sm:$0xff] %vm613, %v608
  %619 = vst.msk [vmem:[%s3 + $0x28] sm:$0xff] %vm613, %v609
  %620 = vst.msk [vmem:[%s3 + $0x30] sm:$0xff] %vm613, %v610
  %621 = vst.msk [vmem:[%s3 + $0x38] sm:$0xff] %vm613, %v611
  %622 = vst.msk [vmem:[%s3 + $0x40] sm:$0xff] %vm613, %v612
  // Predicated region
  $region14: #{cnn_forward.5} parent=0 // pred_check
    _
  $region15: #{cnn_forward.5} parent=0 // pred_check_branch
    %624 = sbr.rel (0) target = $region17
  $region16: #{cnn_forward.5} parent=0 // pred_region
    _
  $region17: #{cnn_forward.5} parent=0 // pred_fallthru
    _
  // Predicated region
  $region18: #{cnn_forward.5} parent=0 // pred_check
    _
  $region19: #{cnn_forward.5} parent=0 // pred_check_branch
    %626 = sbr.rel (0) target = $region21
  $region20: #{cnn_forward.5} parent=0 // pred_region
    _
  $region21: #{cnn_forward.5} parent=0 // pred_fallthru
    _

// kernel: cnn_forward.6
$region0: #{cnn_forward.6}
  #allocation0 [shape = 'u32[]', space=smem, size = 0x4, offset = 0x4, fixed_abs, tag = 'smem constant byte address 0x4 - core index']
  #allocation1 [shape = 'u32[144,128]{1,0:T(1,128)}', space=vmem, size = 0x12000, scoped, tag = 'internal scratch']
  %s0 = inlined_call_operand.vmem [shape: f32[4,8,288], index: 0, kind: input, shape index: {}]
  %s1 = inlined_call_operand.vmem [shape: f32[288,64], index: 1, kind: input, shape index: {}]
  %s2 = inlined_call_operand.vmem [shape: f32[1,64], index: 2, kind: input, shape index: {}]
  %s3 = inlined_call_operand.vmem [shape: f32[8,64], index: 3, kind: output, shape index: {}]
  %s4 = sld [smem:[#allocation0]]
  $region22: #{cnn_forward.6} parent=0
    _
  %s6 = ssub.s32 1, %s4
  %s7 = scalar_select 0, %s6, %s4
  // Predicated region
  $region2: #{cnn_forward.6} parent=0 // pred_check
    _
  $region3: #{cnn_forward.6} parent=0 // pred_check_branch
    %9 = sbr.rel (0) target = $region5
  $region4: #{cnn_forward.6} parent=0 // pred_region
    _
  $region5: #{cnn_forward.6} parent=0 // pred_fallthru
    _
  // Predicated region
  $region6: #{cnn_forward.6} parent=0 // pred_check
    _
  $region7: #{cnn_forward.6} parent=0 // pred_check_branch
    %11 = sbr.rel (0) target = $region9
  $region8: #{cnn_forward.6} parent=0 // pred_region
    _
  $region9: #{cnn_forward.6} parent=0 // pred_fallthru
    _
  // Predicated region
  $region10: #{cnn_forward.6} parent=0 // pred_check
    _
  $region11: #{cnn_forward.6} parent=0 // pred_check_branch
    %13 = sbr.rel (0) target = $region13
  $region12: #{cnn_forward.6} parent=0 // pred_region
    _
  $region13: #{cnn_forward.6} parent=0 // pred_fallthru
    _
  %v14 = vld [vmem:[%s0] sm:$0xff]
  %v15 = vld [vmem:[%s0 + $0x8] sm:$0xff]
  %v16 = vld [vmem:[%s0 + $0x10] sm:$0xff]
  %v17 = vld [vmem:[%s1] sm:$0xff]
  %v18 = vld [vmem:[%s1 + $0x8] sm:$0xff]
  %v19 = vld [vmem:[%s1 + $0x10] sm:$0xff]
  %v20 = vld [vmem:[%s1 + $0x18] sm:$0xff]
  %v21 = vld [vmem:[%s1 + $0x20] sm:$0xff]
  %v22 = vld [vmem:[%s1 + $0x28] sm:$0xff]
  %v23 = vld [vmem:[%s1 + $0x30] sm:$0xff]
  %v24 = vld [vmem:[%s1 + $0x38] sm:$0xff]
  %v25 = vld [vmem:[%s1 + $0x40] sm:$0xff]
  %v26 = vld [vmem:[%s1 + $0x48] sm:$0xff]
  %v27 = vld [vmem:[%s1 + $0x50] sm:$0xff]
  %v28 = vld [vmem:[%s1 + $0x58] sm:$0xff]
  %v29 = vld [vmem:[%s1 + $0x60] sm:$0xff]
  %v30 = vld [vmem:[%s1 + $0x68] sm:$0xff]
  %v31 = vld [vmem:[%s1 + $0x70] sm:$0xff]
  %v32 = vld [vmem:[%s1 + $0x78] sm:$0xff]
  %v33 = vld [vmem:[%s1 + $0x80] sm:$0xff]
  %v34 = vld [vmem:[%s1 + $0x88] sm:$0xff]
  %v35 = vld [vmem:[%s1 + $0x90] sm:$0xff]
  %v36 = vld [vmem:[%s1 + $0x98] sm:$0xff]
  %v37 = vld [vmem:[%s1 + $0xa0] sm:$0xff]
  %v38 = vld [vmem:[%s1 + $0xa8] sm:$0xff]
  %v39 = vld [vmem:[%s1 + $0xb0] sm:$0xff]
  %v40 = vld [vmem:[%s1 + $0xb8] sm:$0xff]
  %v41 = vld [vmem:[%s1 + $0xc0] sm:$0xff]
  %v42 = vld [vmem:[%s1 + $0xc8] sm:$0xff]
  %v43 = vld [vmem:[%s1 + $0xd0] sm:$0xff]
  %v44 = vld [vmem:[%s1 + $0xd8] sm:$0xff]
  %v45 = vld [vmem:[%s1 + $0xe0] sm:$0xff]
  %v46 = vld [vmem:[%s1 + $0xe8] sm:$0xff]
  %v47 = vld [vmem:[%s1 + $0xf0] sm:$0xff]
  %v48 = vld [vmem:[%s1 + $0xf8] sm:$0xff]
  %v49 = vld [vmem:[%s1 + $0x100] sm:$0xff]
  %v50 = vld [vmem:[%s1 + $0x108] sm:$0xff]
  %v51 = vld [vmem:[%s1 + $0x110] sm:$0xff]
  %v52 = vld [vmem:[%s1 + $0x118] sm:$0xff]
  %vm53 = vcmask 261120
  %v55 = vsel %vm53, %v16, 0
  %57 = vmatprep.subr.mxu0 0.0
  %58 = vmatpush1.msra.mxu0 %v32
  %59 = vmatprep.subr.mxu0 0.0
  %60 = vmatpush1.msra.mxu0 %v31
  %61 = vmatprep.subr.mxu0 0.0
  %62 = vmatpush1.msra.mxu0 %v30
  %63 = vmatprep.subr.mxu0 0.0
  %64 = vmatpush1.msra.mxu0 %v29
  %65 = vmatprep.subr.mxu0 0.0
  %66 = vmatpush1.msra.mxu0 %v28
  %67 = vmatprep.subr.mxu0 0.0
  %68 = vmatpush1.msra.mxu0 %v27
  %69 = vmatprep.subr.mxu0 0.0
  %70 = vmatpush1.msra.mxu0 %v26
  %71 = vmatprep.subr.mxu0 0.0
  %72 = vmatpush1.msra.mxu0 %v25
  %73 = vmatprep.subr.mxu0 0.0
  %74 = vmatpush1.msra.mxu0 %v24
  %75 = vmatprep.subr.mxu0 0.0
  %76 = vmatpush1.msra.mxu0 %v23
  %77 = vmatprep.subr.mxu0 0.0
  %78 = vmatpush1.msra.mxu0 %v22
  %79 = vmatprep.subr.mxu0 0.0
  %80 = vmatpush1.msra.mxu0 %v21
  %81 = vmatprep.subr.mxu0 0.0
  %82 = vmatpush1.msra.mxu0 %v20
  %83 = vmatprep.subr.mxu0 0.0
  %84 = vmatpush1.msra.mxu0 %v19
  %85 = vmatprep.subr.mxu0 0.0
  %86 = vmatpush1.msra.mxu0 %v18
  %87 = vmatprep.subr.mxu0 0.0
  %88 = vmatpush1.msra.mxu0 %v17
  %89 = vmatprep.subr.mxu0 0.0
  %90 = vmatpush2.msra.mxu0 %v48
  %91 = vmatprep.subr.mxu0 0.0
  %92 = vmatpush2.msra.mxu0 %v47
  %93 = vmatprep.subr.mxu0 0.0
  %94 = vmatpush2.msra.mxu0 %v46
  %95 = vmatprep.subr.mxu0 0.0
  %96 = vmatpush2.msra.mxu0 %v45
  %97 = vmatprep.subr.mxu0 0.0
  %98 = vmatpush2.msra.mxu0 %v44
  %99 = vmatprep.subr.mxu0 0.0
  %100 = vmatpush2.msra.mxu0 %v43
  %101 = vmatprep.subr.mxu0 0.0
  %102 = vmatpush2.msra.mxu0 %v42
  %103 = vmatprep.subr.mxu0 0.0
  %104 = vmatpush2.msra.mxu0 %v41
  %105 = vmatprep.subr.mxu0 0.0
  %106 = vmatpush2.msra.mxu0 %v40
  %107 = vmatprep.subr.mxu0 0.0
  %108 = vmatpush2.msra.mxu0 %v39
  %109 = vmatprep.subr.mxu0 0.0
  %110 = vmatpush2.msra.mxu0 %v38
  %111 = vmatprep.subr.mxu0 0.0
  %112 = vmatpush2.msra.mxu0 %v37
  %113 = vmatprep.subr.mxu0 0.0
  %114 = vmatpush2.msra.mxu0 %v36
  %115 = vmatprep.subr.mxu0 0.0
  %116 = vmatpush2.msra.mxu0 %v35
  %117 = vmatprep.subr.mxu0 0.0
  %118 = vmatpush2.msra.mxu0 %v34
  %119 = vmatprep.subr.mxu0 0.0
  %120 = vmatpush2.msra.mxu0 %v33
  %121 = vmatprep.mubr.f32.mxu0 %v15
  %122 = vmatmul.mubr.f32.gmra.mxu0 %v14
  %v123 = vpop.f32.mrf.mxu0
  %v124 = vadd.f32 0.0, %v123
  %v125 = vpop.f32.mrf.mxu0
  %126 = vdwg.mxu0
  %127 = vmatprep.subr.mxu0 0.0
  %128 = vmatpush1.msra.mxu0 0.0
  %129 = vmatprep.subr.mxu0 0.0
  %130 = vmatpush1.msra.mxu0 0.0
  %131 = vmatprep.subr.mxu0 0.0
  %132 = vmatpush1.msra.mxu0 0.0
  %133 = vmatprep.subr.mxu0 0.0
  %134 = vmatpush1.msra.mxu0 0.0
  %135 = vmatprep.subr.mxu0 0.0
  %136 = vmatpush1.msra.mxu0 0.0
  %137 = vmatprep.subr.mxu0 0.0
  %138 = vmatpush1.msra.mxu0 0.0
  %139 = vmatprep.subr.mxu0 0.0
  %140 = vmatpush1.msra.mxu0 0.0
  %141 = vmatprep.subr.mxu0 0.0
  %142 = vmatpush1.msra.mxu0 0.0
  %143 = vmatprep.subr.mxu0 0.0
  %144 = vmatpush1.msra.mxu0 0.0
  %145 = vmatprep.subr.mxu0 0.0
  %146 = vmatpush1.msra.mxu0 0.0
  %147 = vmatprep.subr.mxu0 0.0
  %148 = vmatpush1.msra.mxu0 0.0
  %149 = vmatprep.subr.mxu0 0.0
  %150 = vmatpush1.msra.mxu0 0.0
  %151 = vmatprep.subr.mxu0 0.0
  %152 = vmatpush1.msra.mxu0 %v52
  %153 = vmatprep.subr.mxu0 0.0
  %154 = vmatpush1.msra.mxu0 %v51
  %155 = vmatprep.subr.mxu0 0.0
  %156 = vmatpush1.msra.mxu0 %v50
  %157 = vmatprep.subr.mxu0 0.0
  %158 = vmatpush1.msra.mxu0 %v49
  %159 = vmatprep.subr.mxu0 0.0
  %160 = vmatpush2.msra.mxu0 0.0
  %161 = vmatprep.subr.mxu0 0.0
  %162 = vmatpush2.msra.mxu0 0.0
  %163 = vmatprep.subr.mxu0 0.0
  %164 = vmatpush2.msra.mxu0 0.0
  %165 = vmatprep.subr.mxu0 0.0
  %166 = vmatpush2.msra.mxu0 0.0
  %167 = vmatprep.subr.mxu0 0.0
  %168 = vmatpush2.msra.mxu0 0.0
  %169 = vmatprep.subr.mxu0 0.0
  %170 = vmatpush2.msra.mxu0 0.0
  %171 = vmatprep.subr.mxu0 0.0
  %172 = vmatpush2.msra.mxu0 0.0
  %173 = vmatprep.subr.mxu0 0.0
  %174 = vmatpush2.msra.mxu0 0.0
  %175 = vmatprep.subr.mxu0 0.0
  %176 = vmatpush2.msra.mxu0 0.0
  %177 = vmatprep.subr.mxu0 0.0
  %178 = vmatpush2.msra.mxu0 0.0
  %179 = vmatprep.subr.mxu0 0.0
  %180 = vmatpush2.msra.mxu0 0.0
  %181 = vmatprep.subr.mxu0 0.0
  %182 = vmatpush2.msra.mxu0 0.0
  %183 = vmatprep.subr.mxu0 0.0
  %184 = vmatpush2.msra.mxu0 0.0
  %185 = vmatprep.subr.mxu0 0.0
  %186 = vmatpush2.msra.mxu0 0.0
  %187 = vmatprep.subr.mxu0 0.0
  %188 = vmatpush2.msra.mxu0 0.0
  %189 = vmatprep.subr.mxu0 0.0
  %190 = vmatpush2.msra.mxu0 0.0
  %191 = vmatprep.mubr.f32.mxu0 0.0
  %192 = vmatmul.mubr.f32.gmra.mxu0 %v55
  %v193 = vpop.f32.mrf.mxu0
  %v194 = vadd.f32 %v124, %v193
  %v195 = vpop.f32.mrf.mxu0
  %196 = vdwg.mxu0
  %s197 = scalar_lea.vmem %s0, 24
  %v198 = vld [vmem:[%s197] sm:$0xff]
  %v199 = vld [vmem:[%s197 + $0x8] sm:$0xff]
  %v200 = vld [vmem:[%s197 + $0x10] sm:$0xff]
  %v202 = vsel %vm53, %v200, 0
  %204 = vmatprep.subr.mxu0 0.0
  %205 = vmatpush1.msra.mxu0 %v32
  %206 = vmatprep.subr.mxu0 0.0
  %207 = vmatpush1.msra.mxu0 %v31
  %208 = vmatprep.subr.mxu0 0.0
  %209 = vmatpush1.msra.mxu0 %v30
  %210 = vmatprep.subr.mxu0 0.0
  %211 = vmatpush1.msra.mxu0 %v29
  %212 = vmatprep.subr.mxu0 0.0
  %213 = vmatpush1.msra.mxu0 %v28
  %214 = vmatprep.subr.mxu0 0.0
  %215 = vmatpush1.msra.mxu0 %v27
  %216 = vmatprep.subr.mxu0 0.0
  %217 = vmatpush1.msra.mxu0 %v26
  %218 = vmatprep.subr.mxu0 0.0
  %219 = vmatpush1.msra.mxu0 %v25
  %220 = vmatprep.subr.mxu0 0.0
  %221 = vmatpush1.msra.mxu0 %v24
  %222 = vmatprep.subr.mxu0 0.0
  %223 = vmatpush1.msra.mxu0 %v23
  %224 = vmatprep.subr.mxu0 0.0
  %225 = vmatpush1.msra.mxu0 %v22
  %226 = vmatprep.subr.mxu0 0.0
  %227 = vmatpush1.msra.mxu0 %v21
  %228 = vmatprep.subr.mxu0 0.0
  %229 = vmatpush1.msra.mxu0 %v20
  %230 = vmatprep.subr.mxu0 0.0
  %231 = vmatpush1.msra.mxu0 %v19
  %232 = vmatprep.subr.mxu0 0.0
  %233 = vmatpush1.msra.mxu0 %v18
  %234 = vmatprep.subr.mxu0 0.0
  %235 = vmatpush1.msra.mxu0 %v17
  %236 = vmatprep.subr.mxu0 0.0
  %237 = vmatpush2.msra.mxu0 %v48
  %238 = vmatprep.subr.mxu0 0.0
  %239 = vmatpush2.msra.mxu0 %v47
  %240 = vmatprep.subr.mxu0 0.0
  %241 = vmatpush2.msra.mxu0 %v46
  %242 = vmatprep.subr.mxu0 0.0
  %243 = vmatpush2.msra.mxu0 %v45
  %244 = vmatprep.subr.mxu0 0.0
  %245 = vmatpush2.msra.mxu0 %v44
  %246 = vmatprep.subr.mxu0 0.0
  %247 = vmatpush2.msra.mxu0 %v43
  %248 = vmatprep.subr.mxu0 0.0
  %249 = vmatpush2.msra.mxu0 %v42
  %250 = vmatprep.subr.mxu0 0.0
  %251 = vmatpush2.msra.mxu0 %v41
  %252 = vmatprep.subr.mxu0 0.0
  %253 = vmatpush2.msra.mxu0 %v40
  %254 = vmatprep.subr.mxu0 0.0
  %255 = vmatpush2.msra.mxu0 %v39
  %256 = vmatprep.subr.mxu0 0.0
  %257 = vmatpush2.msra.mxu0 %v38
  %258 = vmatprep.subr.mxu0 0.0
  %259 = vmatpush2.msra.mxu0 %v37
  %260 = vmatprep.subr.mxu0 0.0
  %261 = vmatpush2.msra.mxu0 %v36
  %262 = vmatprep.subr.mxu0 0.0
  %263 = vmatpush2.msra.mxu0 %v35
  %264 = vmatprep.subr.mxu0 0.0
  %265 = vmatpush2.msra.mxu0 %v34
  %266 = vmatprep.subr.mxu0 0.0
  %267 = vmatpush2.msra.mxu0 %v33
  %268 = vmatprep.mubr.f32.mxu0 %v199
  %269 = vmatmul.mubr.f32.gmra.mxu0 %v198
  %v270 = vpop.f32.mrf.mxu0
  %v271 = vadd.f32 0.0, %v270
  %v272 = vpop.f32.mrf.mxu0
  %273 = vdwg.mxu0
  %274 = vmatprep.subr.mxu0 0.0
  %275 = vmatpush1.msra.mxu0 0.0
  %276 = vmatprep.subr.mxu0 0.0
  %277 = vmatpush1.msra.mxu0 0.0
  %278 = vmatprep.subr.mxu0 0.0
  %279 = vmatpush1.msra.mxu0 0.0
  %280 = vmatprep.subr.mxu0 0.0
  %281 = vmatpush1.msra.mxu0 0.0
  %282 = vmatprep.subr.mxu0 0.0
  %283 = vmatpush1.msra.mxu0 0.0
  %284 = vmatprep.subr.mxu0 0.0
  %285 = vmatpush1.msra.mxu0 0.0
  %286 = vmatprep.subr.mxu0 0.0
  %287 = vmatpush1.msra.mxu0 0.0
  %288 = vmatprep.subr.mxu0 0.0
  %289 = vmatpush1.msra.mxu0 0.0
  %290 = vmatprep.subr.mxu0 0.0
  %291 = vmatpush1.msra.mxu0 0.0
  %292 = vmatprep.subr.mxu0 0.0
  %293 = vmatpush1.msra.mxu0 0.0
  %294 = vmatprep.subr.mxu0 0.0
  %295 = vmatpush1.msra.mxu0 0.0
  %296 = vmatprep.subr.mxu0 0.0
  %297 = vmatpush1.msra.mxu0 0.0
  %298 = vmatprep.subr.mxu0 0.0
  %299 = vmatpush1.msra.mxu0 %v52
  %300 = vmatprep.subr.mxu0 0.0
  %301 = vmatpush1.msra.mxu0 %v51
  %302 = vmatprep.subr.mxu0 0.0
  %303 = vmatpush1.msra.mxu0 %v50
  %304 = vmatprep.subr.mxu0 0.0
  %305 = vmatpush1.msra.mxu0 %v49
  %306 = vmatprep.subr.mxu0 0.0
  %307 = vmatpush2.msra.mxu0 0.0
  %308 = vmatprep.subr.mxu0 0.0
  %309 = vmatpush2.msra.mxu0 0.0
  %310 = vmatprep.subr.mxu0 0.0
  %311 = vmatpush2.msra.mxu0 0.0
  %312 = vmatprep.subr.mxu0 0.0
  %313 = vmatpush2.msra.mxu0 0.0
  %314 = vmatprep.subr.mxu0 0.0
  %315 = vmatpush2.msra.mxu0 0.0
  %316 = vmatprep.subr.mxu0 0.0
  %317 = vmatpush2.msra.mxu0 0.0
  %318 = vmatprep.subr.mxu0 0.0
  %319 = vmatpush2.msra.mxu0 0.0
  %320 = vmatprep.subr.mxu0 0.0
  %321 = vmatpush2.msra.mxu0 0.0
  %322 = vmatprep.subr.mxu0 0.0
  %323 = vmatpush2.msra.mxu0 0.0
  %324 = vmatprep.subr.mxu0 0.0
  %325 = vmatpush2.msra.mxu0 0.0
  %326 = vmatprep.subr.mxu0 0.0
  %327 = vmatpush2.msra.mxu0 0.0
  %328 = vmatprep.subr.mxu0 0.0
  %329 = vmatpush2.msra.mxu0 0.0
  %330 = vmatprep.subr.mxu0 0.0
  %331 = vmatpush2.msra.mxu0 0.0
  %332 = vmatprep.subr.mxu0 0.0
  %333 = vmatpush2.msra.mxu0 0.0
  %334 = vmatprep.subr.mxu0 0.0
  %335 = vmatpush2.msra.mxu0 0.0
  %336 = vmatprep.subr.mxu0 0.0
  %337 = vmatpush2.msra.mxu0 0.0
  %338 = vmatprep.mubr.f32.mxu0 0.0
  %339 = vmatmul.mubr.f32.gmra.mxu0 %v202
  %v340 = vpop.f32.mrf.mxu0
  %v341 = vadd.f32 %v271, %v340
  %v342 = vpop.f32.mrf.mxu0
  %343 = vdwg.mxu0
  %v344 = vmax.f32 %v194, %v341
  %s345 = scalar_lea.vmem %s0, 48
  %v346 = vld [vmem:[%s345] sm:$0xff]
  %v347 = vld [vmem:[%s345 + $0x8] sm:$0xff]
  %v348 = vld [vmem:[%s345 + $0x10] sm:$0xff]
  %v350 = vsel %vm53, %v348, 0
  %352 = vmatprep.subr.mxu0 0.0
  %353 = vmatpush1.msra.mxu0 %v32
  %354 = vmatprep.subr.mxu0 0.0
  %355 = vmatpush1.msra.mxu0 %v31
  %356 = vmatprep.subr.mxu0 0.0
  %357 = vmatpush1.msra.mxu0 %v30
  %358 = vmatprep.subr.mxu0 0.0
  %359 = vmatpush1.msra.mxu0 %v29
  %360 = vmatprep.subr.mxu0 0.0
  %361 = vmatpush1.msra.mxu0 %v28
  %362 = vmatprep.subr.mxu0 0.0
  %363 = vmatpush1.msra.mxu0 %v27
  %364 = vmatprep.subr.mxu0 0.0
  %365 = vmatpush1.msra.mxu0 %v26
  %366 = vmatprep.subr.mxu0 0.0
  %367 = vmatpush1.msra.mxu0 %v25
  %368 = vmatprep.subr.mxu0 0.0
  %369 = vmatpush1.msra.mxu0 %v24
  %370 = vmatprep.subr.mxu0 0.0
  %371 = vmatpush1.msra.mxu0 %v23
  %372 = vmatprep.subr.mxu0 0.0
  %373 = vmatpush1.msra.mxu0 %v22
  %374 = vmatprep.subr.mxu0 0.0
  %375 = vmatpush1.msra.mxu0 %v21
  %376 = vmatprep.subr.mxu0 0.0
  %377 = vmatpush1.msra.mxu0 %v20
  %378 = vmatprep.subr.mxu0 0.0
  %379 = vmatpush1.msra.mxu0 %v19
  %380 = vmatprep.subr.mxu0 0.0
  %381 = vmatpush1.msra.mxu0 %v18
  %382 = vmatprep.subr.mxu0 0.0
  %383 = vmatpush1.msra.mxu0 %v17
  %384 = vmatprep.subr.mxu0 0.0
  %385 = vmatpush2.msra.mxu0 %v48
  %386 = vmatprep.subr.mxu0 0.0
  %387 = vmatpush2.msra.mxu0 %v47
  %388 = vmatprep.subr.mxu0 0.0
  %389 = vmatpush2.msra.mxu0 %v46
  %390 = vmatprep.subr.mxu0 0.0
  %391 = vmatpush2.msra.mxu0 %v45
  %392 = vmatprep.subr.mxu0 0.0
  %393 = vmatpush2.msra.mxu0 %v44
  %394 = vmatprep.subr.mxu0 0.0
  %395 = vmatpush2.msra.mxu0 %v43
  %396 = vmatprep.subr.mxu0 0.0
  %397 = vmatpush2.msra.mxu0 %v42
  %398 = vmatprep.subr.mxu0 0.0
  %399 = vmatpush2.msra.mxu0 %v41
  %400 = vmatprep.subr.mxu0 0.0
  %401 = vmatpush2.msra.mxu0 %v40
  %402 = vmatprep.subr.mxu0 0.0
  %403 = vmatpush2.msra.mxu0 %v39
  %404 = vmatprep.subr.mxu0 0.0
  %405 = vmatpush2.msra.mxu0 %v38
  %406 = vmatprep.subr.mxu0 0.0
  %407 = vmatpush2.msra.mxu0 %v37
  %408 = vmatprep.subr.mxu0 0.0
  %409 = vmatpush2.msra.mxu0 %v36
  %410 = vmatprep.subr.mxu0 0.0
  %411 = vmatpush2.msra.mxu0 %v35
  %412 = vmatprep.subr.mxu0 0.0
  %413 = vmatpush2.msra.mxu0 %v34
  %414 = vmatprep.subr.mxu0 0.0
  %415 = vmatpush2.msra.mxu0 %v33
  %416 = vmatprep.mubr.f32.mxu0 %v347
  %417 = vmatmul.mubr.f32.gmra.mxu0 %v346
  %v418 = vpop.f32.mrf.mxu0
  %v419 = vadd.f32 0.0, %v418
  %v420 = vpop.f32.mrf.mxu0
  %421 = vdwg.mxu0
  %422 = vmatprep.subr.mxu0 0.0
  %423 = vmatpush1.msra.mxu0 0.0
  %424 = vmatprep.subr.mxu0 0.0
  %425 = vmatpush1.msra.mxu0 0.0
  %426 = vmatprep.subr.mxu0 0.0
  %427 = vmatpush1.msra.mxu0 0.0
  %428 = vmatprep.subr.mxu0 0.0
  %429 = vmatpush1.msra.mxu0 0.0
  %430 = vmatprep.subr.mxu0 0.0
  %431 = vmatpush1.msra.mxu0 0.0
  %432 = vmatprep.subr.mxu0 0.0
  %433 = vmatpush1.msra.mxu0 0.0
  %434 = vmatprep.subr.mxu0 0.0
  %435 = vmatpush1.msra.mxu0 0.0
  %436 = vmatprep.subr.mxu0 0.0
  %437 = vmatpush1.msra.mxu0 0.0
  %438 = vmatprep.subr.mxu0 0.0
  %439 = vmatpush1.msra.mxu0 0.0
  %440 = vmatprep.subr.mxu0 0.0
  %441 = vmatpush1.msra.mxu0 0.0
  %442 = vmatprep.subr.mxu0 0.0
  %443 = vmatpush1.msra.mxu0 0.0
  %444 = vmatprep.subr.mxu0 0.0
  %445 = vmatpush1.msra.mxu0 0.0
  %446 = vmatprep.subr.mxu0 0.0
  %447 = vmatpush1.msra.mxu0 %v52
  %448 = vmatprep.subr.mxu0 0.0
  %449 = vmatpush1.msra.mxu0 %v51
  %450 = vmatprep.subr.mxu0 0.0
  %451 = vmatpush1.msra.mxu0 %v50
  %452 = vmatprep.subr.mxu0 0.0
  %453 = vmatpush1.msra.mxu0 %v49
  %454 = vmatprep.subr.mxu0 0.0
  %455 = vmatpush2.msra.mxu0 0.0
  %456 = vmatprep.subr.mxu0 0.0
  %457 = vmatpush2.msra.mxu0 0.0
  %458 = vmatprep.subr.mxu0 0.0
  %459 = vmatpush2.msra.mxu0 0.0
  %460 = vmatprep.subr.mxu0 0.0
  %461 = vmatpush2.msra.mxu0 0.0
  %462 = vmatprep.subr.mxu0 0.0
  %463 = vmatpush2.msra.mxu0 0.0
  %464 = vmatprep.subr.mxu0 0.0
  %465 = vmatpush2.msra.mxu0 0.0
  %466 = vmatprep.subr.mxu0 0.0
  %467 = vmatpush2.msra.mxu0 0.0
  %468 = vmatprep.subr.mxu0 0.0
  %469 = vmatpush2.msra.mxu0 0.0
  %470 = vmatprep.subr.mxu0 0.0
  %471 = vmatpush2.msra.mxu0 0.0
  %472 = vmatprep.subr.mxu0 0.0
  %473 = vmatpush2.msra.mxu0 0.0
  %474 = vmatprep.subr.mxu0 0.0
  %475 = vmatpush2.msra.mxu0 0.0
  %476 = vmatprep.subr.mxu0 0.0
  %477 = vmatpush2.msra.mxu0 0.0
  %478 = vmatprep.subr.mxu0 0.0
  %479 = vmatpush2.msra.mxu0 0.0
  %480 = vmatprep.subr.mxu0 0.0
  %481 = vmatpush2.msra.mxu0 0.0
  %482 = vmatprep.subr.mxu0 0.0
  %483 = vmatpush2.msra.mxu0 0.0
  %484 = vmatprep.subr.mxu0 0.0
  %485 = vmatpush2.msra.mxu0 0.0
  %486 = vmatprep.mubr.f32.mxu0 0.0
  %487 = vmatmul.mubr.f32.gmra.mxu0 %v350
  %v488 = vpop.f32.mrf.mxu0
  %v489 = vadd.f32 %v419, %v488
  %v490 = vpop.f32.mrf.mxu0
  %491 = vdwg.mxu0
  %v492 = vmax.f32 %v344, %v489
  %s493 = scalar_lea.vmem %s0, 72
  %v494 = vld [vmem:[%s493] sm:$0xff]
  %v495 = vld [vmem:[%s493 + $0x8] sm:$0xff]
  %v496 = vld [vmem:[%s493 + $0x10] sm:$0xff]
  %v498 = vsel %vm53, %v496, 0
  %500 = vmatprep.subr.mxu0 0.0
  %501 = vmatpush1.msra.mxu0 %v32
  %502 = vmatprep.subr.mxu0 0.0
  %503 = vmatpush1.msra.mxu0 %v31
  %504 = vmatprep.subr.mxu0 0.0
  %505 = vmatpush1.msra.mxu0 %v30
  %506 = vmatprep.subr.mxu0 0.0
  %507 = vmatpush1.msra.mxu0 %v29
  %508 = vmatprep.subr.mxu0 0.0
  %509 = vmatpush1.msra.mxu0 %v28
  %510 = vmatprep.subr.mxu0 0.0
  %511 = vmatpush1.msra.mxu0 %v27
  %512 = vmatprep.subr.mxu0 0.0
  %513 = vmatpush1.msra.mxu0 %v26
  %514 = vmatprep.subr.mxu0 0.0
  %515 = vmatpush1.msra.mxu0 %v25
  %516 = vmatprep.subr.mxu0 0.0
  %517 = vmatpush1.msra.mxu0 %v24
  %518 = vmatprep.subr.mxu0 0.0
  %519 = vmatpush1.msra.mxu0 %v23
  %520 = vmatprep.subr.mxu0 0.0
  %521 = vmatpush1.msra.mxu0 %v22
  %522 = vmatprep.subr.mxu0 0.0
  %523 = vmatpush1.msra.mxu0 %v21
  %524 = vmatprep.subr.mxu0 0.0
  %525 = vmatpush1.msra.mxu0 %v20
  %526 = vmatprep.subr.mxu0 0.0
  %527 = vmatpush1.msra.mxu0 %v19
  %528 = vmatprep.subr.mxu0 0.0
  %529 = vmatpush1.msra.mxu0 %v18
  %530 = vmatprep.subr.mxu0 0.0
  %531 = vmatpush1.msra.mxu0 %v17
  %532 = vmatprep.subr.mxu0 0.0
  %533 = vmatpush2.msra.mxu0 %v48
  %534 = vmatprep.subr.mxu0 0.0
  %535 = vmatpush2.msra.mxu0 %v47
  %536 = vmatprep.subr.mxu0 0.0
  %537 = vmatpush2.msra.mxu0 %v46
  %538 = vmatprep.subr.mxu0 0.0
  %539 = vmatpush2.msra.mxu0 %v45
  %540 = vmatprep.subr.mxu0 0.0
  %541 = vmatpush2.msra.mxu0 %v44
  %542 = vmatprep.subr.mxu0 0.0
  %543 = vmatpush2.msra.mxu0 %v43
  %544 = vmatprep.subr.mxu0 0.0
  %545 = vmatpush2.msra.mxu0 %v42
  %546 = vmatprep.subr.mxu0 0.0
  %547 = vmatpush2.msra.mxu0 %v41
  %548 = vmatprep.subr.mxu0 0.0
  %549 = vmatpush2.msra.mxu0 %v40
  %550 = vmatprep.subr.mxu0 0.0
  %551 = vmatpush2.msra.mxu0 %v39
  %552 = vmatprep.subr.mxu0 0.0
  %553 = vmatpush2.msra.mxu0 %v38
  %554 = vmatprep.subr.mxu0 0.0
  %555 = vmatpush2.msra.mxu0 %v37
  %556 = vmatprep.subr.mxu0 0.0
  %557 = vmatpush2.msra.mxu0 %v36
  %558 = vmatprep.subr.mxu0 0.0
  %559 = vmatpush2.msra.mxu0 %v35
  %560 = vmatprep.subr.mxu0 0.0
  %561 = vmatpush2.msra.mxu0 %v34
  %562 = vmatprep.subr.mxu0 0.0
  %563 = vmatpush2.msra.mxu0 %v33
  %564 = vmatprep.mubr.f32.mxu0 %v495
  %565 = vmatmul.mubr.f32.gmra.mxu0 %v494
  %v566 = vpop.f32.mrf.mxu0
  %v567 = vadd.f32 0.0, %v566
  %v568 = vpop.f32.mrf.mxu0
  %569 = vdwg.mxu0
  %570 = vmatprep.subr.mxu0 0.0
  %571 = vmatpush1.msra.mxu0 0.0
  %572 = vmatprep.subr.mxu0 0.0
  %573 = vmatpush1.msra.mxu0 0.0
  %574 = vmatprep.subr.mxu0 0.0
  %575 = vmatpush1.msra.mxu0 0.0
  %576 = vmatprep.subr.mxu0 0.0
  %577 = vmatpush1.msra.mxu0 0.0
  %578 = vmatprep.subr.mxu0 0.0
  %579 = vmatpush1.msra.mxu0 0.0
  %580 = vmatprep.subr.mxu0 0.0
  %581 = vmatpush1.msra.mxu0 0.0
  %582 = vmatprep.subr.mxu0 0.0
  %583 = vmatpush1.msra.mxu0 0.0
  %584 = vmatprep.subr.mxu0 0.0
  %585 = vmatpush1.msra.mxu0 0.0
  %586 = vmatprep.subr.mxu0 0.0
  %587 = vmatpush1.msra.mxu0 0.0
  %588 = vmatprep.subr.mxu0 0.0
  %589 = vmatpush1.msra.mxu0 0.0
  %590 = vmatprep.subr.mxu0 0.0
  %591 = vmatpush1.msra.mxu0 0.0
  %592 = vmatprep.subr.mxu0 0.0
  %593 = vmatpush1.msra.mxu0 0.0
  %594 = vmatprep.subr.mxu0 0.0
  %595 = vmatpush1.msra.mxu0 %v52
  %596 = vmatprep.subr.mxu0 0.0
  %597 = vmatpush1.msra.mxu0 %v51
  %598 = vmatprep.subr.mxu0 0.0
  %599 = vmatpush1.msra.mxu0 %v50
  %600 = vmatprep.subr.mxu0 0.0
  %601 = vmatpush1.msra.mxu0 %v49
  %602 = vmatprep.subr.mxu0 0.0
  %603 = vmatpush2.msra.mxu0 0.0
  %604 = vmatprep.subr.mxu0 0.0
  %605 = vmatpush2.msra.mxu0 0.0
  %606 = vmatprep.subr.mxu0 0.0
  %607 = vmatpush2.msra.mxu0 0.0
  %608 = vmatprep.subr.mxu0 0.0
  %609 = vmatpush2.msra.mxu0 0.0
  %610 = vmatprep.subr.mxu0 0.0
  %611 = vmatpush2.msra.mxu0 0.0
  %612 = vmatprep.subr.mxu0 0.0
  %613 = vmatpush2.msra.mxu0 0.0
  %614 = vmatprep.subr.mxu0 0.0
  %615 = vmatpush2.msra.mxu0 0.0
  %616 = vmatprep.subr.mxu0 0.0
  %617 = vmatpush2.msra.mxu0 0.0
  %618 = vmatprep.subr.mxu0 0.0
  %619 = vmatpush2.msra.mxu0 0.0
  %620 = vmatprep.subr.mxu0 0.0
  %621 = vmatpush2.msra.mxu0 0.0
  %622 = vmatprep.subr.mxu0 0.0
  %623 = vmatpush2.msra.mxu0 0.0
  %624 = vmatprep.subr.mxu0 0.0
  %625 = vmatpush2.msra.mxu0 0.0
  %626 = vmatprep.subr.mxu0 0.0
  %627 = vmatpush2.msra.mxu0 0.0
  %628 = vmatprep.subr.mxu0 0.0
  %629 = vmatpush2.msra.mxu0 0.0
  %630 = vmatprep.subr.mxu0 0.0
  %631 = vmatpush2.msra.mxu0 0.0
  %632 = vmatprep.subr.mxu0 0.0
  %633 = vmatpush2.msra.mxu0 0.0
  %634 = vmatprep.mubr.f32.mxu0 0.0
  %635 = vmatmul.mubr.f32.gmra.mxu0 %v498
  %v636 = vpop.f32.mrf.mxu0
  %v637 = vadd.f32 %v567, %v636
  %v638 = vpop.f32.mrf.mxu0
  %639 = vdwg.mxu0
  %v640 = vmax.f32 %v492, %v637
  %v641 = vld [vmem:[%s2] sm:$0x1]
  %v643 = vlaneseq
  %v644 = vshrl.u32 %v643, 7
  %v645 = vsub.s32 0, %v644
  %v646 = vrot.slane %v641, %v645
  %v648 = vadd.f32 %v640, %v646
  %v649 = vmax.f32 %v648, 0.0
  %vm650 = vcmask 523264
  %651 = vst.msk [vmem:[%s3] sm:$0xff] %vm650, %v649
  // Predicated region
  $region14: #{cnn_forward.6} parent=0 // pred_check
    _
  $region15: #{cnn_forward.6} parent=0 // pred_check_branch
    %653 = sbr.rel (0) target = $region17
  $region16: #{cnn_forward.6} parent=0 // pred_region
    _
  $region17: #{cnn_forward.6} parent=0 // pred_fallthru
    _
  // Predicated region
  $region18: #{cnn_forward.6} parent=0 // pred_check
    _
  $region19: #{cnn_forward.6} parent=0 // pred_check_branch
    %655 = sbr.rel (0) target = $region21
  $region20: #{cnn_forward.6} parent=0 // pred_region
    _
  $region21: #{cnn_forward.6} parent=0 // pred_fallthru
    _

// kernel: cnn_forward.7
$region0: #{cnn_forward.7}
  #allocation0 [shape = 'u32[]', space=smem, size = 0x4, offset = 0x4, fixed_abs, tag = 'smem constant byte address 0x4 - core index']
  #allocation1 [shape = 'u32[144,128]{1,0:T(1,128)}', space=vmem, size = 0x12000, scoped, tag = 'internal scratch']
  %s0 = inlined_call_operand.vmem [shape: f32[2,256], index: 0, kind: input, shape index: {}]
  %s1 = inlined_call_operand.vmem [shape: f32[256,64], index: 1, kind: input, shape index: {}]
  %s2 = inlined_call_operand.vmem [shape: f32[1,64], index: 2, kind: input, shape index: {}]
  %s3 = inlined_call_operand.vmem [shape: f32[64,10], index: 3, kind: input, shape index: {}]
  %s4 = inlined_call_operand.vmem [shape: f32[1,10], index: 4, kind: input, shape index: {}]
  %s5 = inlined_call_operand.hbm [shape: f32[2,10], index: 5, kind: output, shape index: {}]
  %s6 = sld [smem:[#allocation0]]
  $region30: #{cnn_forward.7} parent=0
    _
  %s8 = ssub.s32 1, %s6
  %s9 = scalar_select 0, %s8, %s6
  $region1: #{cnn_forward.7} parent=0
    #allocation2 [shape = 'u8[1024]{0}', space=vmem, size = 0x400, scoped, tag = 'output window, operand 0, single buffered']
    #allocation3 [shape = 's32[1]{0}', space=sflag, size = 0x4, scoped, tag = 'scoped memory for cnn_forward.7']
    %10 = vsyncpa [#allocation3], 0
    // Predicated region
    $region2: #{cnn_forward.7} parent=1 // pred_check
      _
    $region3: #{cnn_forward.7} parent=1 // pred_check_branch
      %12 = sbr.rel (0) target = $region5
    $region4: #{cnn_forward.7} parent=1 // pred_region
      _
    $region5: #{cnn_forward.7} parent=1 // pred_fallthru
      _
    // Predicated region
    $region6: #{cnn_forward.7} parent=1 // pred_check
      _
    $region7: #{cnn_forward.7} parent=1 // pred_check_branch
      %14 = sbr.rel (0) target = $region9
    $region8: #{cnn_forward.7} parent=1 // pred_region
      _
    $region9: #{cnn_forward.7} parent=1 // pred_fallthru
      _
    // Predicated region
    $region10: #{cnn_forward.7} parent=1 // pred_check
      _
    $region11: #{cnn_forward.7} parent=1 // pred_check_branch
      %16 = sbr.rel (0) target = $region13
    $region12: #{cnn_forward.7} parent=1 // pred_region
      _
    $region13: #{cnn_forward.7} parent=1 // pred_fallthru
      _
    // Predicated region
    $region14: #{cnn_forward.7} parent=1 // pred_check
      _
    $region15: #{cnn_forward.7} parent=1 // pred_check_branch
      %18 = sbr.rel (0) target = $region17
    $region16: #{cnn_forward.7} parent=1 // pred_region
      _
    $region17: #{cnn_forward.7} parent=1 // pred_fallthru
      _
    // Predicated region
    $region18: #{cnn_forward.7} parent=1 // pred_check
      _
    $region19: #{cnn_forward.7} parent=1 // pred_check_branch
      %20 = sbr.rel (0) target = $region21
    $region20: #{cnn_forward.7} parent=1 // pred_region
      _
    $region21: #{cnn_forward.7} parent=1 // pred_fallthru
      _
    %v21 = vld [vmem:[%s0] sm:$0xf]
    %v22 = vld [vmem:[%s1] sm:$0xff]
    %v23 = vld [vmem:[%s1 + $0x8] sm:$0xff]
    %v24 = vld [vmem:[%s1 + $0x10] sm:$0xff]
    %v25 = vld [vmem:[%s1 + $0x18] sm:$0xff]
    %v26 = vld [vmem:[%s1 + $0x20] sm:$0xff]
    %v27 = vld [vmem:[%s1 + $0x28] sm:$0xff]
    %v28 = vld [vmem:[%s1 + $0x30] sm:$0xff]
    %v29 = vld [vmem:[%s1 + $0x38] sm:$0xff]
    %v30 = vld [vmem:[%s1 + $0x40] sm:$0xff]
    %v31 = vld [vmem:[%s1 + $0x48] sm:$0xff]
    %v32 = vld [vmem:[%s1 + $0x50] sm:$0xff]
    %v33 = vld [vmem:[%s1 + $0x58] sm:$0xff]
    %v34 = vld [vmem:[%s1 + $0x60] sm:$0xff]
    %v35 = vld [vmem:[%s1 + $0x68] sm:$0xff]
    %v36 = vld [vmem:[%s1 + $0x70] sm:$0xff]
    %v37 = vld [vmem:[%s1 + $0x78] sm:$0xff]
    %v38 = vld [vmem:[%s1 + $0x80] sm:$0xff]
    %v39 = vld [vmem:[%s1 + $0x88] sm:$0xff]
    %v40 = vld [vmem:[%s1 + $0x90] sm:$0xff]
    %v41 = vld [vmem:[%s1 + $0x98] sm:$0xff]
    %v42 = vld [vmem:[%s1 + $0xa0] sm:$0xff]
    %v43 = vld [vmem:[%s1 + $0xa8] sm:$0xff]
    %v44 = vld [vmem:[%s1 + $0xb0] sm:$0xff]
    %v45 = vld [vmem:[%s1 + $0xb8] sm:$0xff]
    %v46 = vld [vmem:[%s1 + $0xc0] sm:$0xff]
    %v47 = vld [vmem:[%s1 + $0xc8] sm:$0xff]
    %v48 = vld [vmem:[%s1 + $0xd0] sm:$0xff]
    %v49 = vld [vmem:[%s1 + $0xd8] sm:$0xff]
    %v50 = vld [vmem:[%s1 + $0xe0] sm:$0xff]
    %v51 = vld [vmem:[%s1 + $0xe8] sm:$0xff]
    %v52 = vld [vmem:[%s1 + $0xf0] sm:$0xff]
    %v53 = vld [vmem:[%s1 + $0xf8] sm:$0xff]
    %v54 = vld [vmem:[%s2] sm:$0x1]
    %v56 = vlaneseq
    %v57 = vshrl.u32 %v56, 7
    %v58 = vsub.s32 0, %v57
    %v59 = vrot.slane %v54, %v58
    %v63 = vunpack.c.l.s4 1983009808
    %v64 = vunpack.c.0.s8 %v63
    %v65 = vlaneseq
    %v66 = vshrl.u32 %v65, 7
    %v67 = vsub.s32 %v64, %v66
    %v68 = vrot.slane %v21, %v67
    %v69 = vcombine.high %v68, %v68
    %72 = vmatprep.subr.mxu0 0.0
    %73 = vmatpush1.msra.mxu0 %v37
    %74 = vmatprep.subr.mxu0 0.0
    %75 = vmatpush1.msra.mxu0 %v36
    %76 = vmatprep.subr.mxu0 0.0
    %77 = vmatpush1.msra.mxu0 %v35
    %78 = vmatprep.subr.mxu0 0.0
    %79 = vmatpush1.msra.mxu0 %v34
    %80 = vmatprep.subr.mxu0 0.0
    %81 = vmatpush1.msra.mxu0 %v33
    %82 = vmatprep.subr.mxu0 0.0
    %83 = vmatpush1.msra.mxu0 %v32
    %84 = vmatprep.subr.mxu0 0.0
    %85 = vmatpush1.msra.mxu0 %v31
    %86 = vmatprep.subr.mxu0 0.0
    %87 = vmatpush1.msra.mxu0 %v30
    %88 = vmatprep.subr.mxu0 0.0
    %89 = vmatpush1.msra.mxu0 %v29
    %90 = vmatprep.subr.mxu0 0.0
    %91 = vmatpush1.msra.mxu0 %v28
    %92 = vmatprep.subr.mxu0 0.0
    %93 = vmatpush1.msra.mxu0 %v27
    %94 = vmatprep.subr.mxu0 0.0
    %95 = vmatpush1.msra.mxu0 %v26
    %96 = vmatprep.subr.mxu0 0.0
    %97 = vmatpush1.msra.mxu0 %v25
    %98 = vmatprep.subr.mxu0 0.0
    %99 = vmatpush1.msra.mxu0 %v24
    %100 = vmatprep.subr.mxu0 0.0
    %101 = vmatpush1.msra.mxu0 %v23
    %102 = vmatprep.subr.mxu0 0.0
    %103 = vmatpush1.msra.mxu0 %v22
    %104 = vmatprep.subr.mxu0 0.0
    %105 = vmatpush2.msra.mxu0 %v53
    %106 = vmatprep.subr.mxu0 0.0
    %107 = vmatpush2.msra.mxu0 %v52
    %108 = vmatprep.subr.mxu0 0.0
    %109 = vmatpush2.msra.mxu0 %v51
    %110 = vmatprep.subr.mxu0 0.0
    %111 = vmatpush2.msra.mxu0 %v50
    %112 = vmatprep.subr.mxu0 0.0
    %113 = vmatpush2.msra.mxu0 %v49
    %114 = vmatprep.subr.mxu0 0.0
    %115 = vmatpush2.msra.mxu0 %v48
    %116 = vmatprep.subr.mxu0 0.0
    %117 = vmatpush2.msra.mxu0 %v47
    %118 = vmatprep.subr.mxu0 0.0
    %119 = vmatpush2.msra.mxu0 %v46
    %120 = vmatprep.subr.mxu0 0.0
    %121 = vmatpush2.msra.mxu0 %v45
    %122 = vmatprep.subr.mxu0 0.0
    %123 = vmatpush2.msra.mxu0 %v44
    %124 = vmatprep.subr.mxu0 0.0
    %125 = vmatpush2.msra.mxu0 %v43
    %126 = vmatprep.subr.mxu0 0.0
    %127 = vmatpush2.msra.mxu0 %v42
    %128 = vmatprep.subr.mxu0 0.0
    %129 = vmatpush2.msra.mxu0 %v41
    %130 = vmatprep.subr.mxu0 0.0
    %131 = vmatpush2.msra.mxu0 %v40
    %132 = vmatprep.subr.mxu0 0.0
    %133 = vmatpush2.msra.mxu0 %v39
    %134 = vmatprep.subr.mxu0 0.0
    %135 = vmatpush2.msra.mxu0 %v38
    %136 = vmatprep.mubr.f32.mxu0 %v69
    %137 = vmatmul.mubr.f32.gmra.mxu0 %v68
    %v138 = vpop.f32.mrf.mxu0
    %v139 = vadd.f32 %v59, %v138
    %v140 = vpop.f32.mrf.mxu0
    %141 = vdwg.mxu0
    %v142 = vmax.f32 %v139, 0.0
    %v143 = vld [vmem:[%s3] sm:$0xff]
    %v144 = vld [vmem:[%s3 + $0x8] sm:$0xff]
    %v145 = vld [vmem:[%s3 + $0x10] sm:$0xff]
    %v146 = vld [vmem:[%s3 + $0x18] sm:$0xff]
    %v147 = vld [vmem:[%s3 + $0x20] sm:$0xff]
    %v148 = vld [vmem:[%s3 + $0x28] sm:$0xff]
    %v149 = vld [vmem:[%s3 + $0x30] sm:$0xff]
    %v150 = vld [vmem:[%s3 + $0x38] sm:$0xff]
    %v151 = vld [vmem:[%s4] sm:$0x1]
    %v153 = vlaneseq
    %v154 = vshrl.u32 %v153, 7
    %v155 = vsub.s32 0, %v154
    %v156 = vrot.slane %v151, %v155
    %vm158 = vcmask 523264
    %v160 = vsel %vm158, %v142, 0
    %162 = vmatprep.subr.mxu0 0.0
    %163 = vmatpush1.msra.mxu0 0.0
    %164 = vmatprep.subr.mxu0 0.0
    %165 = vmatpush1.msra.mxu0 0.0
    %166 = vmatprep.subr.mxu0 0.0
    %167 = vmatpush1.msra.mxu0 0.0
    %168 = vmatprep.subr.mxu0 0.0
    %169 = vmatpush1.msra.mxu0 0.0
    %170 = vmatprep.subr.mxu0 0.0
    %171 = vmatpush1.msra.mxu0 0.0
    %172 = vmatprep.subr.mxu0 0.0
    %173 = vmatpush1.msra.mxu0 0.0
    %174 = vmatprep.subr.mxu0 0.0
    %175 = vmatpush1.msra.mxu0 0.0
    %176 = vmatprep.subr.mxu0 0.0
    %177 = vmatpush1.msra.mxu0 0.0
    %178 = vmatprep.subr.mxu0 0.0
    %179 = vmatpush1.msra.mxu0 %v150
    %180 = vmatprep.subr.mxu0 0.0
    %181 = vmatpush1.msra.mxu0 %v149
    %182 = vmatprep.subr.mxu0 0.0
    %183 = vmatpush1.msra.mxu0 %v148
    %184 = vmatprep.subr.mxu0 0.0
    %185 = vmatpush1.msra.mxu0 %v147
    %186 = vmatprep.subr.mxu0 0.0
    %187 = vmatpush1.msra.mxu0 %v146
    %188 = vmatprep.subr.mxu0 0.0
    %189 = vmatpush1.msra.mxu0 %v145
    %190 = vmatprep.subr.mxu0 0.0
    %191 = vmatpush1.msra.mxu0 %v144
    %192 = vmatprep.subr.mxu0 0.0
    %193 = vmatpush1.msra.mxu0 %v143
    %194 = vmatprep.subr.mxu0 0.0
    %195 = vmatpush2.msra.mxu0 0.0
    %196 = vmatprep.subr.mxu0 0.0
    %197 = vmatpush2.msra.mxu0 0.0
    %198 = vmatprep.subr.mxu0 0.0
    %199 = vmatpush2.msra.mxu0 0.0
    %200 = vmatprep.subr.mxu0 0.0
    %201 = vmatpush2.msra.mxu0 0.0
    %202 = vmatprep.subr.mxu0 0.0
    %203 = vmatpush2.msra.mxu0 0.0
    %204 = vmatprep.subr.mxu0 0.0
    %205 = vmatpush2.msra.mxu0 0.0
    %206 = vmatprep.subr.mxu0 0.0
    %207 = vmatpush2.msra.mxu0 0.0
    %208 = vmatprep.subr.mxu0 0.0
    %209 = vmatpush2.msra.mxu0 0.0
    %210 = vmatprep.subr.mxu0 0.0
    %211 = vmatpush2.msra.mxu0 0.0
    %212 = vmatprep.subr.mxu0 0.0
    %213 = vmatpush2.msra.mxu0 0.0
    %214 = vmatprep.subr.mxu0 0.0
    %215 = vmatpush2.msra.mxu0 0.0
    %216 = vmatprep.subr.mxu0 0.0
    %217 = vmatpush2.msra.mxu0 0.0
    %218 = vmatprep.subr.mxu0 0.0
    %219 = vmatpush2.msra.mxu0 0.0
    %220 = vmatprep.subr.mxu0 0.0
    %221 = vmatpush2.msra.mxu0 0.0
    %222 = vmatprep.subr.mxu0 0.0
    %223 = vmatpush2.msra.mxu0 0.0
    %224 = vmatprep.subr.mxu0 0.0
    %225 = vmatpush2.msra.mxu0 0.0
    %226 = vmatprep.mubr.f32.mxu0 0.0
    %227 = vmatmul.mubr.f32.gmra.mxu0 %v160
    %v228 = vpop.f32.mrf.mxu0
    %v229 = vadd.f32 %v156, %v228
    %v230 = vpop.f32.mrf.mxu0
    %231 = vdwg.mxu0
    %vm232 = vcmask 74752
    %233 = vst.msk [vmem:[#allocation2] sm:$0x3] %vm232, %v229
    // Predicated region
    $region22: #{cnn_forward.7} parent=1 // pred_check
      _
    $region23: #{cnn_forward.7} parent=1 // pred_check_branch
      %235 = sbr.rel (0) target = $region25
    $region24: #{cnn_forward.7} parent=1 // pred_region
      %s237 = ssub.s32 32, 32
      %238 = vsyncadd [#allocation3], %s237
      %s240 = sshll.u32 [#allocation2], 4
      %s241 = int_to_ptr.vmem [resolvable:$true] %s240
      %243 = dma.vmem_to_hbm [thread:$0]  %s241, 32, %s5, [#allocation3]
    $region25: #{cnn_forward.7} parent=1 // pred_fallthru
      _
    // Predicated region
    $region26: #{cnn_forward.7} parent=1 // pred_check
      _
    $region27: #{cnn_forward.7} parent=1 // pred_check_branch
      %245 = sbr.rel (0) target = $region29
    $region28: #{cnn_forward.7} parent=1 // pred_region
      %246 = dma.done [#allocation3], 32
    $region29: #{cnn_forward.7} parent=1 // pred_fallthru
      _
    %247 = vsyncpa [#allocation3], 1

</llo_original>
